<compile_context>
chip_gen: v7x
topology: tpu7x:2x2x1
jax: 0.10.0
libtpu: 0.0.40
codegen_flags: <defaults>
</compile_context>

<pallas_src>
import math

import jax
import jax.numpy as jnp
from jax import lax
from jax.experimental import pallas as pl
from jax.experimental.pallas import tpu as pltpu

# ---------------- model dims (small, consistent with the module) -------------
VOCAB = 50
D_MODEL = 32
N_HEADS = 4
D_HEAD = D_MODEL // N_HEADS
D_FF = 64
N_LAYERS = 2
BATCH = 2
SEQ = 8
MAX_LEN = 512
EPS = 1e-6
NEG_INF = -1e9
SQRT_D = math.sqrt(D_MODEL)


# ------------------------------ fused kernel ----------------------------------
def _layer_norm(h, g, b):
    # annotated-transformer LayerNorm: g*(x-mean)/(std+eps)+b, std with (n-1)
    mean = jnp.mean(h, axis=-1, keepdims=True)
    var = jnp.sum((h - mean) ** 2, axis=-1, keepdims=True) * (1.0 / (h.shape[-1] - 1))
    inv = pl.reciprocal(jnp.sqrt(var) + EPS, approx=True)   # EUP, off the VALU slot
    return g * (h - mean) * inv + b


def bert_encoder_kernel(src_ref, mask_ref,                    # SMEM scalar-prefetch
                        emb_ref, pe_ref,
                        wqkv_ref, bqkv_ref, wo_ref, bo_ref,
                        ln1g_ref, ln1b_ref,
                        w1_ref, b1_ref, w2_ref, b2_ref,
                        ln2g_ref, ln2b_ref,
                        lnfg_ref, lnfb_ref,
                        o_ref):
    rows = BATCH * SEQ

    # ---- fused src_embed: one-hot gather (MXU) * sqrt(d_model) + PE ----------
    row_iota = lax.broadcasted_iota(jnp.int32, (rows, VOCAB), 0)
    col_iota = lax.broadcasted_iota(jnp.int32, (rows, VOCAB), 1)
    onehot = jnp.zeros((rows, VOCAB), jnp.float32)
    for n in range(rows):                                     # static unroll (16)
        tok = src_ref[n // SEQ, n % SEQ]                      # SMEM scalar read
        # sqrt(d_model) folded into the hot value -> gather and scale in one matmul
        onehot = onehot + jnp.where((row_iota == n) & (col_iota == tok), SQRT_D, 0.0)
    x = jnp.dot(onehot, emb_ref[...], preferred_element_type=jnp.float32)  # (rows, D)
    pe_s = pe_ref[0:SEQ, :]                                   # static slice of PE table
    x = x + jnp.concatenate([pe_s] * BATCH, axis=0)

    # ---- additive key mask per batch, built from SMEM scalars ----------------
    lane_iota = lax.broadcasted_iota(jnp.int32, (1, SEQ), 1)
    add_mask = []
    for b in range(BATCH):
        m = jnp.zeros((1, SEQ), jnp.float32)
        for s in range(SEQ):
            keep = mask_ref[b, s]                             # 0 => pad position
            m = m + jnp.where((lane_iota == s) & (keep == 0), NEG_INF, 0.0)
        add_mask.append(m)

    scale = 1.0 / math.sqrt(D_HEAD)
    for l in range(N_LAYERS):                                 # static unroll: full encoder
        # ---- sublayer 1: x + SelfAttn(LayerNorm(x)) ----
        xn = _layer_norm(x, ln1g_ref[l], ln1b_ref[l])
        # fused Q/K/V projection: one bf16 MXU matmul, result stays in registers
        qkv = jnp.dot(xn.astype(jnp.bfloat16), wqkv_ref[l],
                      preferred_element_type=jnp.float32) + bqkv_ref[l]    # (rows, 3D)
        head_cols = []
        for h in range(N_HEADS):                              # static head loop
            c0, c1 = h * D_HEAD, (h + 1) * D_HEAD
            per_batch = []
            for b in range(BATCH):                            # static batch loop
                r0 = b * SEQ
                q = qkv[r0:r0 + SEQ, c0:c1]
                k = qkv[r0:r0 + SEQ, D_MODEL + c0:D_MODEL + c1]
                v = qkv[r0:r0 + SEQ, 2 * D_MODEL + c0:2 * D_MODEL + c1]
                s = lax.dot_general(q, k, (((1,), (1,)), ((), ())),
                                    preferred_element_type=jnp.float32) * scale
                s = s + add_mask[b]
                s = s - jnp.max(s, axis=-1, keepdims=True)
                p = jnp.exp(s)
                p = p * pl.reciprocal(jnp.sum(p, axis=-1, keepdims=True), approx=True)
                per_batch.append(
                    jnp.dot(p.astype(jnp.bfloat16), v.astype(jnp.bfloat16),
                            preferred_element_type=jnp.float32))           # (SEQ, dk)
            head_cols.append(jnp.concatenate(per_batch, axis=0))           # (rows, dk)
        ctx = jnp.concatenate(head_cols, axis=1)                            # (rows, D)
        # W_O hoisted: ONE bf16 matmul for the output projection
        attn = jnp.dot(ctx.astype(jnp.bfloat16), wo_ref[l],
                       preferred_element_type=jnp.float32) + bo_ref[l]
        x = x + attn

        # ---- sublayer 2: x + FFN(LayerNorm(x)) ----  (dropout = identity, eval)
        xn = _layer_norm(x, ln2g_ref[l], ln2b_ref[l])
        hdn = jnp.maximum(
            jnp.dot(xn.astype(jnp.bfloat16), w1_ref[l],
                    preferred_element_type=jnp.float32) + b1_ref[l], 0.0)
        x = x + jnp.dot(hdn.astype(jnp.bfloat16), w2_ref[l],
                        preferred_element_type=jnp.float32) + b2_ref[l]

    # final encoder LayerNorm, write per-batch (S, D) blocks
    y = _layer_norm(x, lnfg_ref[...], lnfb_ref[...])
    for b in range(BATCH):
        o_ref[b] = y[b * SEQ:(b + 1) * SEQ, :]


# ------------------------------ forward wrapper --------------------------------
@jax.jit
def bert_forward(params, src, src_mask):
    # src: (B, S) int ids; src_mask: (B, 1, S) keep-mask (nonzero = attend).
    B, S = src.shape                                  # must equal (BATCH, SEQ)
    mask_i32 = src_mask.reshape(B, S).astype(jnp.int32)

    weights = (
        params["wqkv"], params["bqkv"], params["wo"], params["bo"],
        params["ln1_g"], params["ln1_b"],
        params["w1"], params["b1"], params["w2"], params["b2"],
        params["ln2_g"], params["ln2_b"],
        params["lnf_g"], params["lnf_b"],
    )
    tensors = (params["emb"], params["pe"]) + weights

    def whole(a):
        nd = a.ndim
        return pl.BlockSpec(a.shape, lambda i, _src, _msk, _nd=nd: (0,) * _nd)

    out = pl.pallas_call(
        bert_encoder_kernel,
        out_shape=jax.ShapeDtypeStruct((B, S, D_MODEL), jnp.float32),
        grid_spec=pltpu.PrefetchScalarGridSpec(
            num_scalar_prefetch=2,                    # src ids + keep-mask into SMEM
            grid=(1,),                                # single grid step: all B*S rows at once
            in_specs=[whole(t) for t in tensors],     # table/PE/weights VMEM-resident
            out_specs=pl.BlockSpec((B, S, D_MODEL), lambda i, _src, _msk: (0, 0, 0)),
        ),
        compiler_params=pltpu.CompilerParams(dimension_semantics=("arbitrary",)),
    )(src.astype(jnp.int32), mask_i32, *tensors)
    return out


# ------------------------------ parameter init ---------------------------------
def positional_encoding(max_len, d_model):
    position = jnp.arange(max_len, dtype=jnp.float32)[:, None]
    div_term = jnp.exp(
        jnp.arange(0, d_model, 2, dtype=jnp.float32) * -(math.log(10000.0) / d_model))
    pe = jnp.zeros((max_len, d_model), dtype=jnp.float32)
    pe = pe.at[:, 0::2].set(jnp.sin(position * div_term))
    pe = pe.at[:, 1::2].set(jnp.cos(position * div_term))
    return pe


def init_params(key):
    keys = jax.random.split(key, 1 + N_LAYERS * 6)
    emb = 0.02 * jax.random.normal(keys[0], (VOCAB, D_MODEL), dtype=jnp.float32)

    wqkv, wo, w1, w2 = [], [], [], []
    ki = 1
    for _ in range(N_LAYERS):
        wq = 0.02 * jax.random.normal(keys[ki + 0], (D_MODEL, D_MODEL), jnp.float32)
        wk = 0.02 * jax.random.normal(keys[ki + 1], (D_MODEL, D_MODEL), jnp.float32)
        wv = 0.02 * jax.random.normal(keys[ki + 2], (D_MODEL, D_MODEL), jnp.float32)
        wo.append(0.02 * jax.random.normal(keys[ki + 3], (D_MODEL, D_MODEL), jnp.float32))
        w1.append(0.02 * jax.random.normal(keys[ki + 4], (D_MODEL, D_FF), jnp.float32))
        w2.append(0.02 * jax.random.normal(keys[ki + 5], (D_FF, D_MODEL), jnp.float32))
        wqkv.append(jnp.concatenate([wq, wk, wv], axis=1))     # fused QKV (D, 3D)
        ki += 6

    ones_d = jnp.ones((N_LAYERS, 1, D_MODEL), jnp.float32)
    zeros_d = jnp.zeros((N_LAYERS, 1, D_MODEL), jnp.float32)
    return {
        "emb": emb,                                   # f32 table for exact in-kernel gather
        "pe": positional_encoding(MAX_LEN, D_MODEL),  # full table; kernel slices [:SEQ]
        # bf16 weights for all big MXU matmuls (f32 accumulation in-kernel);
        # LayerNorm/softmax/bias math stays f32 (v5e-friendly).
        "wqkv": jnp.stack(wqkv).astype(jnp.bfloat16),
        "wo": jnp.stack(wo).astype(jnp.bfloat16),
        "w1": jnp.stack(w1).astype(jnp.bfloat16),
        "w2": jnp.stack(w2).astype(jnp.bfloat16),
        "bqkv": jnp.zeros((N_LAYERS, 1, 3 * D_MODEL), jnp.float32),
        "bo": zeros_d,
        "b1": jnp.zeros((N_LAYERS, 1, D_FF), jnp.float32),
        "b2": zeros_d,
        "ln1_g": ones_d, "ln1_b": zeros_d,
        "ln2_g": ones_d, "ln2_b": zeros_d,
        "lnf_g": jnp.ones((1, D_MODEL), jnp.float32),
        "lnf_b": jnp.zeros((1, D_MODEL), jnp.float32),
    }


# ----------------------------------- main ---------------------------------------
if __name__ == "__main__":
    key = jax.random.PRNGKey(0)
    pkey, skey = jax.random.split(key)
    params = init_params(pkey)

    src = jax.random.randint(skey, (BATCH, SEQ), 1, VOCAB)
    src = src.at[1, -2:].set(0)                # a couple of pad tokens
    src_mask = (src != 0)[:, None, :]          # (B, 1, S): (src != pad).unsqueeze(-2)

    out = bert_forward(params, src, src_mask)  # (B, S, D_MODEL)
    jax.block_until_ready(out)
    assert out.shape == (BATCH, SEQ, D_MODEL)
    assert bool(jnp.all(jnp.isfinite(out)))
    print("KERNEL_OK")
</pallas_src>

<mosaic_0001>
module attributes {stable_mosaic.version = 11 : i64} {
  func.func @bert_encoder_kernel(%arg0: i32, %arg1: memref<2x8xi32, #tpu.memory_space<smem>>, %arg2: memref<2x8xi32, #tpu.memory_space<smem>>, %arg3: memref<50x32xf32, #tpu.memory_space<vmem>>, %arg4: memref<512x32xf32, #tpu.memory_space<vmem>>, %arg5: memref<2x32x96xbf16, #tpu.memory_space<vmem>>, %arg6: memref<2x1x96xf32, #tpu.memory_space<vmem>>, %arg7: memref<2x32x32xbf16, #tpu.memory_space<vmem>>, %arg8: memref<2x1x32xf32, #tpu.memory_space<vmem>>, %arg9: memref<2x1x32xf32, #tpu.memory_space<vmem>>, %arg10: memref<2x1x32xf32, #tpu.memory_space<vmem>>, %arg11: memref<2x32x64xbf16, #tpu.memory_space<vmem>>, %arg12: memref<2x1x64xf32, #tpu.memory_space<vmem>>, %arg13: memref<2x64x32xbf16, #tpu.memory_space<vmem>>, %arg14: memref<2x1x32xf32, #tpu.memory_space<vmem>>, %arg15: memref<2x1x32xf32, #tpu.memory_space<vmem>>, %arg16: memref<2x1x32xf32, #tpu.memory_space<vmem>>, %arg17: memref<1x32xf32, #tpu.memory_space<vmem>>, %arg18: memref<1x32xf32, #tpu.memory_space<vmem>>, %arg19: memref<2x8x32xf32, #tpu.memory_space<vmem>>) attributes {dimension_semantics = [#tpu.dimension_semantics<arbitrary>], iteration_bounds = array<i64: 1>, scalar_prefetch = 2 : i64, scratch_operands = 0 : i64, tpu.core_type = #tpu.core_type<tc>, window_params = [{pipeline_mode = #tpu.pipeline_mode<synchronous>, transform_indices = @transform_0, window_bounds = array<i64: 50, 32>}, {pipeline_mode = #tpu.pipeline_mode<synchronous>, transform_indices = @transform_1, window_bounds = array<i64: 512, 32>}, {pipeline_mode = #tpu.pipeline_mode<synchronous>, transform_indices = @transform_2, window_bounds = array<i64: 2, 32, 96>}, {pipeline_mode = #tpu.pipeline_mode<synchronous>, transform_indices = @transform_3, window_bounds = array<i64: 2, 1, 96>}, {pipeline_mode = #tpu.pipeline_mode<synchronous>, transform_indices = @transform_4, window_bounds = array<i64: 2, 32, 32>}, {pipeline_mode = #tpu.pipeline_mode<synchronous>, transform_indices = @transform_5, window_bounds = array<i64: 2, 1, 32>}, {pipeline_mode = #tpu.pipeline_mode<synchronous>, transform_indices = @transform_6, window_bounds = array<i64: 2, 1, 32>}, {pipeline_mode = #tpu.pipeline_mode<synchronous>, transform_indices = @transform_7, window_bounds = array<i64: 2, 1, 32>}, {pipeline_mode = #tpu.pipeline_mode<synchronous>, transform_indices = @transform_8, window_bounds = array<i64: 2, 32, 64>}, {pipeline_mode = #tpu.pipeline_mode<synchronous>, transform_indices = @transform_9, window_bounds = array<i64: 2, 1, 64>}, {pipeline_mode = #tpu.pipeline_mode<synchronous>, transform_indices = @transform_10, window_bounds = array<i64: 2, 64, 32>}, {pipeline_mode = #tpu.pipeline_mode<synchronous>, transform_indices = @transform_11, window_bounds = array<i64: 2, 1, 32>}, {pipeline_mode = #tpu.pipeline_mode<synchronous>, transform_indices = @transform_12, window_bounds = array<i64: 2, 1, 32>}, {pipeline_mode = #tpu.pipeline_mode<synchronous>, transform_indices = @transform_13, window_bounds = array<i64: 2, 1, 32>}, {pipeline_mode = #tpu.pipeline_mode<synchronous>, transform_indices = @transform_14, window_bounds = array<i64: 1, 32>}, {pipeline_mode = #tpu.pipeline_mode<synchronous>, transform_indices = @transform_15, window_bounds = array<i64: 1, 32>}, {pipeline_mode = #tpu.pipeline_mode<synchronous>, transform_indices = @transform_16, window_bounds = array<i64: 2, 8, 32>}]} {
    %0 = tpu.iota {dimensions = array<i32: 0>} : vector<16x50xi32>
    %1 = tpu.iota {dimensions = array<i32: 1>} : vector<16x50xi32>
    %cst = arith.constant 0.000000e+00 : f32
    %2 = vector.broadcast %cst : f32 to vector<16x50xf32>
    %c0 = arith.constant 0 : index
    %c0_0 = arith.constant 0 : index
    %3 = memref.load %arg1[%c0, %c0_0] : memref<2x8xi32, #tpu.memory_space<smem>>
    %c0_i32 = arith.constant 0 : i32
    %4 = vector.broadcast %c0_i32 : i32 to vector<16x50xi32>
    %5 = arith.cmpi eq, %0, %4 : vector<16x50xi32>
    %6 = vector.broadcast %3 : i32 to vector<16x50xi32>
    %7 = arith.cmpi eq, %1, %6 : vector<16x50xi32>
    %8 = arith.andi %5, %7 : vector<16x50xi1>
    %cst_1 = arith.constant 5.65685415 : f32
    %cst_2 = arith.constant 0.000000e+00 : f32
    %9 = vector.broadcast %cst_1 : f32 to vector<16x50xf32>
    %10 = vector.broadcast %cst_2 : f32 to vector<16x50xf32>
    %11 = arith.select %8, %9, %10 : vector<16x50xi1>, vector<16x50xf32>
    %12 = arith.addf %2, %11 : vector<16x50xf32>
    %c0_3 = arith.constant 0 : index
    %c1 = arith.constant 1 : index
    %13 = memref.load %arg1[%c0_3, %c1] : memref<2x8xi32, #tpu.memory_space<smem>>
    %c1_i32 = arith.constant 1 : i32
    %14 = vector.broadcast %c1_i32 : i32 to vector<16x50xi32>
    %15 = arith.cmpi eq, %0, %14 : vector<16x50xi32>
    %16 = vector.broadcast %13 : i32 to vector<16x50xi32>
    %17 = arith.cmpi eq, %1, %16 : vector<16x50xi32>
    %18 = arith.andi %15, %17 : vector<16x50xi1>
    %cst_4 = arith.constant 5.65685415 : f32
    %cst_5 = arith.constant 0.000000e+00 : f32
    %19 = vector.broadcast %cst_4 : f32 to vector<16x50xf32>
    %20 = vector.broadcast %cst_5 : f32 to vector<16x50xf32>
    %21 = arith.select %18, %19, %20 : vector<16x50xi1>, vector<16x50xf32>
    %22 = arith.addf %12, %21 : vector<16x50xf32>
    %c0_6 = arith.constant 0 : index
    %c2 = arith.constant 2 : index
    %23 = memref.load %arg1[%c0_6, %c2] : memref<2x8xi32, #tpu.memory_space<smem>>
    %c2_i32 = arith.constant 2 : i32
    %24 = vector.broadcast %c2_i32 : i32 to vector<16x50xi32>
    %25 = arith.cmpi eq, %0, %24 : vector<16x50xi32>
    %26 = vector.broadcast %23 : i32 to vector<16x50xi32>
    %27 = arith.cmpi eq, %1, %26 : vector<16x50xi32>
    %28 = arith.andi %25, %27 : vector<16x50xi1>
    %cst_7 = arith.constant 5.65685415 : f32
    %cst_8 = arith.constant 0.000000e+00 : f32
    %29 = vector.broadcast %cst_7 : f32 to vector<16x50xf32>
    %30 = vector.broadcast %cst_8 : f32 to vector<16x50xf32>
    %31 = arith.select %28, %29, %30 : vector<16x50xi1>, vector<16x50xf32>
    %32 = arith.addf %22, %31 : vector<16x50xf32>
    %c0_9 = arith.constant 0 : index
    %c3 = arith.constant 3 : index
    %33 = memref.load %arg1[%c0_9, %c3] : memref<2x8xi32, #tpu.memory_space<smem>>
    %c3_i32 = arith.constant 3 : i32
    %34 = vector.broadcast %c3_i32 : i32 to vector<16x50xi32>
    %35 = arith.cmpi eq, %0, %34 : vector<16x50xi32>
    %36 = vector.broadcast %33 : i32 to vector<16x50xi32>
    %37 = arith.cmpi eq, %1, %36 : vector<16x50xi32>
    %38 = arith.andi %35, %37 : vector<16x50xi1>
    %cst_10 = arith.constant 5.65685415 : f32
    %cst_11 = arith.constant 0.000000e+00 : f32
    %39 = vector.broadcast %cst_10 : f32 to vector<16x50xf32>
    %40 = vector.broadcast %cst_11 : f32 to vector<16x50xf32>
    %41 = arith.select %38, %39, %40 : vector<16x50xi1>, vector<16x50xf32>
    %42 = arith.addf %32, %41 : vector<16x50xf32>
    %c0_12 = arith.constant 0 : index
    %c4 = arith.constant 4 : index
    %43 = memref.load %arg1[%c0_12, %c4] : memref<2x8xi32, #tpu.memory_space<smem>>
    %c4_i32 = arith.constant 4 : i32
    %44 = vector.broadcast %c4_i32 : i32 to vector<16x50xi32>
    %45 = arith.cmpi eq, %0, %44 : vector<16x50xi32>
    %46 = vector.broadcast %43 : i32 to vector<16x50xi32>
    %47 = arith.cmpi eq, %1, %46 : vector<16x50xi32>
    %48 = arith.andi %45, %47 : vector<16x50xi1>
    %cst_13 = arith.constant 5.65685415 : f32
    %cst_14 = arith.constant 0.000000e+00 : f32
    %49 = vector.broadcast %cst_13 : f32 to vector<16x50xf32>
    %50 = vector.broadcast %cst_14 : f32 to vector<16x50xf32>
    %51 = arith.select %48, %49, %50 : vector<16x50xi1>, vector<16x50xf32>
    %52 = arith.addf %42, %51 : vector<16x50xf32>
    %c0_15 = arith.constant 0 : index
    %c5 = arith.constant 5 : index
    %53 = memref.load %arg1[%c0_15, %c5] : memref<2x8xi32, #tpu.memory_space<smem>>
    %c5_i32 = arith.constant 5 : i32
    %54 = vector.broadcast %c5_i32 : i32 to vector<16x50xi32>
    %55 = arith.cmpi eq, %0, %54 : vector<16x50xi32>
    %56 = vector.broadcast %53 : i32 to vector<16x50xi32>
    %57 = arith.cmpi eq, %1, %56 : vector<16x50xi32>
    %58 = arith.andi %55, %57 : vector<16x50xi1>
    %cst_16 = arith.constant 5.65685415 : f32
    %cst_17 = arith.constant 0.000000e+00 : f32
    %59 = vector.broadcast %cst_16 : f32 to vector<16x50xf32>
    %60 = vector.broadcast %cst_17 : f32 to vector<16x50xf32>
    %61 = arith.select %58, %59, %60 : vector<16x50xi1>, vector<16x50xf32>
    %62 = arith.addf %52, %61 : vector<16x50xf32>
    %c0_18 = arith.constant 0 : index
    %c6 = arith.constant 6 : index
    %63 = memref.load %arg1[%c0_18, %c6] : memref<2x8xi32, #tpu.memory_space<smem>>
    %c6_i32 = arith.constant 6 : i32
    %64 = vector.broadcast %c6_i32 : i32 to vector<16x50xi32>
    %65 = arith.cmpi eq, %0, %64 : vector<16x50xi32>
    %66 = vector.broadcast %63 : i32 to vector<16x50xi32>
    %67 = arith.cmpi eq, %1, %66 : vector<16x50xi32>
    %68 = arith.andi %65, %67 : vector<16x50xi1>
    %cst_19 = arith.constant 5.65685415 : f32
    %cst_20 = arith.constant 0.000000e+00 : f32
    %69 = vector.broadcast %cst_19 : f32 to vector<16x50xf32>
    %70 = vector.broadcast %cst_20 : f32 to vector<16x50xf32>
    %71 = arith.select %68, %69, %70 : vector<16x50xi1>, vector<16x50xf32>
    %72 = arith.addf %62, %71 : vector<16x50xf32>
    %c0_21 = arith.constant 0 : index
    %c7 = arith.constant 7 : index
    %73 = memref.load %arg1[%c0_21, %c7] : memref<2x8xi32, #tpu.memory_space<smem>>
    %c7_i32 = arith.constant 7 : i32
    %74 = vector.broadcast %c7_i32 : i32 to vector<16x50xi32>
    %75 = arith.cmpi eq, %0, %74 : vector<16x50xi32>
    %76 = vector.broadcast %73 : i32 to vector<16x50xi32>
    %77 = arith.cmpi eq, %1, %76 : vector<16x50xi32>
    %78 = arith.andi %75, %77 : vector<16x50xi1>
    %cst_22 = arith.constant 5.65685415 : f32
    %cst_23 = arith.constant 0.000000e+00 : f32
    %79 = vector.broadcast %cst_22 : f32 to vector<16x50xf32>
    %80 = vector.broadcast %cst_23 : f32 to vector<16x50xf32>
    %81 = arith.select %78, %79, %80 : vector<16x50xi1>, vector<16x50xf32>
    %82 = arith.addf %72, %81 : vector<16x50xf32>
    %c1_24 = arith.constant 1 : index
    %c0_25 = arith.constant 0 : index
    %83 = memref.load %arg1[%c1_24, %c0_25] : memref<2x8xi32, #tpu.memory_space<smem>>
    %c8_i32 = arith.constant 8 : i32
    %84 = vector.broadcast %c8_i32 : i32 to vector<16x50xi32>
    %85 = arith.cmpi eq, %0, %84 : vector<16x50xi32>
    %86 = vector.broadcast %83 : i32 to vector<16x50xi32>
    %87 = arith.cmpi eq, %1, %86 : vector<16x50xi32>
    %88 = arith.andi %85, %87 : vector<16x50xi1>
    %cst_26 = arith.constant 5.65685415 : f32
    %cst_27 = arith.constant 0.000000e+00 : f32
    %89 = vector.broadcast %cst_26 : f32 to vector<16x50xf32>
    %90 = vector.broadcast %cst_27 : f32 to vector<16x50xf32>
    %91 = arith.select %88, %89, %90 : vector<16x50xi1>, vector<16x50xf32>
    %92 = arith.addf %82, %91 : vector<16x50xf32>
    %c1_28 = arith.constant 1 : index
    %c1_29 = arith.constant 1 : index
    %93 = memref.load %arg1[%c1_28, %c1_29] : memref<2x8xi32, #tpu.memory_space<smem>>
    %c9_i32 = arith.constant 9 : i32
    %94 = vector.broadcast %c9_i32 : i32 to vector<16x50xi32>
    %95 = arith.cmpi eq, %0, %94 : vector<16x50xi32>
    %96 = vector.broadcast %93 : i32 to vector<16x50xi32>
    %97 = arith.cmpi eq, %1, %96 : vector<16x50xi32>
    %98 = arith.andi %95, %97 : vector<16x50xi1>
    %cst_30 = arith.constant 5.65685415 : f32
    %cst_31 = arith.constant 0.000000e+00 : f32
    %99 = vector.broadcast %cst_30 : f32 to vector<16x50xf32>
    %100 = vector.broadcast %cst_31 : f32 to vector<16x50xf32>
    %101 = arith.select %98, %99, %100 : vector<16x50xi1>, vector<16x50xf32>
    %102 = arith.addf %92, %101 : vector<16x50xf32>
    %c1_32 = arith.constant 1 : index
    %c2_33 = arith.constant 2 : index
    %103 = memref.load %arg1[%c1_32, %c2_33] : memref<2x8xi32, #tpu.memory_space<smem>>
    %c10_i32 = arith.constant 10 : i32
    %104 = vector.broadcast %c10_i32 : i32 to vector<16x50xi32>
    %105 = arith.cmpi eq, %0, %104 : vector<16x50xi32>
    %106 = vector.broadcast %103 : i32 to vector<16x50xi32>
    %107 = arith.cmpi eq, %1, %106 : vector<16x50xi32>
    %108 = arith.andi %105, %107 : vector<16x50xi1>
    %cst_34 = arith.constant 5.65685415 : f32
    %cst_35 = arith.constant 0.000000e+00 : f32
    %109 = vector.broadcast %cst_34 : f32 to vector<16x50xf32>
    %110 = vector.broadcast %cst_35 : f32 to vector<16x50xf32>
    %111 = arith.select %108, %109, %110 : vector<16x50xi1>, vector<16x50xf32>
    %112 = arith.addf %102, %111 : vector<16x50xf32>
    %c1_36 = arith.constant 1 : index
    %c3_37 = arith.constant 3 : index
    %113 = memref.load %arg1[%c1_36, %c3_37] : memref<2x8xi32, #tpu.memory_space<smem>>
    %c11_i32 = arith.constant 11 : i32
    %114 = vector.broadcast %c11_i32 : i32 to vector<16x50xi32>
    %115 = arith.cmpi eq, %0, %114 : vector<16x50xi32>
    %116 = vector.broadcast %113 : i32 to vector<16x50xi32>
    %117 = arith.cmpi eq, %1, %116 : vector<16x50xi32>
    %118 = arith.andi %115, %117 : vector<16x50xi1>
    %cst_38 = arith.constant 5.65685415 : f32
    %cst_39 = arith.constant 0.000000e+00 : f32
    %119 = vector.broadcast %cst_38 : f32 to vector<16x50xf32>
    %120 = vector.broadcast %cst_39 : f32 to vector<16x50xf32>
    %121 = arith.select %118, %119, %120 : vector<16x50xi1>, vector<16x50xf32>
    %122 = arith.addf %112, %121 : vector<16x50xf32>
    %c1_40 = arith.constant 1 : index
    %c4_41 = arith.constant 4 : index
    %123 = memref.load %arg1[%c1_40, %c4_41] : memref<2x8xi32, #tpu.memory_space<smem>>
    %c12_i32 = arith.constant 12 : i32
    %124 = vector.broadcast %c12_i32 : i32 to vector<16x50xi32>
    %125 = arith.cmpi eq, %0, %124 : vector<16x50xi32>
    %126 = vector.broadcast %123 : i32 to vector<16x50xi32>
    %127 = arith.cmpi eq, %1, %126 : vector<16x50xi32>
    %128 = arith.andi %125, %127 : vector<16x50xi1>
    %cst_42 = arith.constant 5.65685415 : f32
    %cst_43 = arith.constant 0.000000e+00 : f32
    %129 = vector.broadcast %cst_42 : f32 to vector<16x50xf32>
    %130 = vector.broadcast %cst_43 : f32 to vector<16x50xf32>
    %131 = arith.select %128, %129, %130 : vector<16x50xi1>, vector<16x50xf32>
    %132 = arith.addf %122, %131 : vector<16x50xf32>
    %c1_44 = arith.constant 1 : index
    %c5_45 = arith.constant 5 : index
    %133 = memref.load %arg1[%c1_44, %c5_45] : memref<2x8xi32, #tpu.memory_space<smem>>
    %c13_i32 = arith.constant 13 : i32
    %134 = vector.broadcast %c13_i32 : i32 to vector<16x50xi32>
    %135 = arith.cmpi eq, %0, %134 : vector<16x50xi32>
    %136 = vector.broadcast %133 : i32 to vector<16x50xi32>
    %137 = arith.cmpi eq, %1, %136 : vector<16x50xi32>
    %138 = arith.andi %135, %137 : vector<16x50xi1>
    %cst_46 = arith.constant 5.65685415 : f32
    %cst_47 = arith.constant 0.000000e+00 : f32
    %139 = vector.broadcast %cst_46 : f32 to vector<16x50xf32>
    %140 = vector.broadcast %cst_47 : f32 to vector<16x50xf32>
    %141 = arith.select %138, %139, %140 : vector<16x50xi1>, vector<16x50xf32>
    %142 = arith.addf %132, %141 : vector<16x50xf32>
    %c1_48 = arith.constant 1 : index
    %c6_49 = arith.constant 6 : index
    %143 = memref.load %arg1[%c1_48, %c6_49] : memref<2x8xi32, #tpu.memory_space<smem>>
    %c14_i32 = arith.constant 14 : i32
    %144 = vector.broadcast %c14_i32 : i32 to vector<16x50xi32>
    %145 = arith.cmpi eq, %0, %144 : vector<16x50xi32>
    %146 = vector.broadcast %143 : i32 to vector<16x50xi32>
    %147 = arith.cmpi eq, %1, %146 : vector<16x50xi32>
    %148 = arith.andi %145, %147 : vector<16x50xi1>
    %cst_50 = arith.constant 5.65685415 : f32
    %cst_51 = arith.constant 0.000000e+00 : f32
    %149 = vector.broadcast %cst_50 : f32 to vector<16x50xf32>
    %150 = vector.broadcast %cst_51 : f32 to vector<16x50xf32>
    %151 = arith.select %148, %149, %150 : vector<16x50xi1>, vector<16x50xf32>
    %152 = arith.addf %142, %151 : vector<16x50xf32>
    %c1_52 = arith.constant 1 : index
    %c7_53 = arith.constant 7 : index
    %153 = memref.load %arg1[%c1_52, %c7_53] : memref<2x8xi32, #tpu.memory_space<smem>>
    %c15_i32 = arith.constant 15 : i32
    %154 = vector.broadcast %c15_i32 : i32 to vector<16x50xi32>
    %155 = arith.cmpi eq, %0, %154 : vector<16x50xi32>
    %156 = vector.broadcast %153 : i32 to vector<16x50xi32>
    %157 = arith.cmpi eq, %1, %156 : vector<16x50xi32>
    %158 = arith.andi %155, %157 : vector<16x50xi1>
    %cst_54 = arith.constant 5.65685415 : f32
    %cst_55 = arith.constant 0.000000e+00 : f32
    %159 = vector.broadcast %cst_54 : f32 to vector<16x50xf32>
    %160 = vector.broadcast %cst_55 : f32 to vector<16x50xf32>
    %161 = arith.select %158, %159, %160 : vector<16x50xi1>, vector<16x50xf32>
    %162 = arith.addf %152, %161 : vector<16x50xf32>
    %c0_56 = arith.constant 0 : index
    %c0_57 = arith.constant 0 : index
    %163 = vector.load %arg3[%c0_56, %c0_57] : memref<50x32xf32, #tpu.memory_space<vmem>>, vector<50x32xf32>
    %cst_58 = arith.constant dense<0.000000e+00> : vector<16x32xf32>
    %164 = tpu.matmul %162, %163, %cst_58 {dimension_numbers = #tpu.dot_dimension_numbers<[1], [0], [0], [1], [0, 0, 1, 1], [], []>} : vector<16x50xf32>, vector<50x32xf32>, vector<16x32xf32> -> vector<16x32xf32>
    %c0_59 = arith.constant 0 : index
    %c0_60 = arith.constant 0 : index
    %165 = vector.load %arg4[%c0_59, %c0_60] : memref<512x32xf32, #tpu.memory_space<vmem>>, vector<8x32xf32>
    %166 = tpu.concatenate %165, %165 in 0 : vector<8x32xf32>, vector<8x32xf32> -> vector<16x32xf32>
    %167 = arith.addf %164, %166 : vector<16x32xf32>
    %168 = tpu.iota {dimensions = array<i32: 1>} : vector<1x8xi32>
    %cst_61 = arith.constant 0.000000e+00 : f32
    %169 = vector.broadcast %cst_61 : f32 to vector<1x8xf32>
    %c0_62 = arith.constant 0 : index
    %c0_63 = arith.constant 0 : index
    %170 = memref.load %arg2[%c0_62, %c0_63] : memref<2x8xi32, #tpu.memory_space<smem>>
    %c0_i32_64 = arith.constant 0 : i32
    %171 = vector.broadcast %c0_i32_64 : i32 to vector<1x8xi32>
    %172 = arith.cmpi eq, %168, %171 : vector<1x8xi32>
    %c0_i32_65 = arith.constant 0 : i32
    %173 = arith.cmpi eq, %170, %c0_i32_65 : i32
    %174 = vector.broadcast %173 : i1 to vector<1x8xi1>
    %175 = arith.andi %172, %174 : vector<1x8xi1>
    %cst_66 = arith.constant -1.000000e+09 : f32
    %cst_67 = arith.constant 0.000000e+00 : f32
    %176 = vector.broadcast %cst_66 : f32 to vector<1x8xf32>
    %177 = vector.broadcast %cst_67 : f32 to vector<1x8xf32>
    %178 = arith.select %175, %176, %177 : vector<1x8xi1>, vector<1x8xf32>
    %179 = arith.addf %169, %178 : vector<1x8xf32>
    %c0_68 = arith.constant 0 : index
    %c1_69 = arith.constant 1 : index
    %180 = memref.load %arg2[%c0_68, %c1_69] : memref<2x8xi32, #tpu.memory_space<smem>>
    %c1_i32_70 = arith.constant 1 : i32
    %181 = vector.broadcast %c1_i32_70 : i32 to vector<1x8xi32>
    %182 = arith.cmpi eq, %168, %181 : vector<1x8xi32>
    %c0_i32_71 = arith.constant 0 : i32
    %183 = arith.cmpi eq, %180, %c0_i32_71 : i32
    %184 = vector.broadcast %183 : i1 to vector<1x8xi1>
    %185 = arith.andi %182, %184 : vector<1x8xi1>
    %cst_72 = arith.constant -1.000000e+09 : f32
    %cst_73 = arith.constant 0.000000e+00 : f32
    %186 = vector.broadcast %cst_72 : f32 to vector<1x8xf32>
    %187 = vector.broadcast %cst_73 : f32 to vector<1x8xf32>
    %188 = arith.select %185, %186, %187 : vector<1x8xi1>, vector<1x8xf32>
    %189 = arith.addf %179, %188 : vector<1x8xf32>
    %c0_74 = arith.constant 0 : index
    %c2_75 = arith.constant 2 : index
    %190 = memref.load %arg2[%c0_74, %c2_75] : memref<2x8xi32, #tpu.memory_space<smem>>
    %c2_i32_76 = arith.constant 2 : i32
    %191 = vector.broadcast %c2_i32_76 : i32 to vector<1x8xi32>
    %192 = arith.cmpi eq, %168, %191 : vector<1x8xi32>
    %c0_i32_77 = arith.constant 0 : i32
    %193 = arith.cmpi eq, %190, %c0_i32_77 : i32
    %194 = vector.broadcast %193 : i1 to vector<1x8xi1>
    %195 = arith.andi %192, %194 : vector<1x8xi1>
    %cst_78 = arith.constant -1.000000e+09 : f32
    %cst_79 = arith.constant 0.000000e+00 : f32
    %196 = vector.broadcast %cst_78 : f32 to vector<1x8xf32>
    %197 = vector.broadcast %cst_79 : f32 to vector<1x8xf32>
    %198 = arith.select %195, %196, %197 : vector<1x8xi1>, vector<1x8xf32>
    %199 = arith.addf %189, %198 : vector<1x8xf32>
    %c0_80 = arith.constant 0 : index
    %c3_81 = arith.constant 3 : index
    %200 = memref.load %arg2[%c0_80, %c3_81] : memref<2x8xi32, #tpu.memory_space<smem>>
    %c3_i32_82 = arith.constant 3 : i32
    %201 = vector.broadcast %c3_i32_82 : i32 to vector<1x8xi32>
    %202 = arith.cmpi eq, %168, %201 : vector<1x8xi32>
    %c0_i32_83 = arith.constant 0 : i32
    %203 = arith.cmpi eq, %200, %c0_i32_83 : i32
    %204 = vector.broadcast %203 : i1 to vector<1x8xi1>
    %205 = arith.andi %202, %204 : vector<1x8xi1>
    %cst_84 = arith.constant -1.000000e+09 : f32
    %cst_85 = arith.constant 0.000000e+00 : f32
    %206 = vector.broadcast %cst_84 : f32 to vector<1x8xf32>
    %207 = vector.broadcast %cst_85 : f32 to vector<1x8xf32>
    %208 = arith.select %205, %206, %207 : vector<1x8xi1>, vector<1x8xf32>
    %209 = arith.addf %199, %208 : vector<1x8xf32>
    %c0_86 = arith.constant 0 : index
    %c4_87 = arith.constant 4 : index
    %210 = memref.load %arg2[%c0_86, %c4_87] : memref<2x8xi32, #tpu.memory_space<smem>>
    %c4_i32_88 = arith.constant 4 : i32
    %211 = vector.broadcast %c4_i32_88 : i32 to vector<1x8xi32>
    %212 = arith.cmpi eq, %168, %211 : vector<1x8xi32>
    %c0_i32_89 = arith.constant 0 : i32
    %213 = arith.cmpi eq, %210, %c0_i32_89 : i32
    %214 = vector.broadcast %213 : i1 to vector<1x8xi1>
    %215 = arith.andi %212, %214 : vector<1x8xi1>
    %cst_90 = arith.constant -1.000000e+09 : f32
    %cst_91 = arith.constant 0.000000e+00 : f32
    %216 = vector.broadcast %cst_90 : f32 to vector<1x8xf32>
    %217 = vector.broadcast %cst_91 : f32 to vector<1x8xf32>
    %218 = arith.select %215, %216, %217 : vector<1x8xi1>, vector<1x8xf32>
    %219 = arith.addf %209, %218 : vector<1x8xf32>
    %c0_92 = arith.constant 0 : index
    %c5_93 = arith.constant 5 : index
    %220 = memref.load %arg2[%c0_92, %c5_93] : memref<2x8xi32, #tpu.memory_space<smem>>
    %c5_i32_94 = arith.constant 5 : i32
    %221 = vector.broadcast %c5_i32_94 : i32 to vector<1x8xi32>
    %222 = arith.cmpi eq, %168, %221 : vector<1x8xi32>
    %c0_i32_95 = arith.constant 0 : i32
    %223 = arith.cmpi eq, %220, %c0_i32_95 : i32
    %224 = vector.broadcast %223 : i1 to vector<1x8xi1>
    %225 = arith.andi %222, %224 : vector<1x8xi1>
    %cst_96 = arith.constant -1.000000e+09 : f32
    %cst_97 = arith.constant 0.000000e+00 : f32
    %226 = vector.broadcast %cst_96 : f32 to vector<1x8xf32>
    %227 = vector.broadcast %cst_97 : f32 to vector<1x8xf32>
    %228 = arith.select %225, %226, %227 : vector<1x8xi1>, vector<1x8xf32>
    %229 = arith.addf %219, %228 : vector<1x8xf32>
    %c0_98 = arith.constant 0 : index
    %c6_99 = arith.constant 6 : index
    %230 = memref.load %arg2[%c0_98, %c6_99] : memref<2x8xi32, #tpu.memory_space<smem>>
    %c6_i32_100 = arith.constant 6 : i32
    %231 = vector.broadcast %c6_i32_100 : i32 to vector<1x8xi32>
    %232 = arith.cmpi eq, %168, %231 : vector<1x8xi32>
    %c0_i32_101 = arith.constant 0 : i32
    %233 = arith.cmpi eq, %230, %c0_i32_101 : i32
    %234 = vector.broadcast %233 : i1 to vector<1x8xi1>
    %235 = arith.andi %232, %234 : vector<1x8xi1>
    %cst_102 = arith.constant -1.000000e+09 : f32
    %cst_103 = arith.constant 0.000000e+00 : f32
    %236 = vector.broadcast %cst_102 : f32 to vector<1x8xf32>
    %237 = vector.broadcast %cst_103 : f32 to vector<1x8xf32>
    %238 = arith.select %235, %236, %237 : vector<1x8xi1>, vector<1x8xf32>
    %239 = arith.addf %229, %238 : vector<1x8xf32>
    %c0_104 = arith.constant 0 : index
    %c7_105 = arith.constant 7 : index
    %240 = memref.load %arg2[%c0_104, %c7_105] : memref<2x8xi32, #tpu.memory_space<smem>>
    %c7_i32_106 = arith.constant 7 : i32
    %241 = vector.broadcast %c7_i32_106 : i32 to vector<1x8xi32>
    %242 = arith.cmpi eq, %168, %241 : vector<1x8xi32>
    %c0_i32_107 = arith.constant 0 : i32
    %243 = arith.cmpi eq, %240, %c0_i32_107 : i32
    %244 = vector.broadcast %243 : i1 to vector<1x8xi1>
    %245 = arith.andi %242, %244 : vector<1x8xi1>
    %cst_108 = arith.constant -1.000000e+09 : f32
    %cst_109 = arith.constant 0.000000e+00 : f32
    %246 = vector.broadcast %cst_108 : f32 to vector<1x8xf32>
    %247 = vector.broadcast %cst_109 : f32 to vector<1x8xf32>
    %248 = arith.select %245, %246, %247 : vector<1x8xi1>, vector<1x8xf32>
    %249 = arith.addf %239, %248 : vector<1x8xf32>
    %cst_110 = arith.constant 0.000000e+00 : f32
    %250 = vector.broadcast %cst_110 : f32 to vector<1x8xf32>
    %c1_111 = arith.constant 1 : index
    %c0_112 = arith.constant 0 : index
    %251 = memref.load %arg2[%c1_111, %c0_112] : memref<2x8xi32, #tpu.memory_space<smem>>
    %c0_i32_113 = arith.constant 0 : i32
    %252 = vector.broadcast %c0_i32_113 : i32 to vector<1x8xi32>
    %253 = arith.cmpi eq, %168, %252 : vector<1x8xi32>
    %c0_i32_114 = arith.constant 0 : i32
    %254 = arith.cmpi eq, %251, %c0_i32_114 : i32
    %255 = vector.broadcast %254 : i1 to vector<1x8xi1>
    %256 = arith.andi %253, %255 : vector<1x8xi1>
    %cst_115 = arith.constant -1.000000e+09 : f32
    %cst_116 = arith.constant 0.000000e+00 : f32
    %257 = vector.broadcast %cst_115 : f32 to vector<1x8xf32>
    %258 = vector.broadcast %cst_116 : f32 to vector<1x8xf32>
    %259 = arith.select %256, %257, %258 : vector<1x8xi1>, vector<1x8xf32>
    %260 = arith.addf %250, %259 : vector<1x8xf32>
    %c1_117 = arith.constant 1 : index
    %c1_118 = arith.constant 1 : index
    %261 = memref.load %arg2[%c1_117, %c1_118] : memref<2x8xi32, #tpu.memory_space<smem>>
    %c1_i32_119 = arith.constant 1 : i32
    %262 = vector.broadcast %c1_i32_119 : i32 to vector<1x8xi32>
    %263 = arith.cmpi eq, %168, %262 : vector<1x8xi32>
    %c0_i32_120 = arith.constant 0 : i32
    %264 = arith.cmpi eq, %261, %c0_i32_120 : i32
    %265 = vector.broadcast %264 : i1 to vector<1x8xi1>
    %266 = arith.andi %263, %265 : vector<1x8xi1>
    %cst_121 = arith.constant -1.000000e+09 : f32
    %cst_122 = arith.constant 0.000000e+00 : f32
    %267 = vector.broadcast %cst_121 : f32 to vector<1x8xf32>
    %268 = vector.broadcast %cst_122 : f32 to vector<1x8xf32>
    %269 = arith.select %266, %267, %268 : vector<1x8xi1>, vector<1x8xf32>
    %270 = arith.addf %260, %269 : vector<1x8xf32>
    %c1_123 = arith.constant 1 : index
    %c2_124 = arith.constant 2 : index
    %271 = memref.load %arg2[%c1_123, %c2_124] : memref<2x8xi32, #tpu.memory_space<smem>>
    %c2_i32_125 = arith.constant 2 : i32
    %272 = vector.broadcast %c2_i32_125 : i32 to vector<1x8xi32>
    %273 = arith.cmpi eq, %168, %272 : vector<1x8xi32>
    %c0_i32_126 = arith.constant 0 : i32
    %274 = arith.cmpi eq, %271, %c0_i32_126 : i32
    %275 = vector.broadcast %274 : i1 to vector<1x8xi1>
    %276 = arith.andi %273, %275 : vector<1x8xi1>
    %cst_127 = arith.constant -1.000000e+09 : f32
    %cst_128 = arith.constant 0.000000e+00 : f32
    %277 = vector.broadcast %cst_127 : f32 to vector<1x8xf32>
    %278 = vector.broadcast %cst_128 : f32 to vector<1x8xf32>
    %279 = arith.select %276, %277, %278 : vector<1x8xi1>, vector<1x8xf32>
    %280 = arith.addf %270, %279 : vector<1x8xf32>
    %c1_129 = arith.constant 1 : index
    %c3_130 = arith.constant 3 : index
    %281 = memref.load %arg2[%c1_129, %c3_130] : memref<2x8xi32, #tpu.memory_space<smem>>
    %c3_i32_131 = arith.constant 3 : i32
    %282 = vector.broadcast %c3_i32_131 : i32 to vector<1x8xi32>
    %283 = arith.cmpi eq, %168, %282 : vector<1x8xi32>
    %c0_i32_132 = arith.constant 0 : i32
    %284 = arith.cmpi eq, %281, %c0_i32_132 : i32
    %285 = vector.broadcast %284 : i1 to vector<1x8xi1>
    %286 = arith.andi %283, %285 : vector<1x8xi1>
    %cst_133 = arith.constant -1.000000e+09 : f32
    %cst_134 = arith.constant 0.000000e+00 : f32
    %287 = vector.broadcast %cst_133 : f32 to vector<1x8xf32>
    %288 = vector.broadcast %cst_134 : f32 to vector<1x8xf32>
    %289 = arith.select %286, %287, %288 : vector<1x8xi1>, vector<1x8xf32>
    %290 = arith.addf %280, %289 : vector<1x8xf32>
    %c1_135 = arith.constant 1 : index
    %c4_136 = arith.constant 4 : index
    %291 = memref.load %arg2[%c1_135, %c4_136] : memref<2x8xi32, #tpu.memory_space<smem>>
    %c4_i32_137 = arith.constant 4 : i32
    %292 = vector.broadcast %c4_i32_137 : i32 to vector<1x8xi32>
    %293 = arith.cmpi eq, %168, %292 : vector<1x8xi32>
    %c0_i32_138 = arith.constant 0 : i32
    %294 = arith.cmpi eq, %291, %c0_i32_138 : i32
    %295 = vector.broadcast %294 : i1 to vector<1x8xi1>
    %296 = arith.andi %293, %295 : vector<1x8xi1>
    %cst_139 = arith.constant -1.000000e+09 : f32
    %cst_140 = arith.constant 0.000000e+00 : f32
    %297 = vector.broadcast %cst_139 : f32 to vector<1x8xf32>
    %298 = vector.broadcast %cst_140 : f32 to vector<1x8xf32>
    %299 = arith.select %296, %297, %298 : vector<1x8xi1>, vector<1x8xf32>
    %300 = arith.addf %290, %299 : vector<1x8xf32>
    %c1_141 = arith.constant 1 : index
    %c5_142 = arith.constant 5 : index
    %301 = memref.load %arg2[%c1_141, %c5_142] : memref<2x8xi32, #tpu.memory_space<smem>>
    %c5_i32_143 = arith.constant 5 : i32
    %302 = vector.broadcast %c5_i32_143 : i32 to vector<1x8xi32>
    %303 = arith.cmpi eq, %168, %302 : vector<1x8xi32>
    %c0_i32_144 = arith.constant 0 : i32
    %304 = arith.cmpi eq, %301, %c0_i32_144 : i32
    %305 = vector.broadcast %304 : i1 to vector<1x8xi1>
    %306 = arith.andi %303, %305 : vector<1x8xi1>
    %cst_145 = arith.constant -1.000000e+09 : f32
    %cst_146 = arith.constant 0.000000e+00 : f32
    %307 = vector.broadcast %cst_145 : f32 to vector<1x8xf32>
    %308 = vector.broadcast %cst_146 : f32 to vector<1x8xf32>
    %309 = arith.select %306, %307, %308 : vector<1x8xi1>, vector<1x8xf32>
    %310 = arith.addf %300, %309 : vector<1x8xf32>
    %c1_147 = arith.constant 1 : index
    %c6_148 = arith.constant 6 : index
    %311 = memref.load %arg2[%c1_147, %c6_148] : memref<2x8xi32, #tpu.memory_space<smem>>
    %c6_i32_149 = arith.constant 6 : i32
    %312 = vector.broadcast %c6_i32_149 : i32 to vector<1x8xi32>
    %313 = arith.cmpi eq, %168, %312 : vector<1x8xi32>
    %c0_i32_150 = arith.constant 0 : i32
    %314 = arith.cmpi eq, %311, %c0_i32_150 : i32
    %315 = vector.broadcast %314 : i1 to vector<1x8xi1>
    %316 = arith.andi %313, %315 : vector<1x8xi1>
    %cst_151 = arith.constant -1.000000e+09 : f32
    %cst_152 = arith.constant 0.000000e+00 : f32
    %317 = vector.broadcast %cst_151 : f32 to vector<1x8xf32>
    %318 = vector.broadcast %cst_152 : f32 to vector<1x8xf32>
    %319 = arith.select %316, %317, %318 : vector<1x8xi1>, vector<1x8xf32>
    %320 = arith.addf %310, %319 : vector<1x8xf32>
    %c1_153 = arith.constant 1 : index
    %c7_154 = arith.constant 7 : index
    %321 = memref.load %arg2[%c1_153, %c7_154] : memref<2x8xi32, #tpu.memory_space<smem>>
    %c7_i32_155 = arith.constant 7 : i32
    %322 = vector.broadcast %c7_i32_155 : i32 to vector<1x8xi32>
    %323 = arith.cmpi eq, %168, %322 : vector<1x8xi32>
    %c0_i32_156 = arith.constant 0 : i32
    %324 = arith.cmpi eq, %321, %c0_i32_156 : i32
    %325 = vector.broadcast %324 : i1 to vector<1x8xi1>
    %326 = arith.andi %323, %325 : vector<1x8xi1>
    %cst_157 = arith.constant -1.000000e+09 : f32
    %cst_158 = arith.constant 0.000000e+00 : f32
    %327 = vector.broadcast %cst_157 : f32 to vector<1x8xf32>
    %328 = vector.broadcast %cst_158 : f32 to vector<1x8xf32>
    %329 = arith.select %326, %327, %328 : vector<1x8xi1>, vector<1x8xf32>
    %330 = arith.addf %320, %329 : vector<1x8xf32>
    %c0_159 = arith.constant 0 : index
    %c0_160 = arith.constant 0 : index
    %c0_161 = arith.constant 0 : index
    %331 = vector.load %arg9[%c0_159, %c0_160, %c0_161] : memref<2x1x32xf32, #tpu.memory_space<vmem>>, vector<1x1x32xf32>
    %332 = vector.shape_cast %331 : vector<1x1x32xf32> to vector<1x32xf32>
    %c0_162 = arith.constant 0 : index
    %c0_163 = arith.constant 0 : index
    %c0_164 = arith.constant 0 : index
    %333 = vector.load %arg10[%c0_162, %c0_163, %c0_164] : memref<2x1x32xf32, #tpu.memory_space<vmem>>, vector<1x1x32xf32>
    %334 = vector.shape_cast %333 : vector<1x1x32xf32> to vector<1x32xf32>
    %cst_165 = arith.constant dense<0.000000e+00> : vector<16xf32>
    %335 = vector.multi_reduction <add>, %167, %cst_165 [1] : vector<16x32xf32> to vector<16xf32>
    %336 = vector.shape_cast %335 : vector<16xf32> to vector<16x1xf32>
    %cst_166 = arith.constant 3.200000e+01 : f32
    %337 = vector.broadcast %cst_166 : f32 to vector<16x1xf32>
    %338 = arith.divf %336, %337 : vector<16x1xf32>
    %339 = vector.broadcast %338 : vector<16x1xf32> to vector<16x32xf32>
    %340 = arith.subf %167, %339 : vector<16x32xf32>
    %341 = arith.mulf %340, %340 : vector<16x32xf32>
    %cst_167 = arith.constant dense<0.000000e+00> : vector<16xf32>
    %342 = vector.multi_reduction <add>, %341, %cst_167 [1] : vector<16x32xf32> to vector<16xf32>
    %343 = vector.shape_cast %342 : vector<16xf32> to vector<16x1xf32>
    %cst_168 = arith.constant 0.0322580636 : f32
    %344 = vector.broadcast %cst_168 : f32 to vector<16x1xf32>
    %345 = arith.mulf %343, %344 : vector<16x1xf32>
    %346 = math.sqrt %345 : vector<16x1xf32>
    %cst_169 = arith.constant 9.99999997E-7 : f32
    %347 = vector.broadcast %cst_169 : f32 to vector<16x1xf32>
    %348 = arith.addf %346, %347 : vector<16x1xf32>
    %349 = tpu.reciprocal %348 {approx = true} : vector<16x1xf32> -> vector<16x1xf32>
    %350 = vector.broadcast %338 : vector<16x1xf32> to vector<16x32xf32>
    %351 = arith.subf %167, %350 : vector<16x32xf32>
    %352 = vector.broadcast %332 : vector<1x32xf32> to vector<16x32xf32>
    %353 = arith.mulf %352, %351 : vector<16x32xf32>
    %354 = vector.broadcast %349 : vector<16x1xf32> to vector<16x32xf32>
    %355 = arith.mulf %353, %354 : vector<16x32xf32>
    %356 = vector.broadcast %334 : vector<1x32xf32> to vector<16x32xf32>
    %357 = arith.addf %355, %356 : vector<16x32xf32>
    %358 = arith.truncf %357 : vector<16x32xf32> to vector<16x32xbf16>
    %c0_170 = arith.constant 0 : index
    %c0_171 = arith.constant 0 : index
    %c0_172 = arith.constant 0 : index
    %359 = vector.load %arg5[%c0_170, %c0_171, %c0_172] : memref<2x32x96xbf16, #tpu.memory_space<vmem>>, vector<1x32x96xbf16>
    %360 = vector.shape_cast %359 : vector<1x32x96xbf16> to vector<32x96xbf16>
    %cst_173 = arith.constant dense<0.000000e+00> : vector<16x96xf32>
    %361 = tpu.matmul %358, %360, %cst_173 {dimension_numbers = #tpu.dot_dimension_numbers<[1], [0], [0], [1], [0, 0, 1, 1], [], []>} : vector<16x32xbf16>, vector<32x96xbf16>, vector<16x96xf32> -> vector<16x96xf32>
    %c0_174 = arith.constant 0 : index
    %c0_175 = arith.constant 0 : index
    %c0_176 = arith.constant 0 : index
    %362 = vector.load %arg6[%c0_174, %c0_175, %c0_176] : memref<2x1x96xf32, #tpu.memory_space<vmem>>, vector<1x1x96xf32>
    %363 = vector.shape_cast %362 : vector<1x1x96xf32> to vector<1x96xf32>
    %364 = vector.broadcast %363 : vector<1x96xf32> to vector<16x96xf32>
    %365 = arith.addf %361, %364 : vector<16x96xf32>
    %366 = vector.extract_strided_slice %365 {offsets = [0, 0], sizes = [8, 8], strides = [1, 1]} : vector<16x96xf32> to vector<8x8xf32>
    %367 = vector.extract_strided_slice %365 {offsets = [0, 32], sizes = [8, 8], strides = [1, 1]} : vector<16x96xf32> to vector<8x8xf32>
    %368 = vector.extract_strided_slice %365 {offsets = [0, 64], sizes = [8, 8], strides = [1, 1]} : vector<16x96xf32> to vector<8x8xf32>
    %cst_177 = arith.constant dense<0.000000e+00> : vector<8x8xf32>
    %369 = tpu.matmul %366, %367, %cst_177 {dimension_numbers = #tpu.dot_dimension_numbers<[1], [1], [0], [0], [0, 0, 1, 0], [], []>} : vector<8x8xf32>, vector<8x8xf32>, vector<8x8xf32> -> vector<8x8xf32>
    %cst_178 = arith.constant 0.353553385 : f32
    %370 = vector.broadcast %cst_178 : f32 to vector<8x8xf32>
    %371 = arith.mulf %369, %370 : vector<8x8xf32>
    %372 = vector.broadcast %249 : vector<1x8xf32> to vector<8x8xf32>
    %373 = arith.addf %371, %372 : vector<8x8xf32>
    %cst_179 = arith.constant dense<0xFF800000> : vector<8xf32>
    %374 = vector.multi_reduction <maximumf>, %373, %cst_179 [1] : vector<8x8xf32> to vector<8xf32>
    %375 = vector.shape_cast %374 : vector<8xf32> to vector<8x1xf32>
    %376 = vector.broadcast %375 : vector<8x1xf32> to vector<8x8xf32>
    %377 = arith.subf %373, %376 : vector<8x8xf32>
    %378 = math.exp %377 : vector<8x8xf32>
    %cst_180 = arith.constant dense<0.000000e+00> : vector<8xf32>
    %379 = vector.multi_reduction <add>, %378, %cst_180 [1] : vector<8x8xf32> to vector<8xf32>
    %380 = vector.shape_cast %379 : vector<8xf32> to vector<8x1xf32>
    %381 = tpu.reciprocal %380 {approx = true} : vector<8x1xf32> -> vector<8x1xf32>
    %382 = vector.broadcast %381 : vector<8x1xf32> to vector<8x8xf32>
    %383 = arith.mulf %378, %382 : vector<8x8xf32>
    %384 = arith.truncf %383 : vector<8x8xf32> to vector<8x8xbf16>
    %385 = arith.truncf %368 : vector<8x8xf32> to vector<8x8xbf16>
    %cst_181 = arith.constant dense<0.000000e+00> : vector<8x8xf32>
    %386 = tpu.matmul %384, %385, %cst_181 {dimension_numbers = #tpu.dot_dimension_numbers<[1], [0], [0], [1], [0, 0, 1, 1], [], []>} : vector<8x8xbf16>, vector<8x8xbf16>, vector<8x8xf32> -> vector<8x8xf32>
    %387 = vector.extract_strided_slice %365 {offsets = [8, 0], sizes = [8, 8], strides = [1, 1]} : vector<16x96xf32> to vector<8x8xf32>
    %388 = vector.extract_strided_slice %365 {offsets = [8, 32], sizes = [8, 8], strides = [1, 1]} : vector<16x96xf32> to vector<8x8xf32>
    %389 = vector.extract_strided_slice %365 {offsets = [8, 64], sizes = [8, 8], strides = [1, 1]} : vector<16x96xf32> to vector<8x8xf32>
    %cst_182 = arith.constant dense<0.000000e+00> : vector<8x8xf32>
    %390 = tpu.matmul %387, %388, %cst_182 {dimension_numbers = #tpu.dot_dimension_numbers<[1], [1], [0], [0], [0, 0, 1, 0], [], []>} : vector<8x8xf32>, vector<8x8xf32>, vector<8x8xf32> -> vector<8x8xf32>
    %cst_183 = arith.constant 0.353553385 : f32
    %391 = vector.broadcast %cst_183 : f32 to vector<8x8xf32>
    %392 = arith.mulf %390, %391 : vector<8x8xf32>
    %393 = vector.broadcast %330 : vector<1x8xf32> to vector<8x8xf32>
    %394 = arith.addf %392, %393 : vector<8x8xf32>
    %cst_184 = arith.constant dense<0xFF800000> : vector<8xf32>
    %395 = vector.multi_reduction <maximumf>, %394, %cst_184 [1] : vector<8x8xf32> to vector<8xf32>
    %396 = vector.shape_cast %395 : vector<8xf32> to vector<8x1xf32>
    %397 = vector.broadcast %396 : vector<8x1xf32> to vector<8x8xf32>
    %398 = arith.subf %394, %397 : vector<8x8xf32>
    %399 = math.exp %398 : vector<8x8xf32>
    %cst_185 = arith.constant dense<0.000000e+00> : vector<8xf32>
    %400 = vector.multi_reduction <add>, %399, %cst_185 [1] : vector<8x8xf32> to vector<8xf32>
    %401 = vector.shape_cast %400 : vector<8xf32> to vector<8x1xf32>
    %402 = tpu.reciprocal %401 {approx = true} : vector<8x1xf32> -> vector<8x1xf32>
    %403 = vector.broadcast %402 : vector<8x1xf32> to vector<8x8xf32>
    %404 = arith.mulf %399, %403 : vector<8x8xf32>
    %405 = arith.truncf %404 : vector<8x8xf32> to vector<8x8xbf16>
    %406 = arith.truncf %389 : vector<8x8xf32> to vector<8x8xbf16>
    %cst_186 = arith.constant dense<0.000000e+00> : vector<8x8xf32>
    %407 = tpu.matmul %405, %406, %cst_186 {dimension_numbers = #tpu.dot_dimension_numbers<[1], [0], [0], [1], [0, 0, 1, 1], [], []>} : vector<8x8xbf16>, vector<8x8xbf16>, vector<8x8xf32> -> vector<8x8xf32>
    %408 = tpu.concatenate %386, %407 in 0 : vector<8x8xf32>, vector<8x8xf32> -> vector<16x8xf32>
    %409 = vector.extract_strided_slice %365 {offsets = [0, 8], sizes = [8, 8], strides = [1, 1]} : vector<16x96xf32> to vector<8x8xf32>
    %410 = vector.extract_strided_slice %365 {offsets = [0, 40], sizes = [8, 8], strides = [1, 1]} : vector<16x96xf32> to vector<8x8xf32>
    %411 = vector.extract_strided_slice %365 {offsets = [0, 72], sizes = [8, 8], strides = [1, 1]} : vector<16x96xf32> to vector<8x8xf32>
    %cst_187 = arith.constant dense<0.000000e+00> : vector<8x8xf32>
    %412 = tpu.matmul %409, %410, %cst_187 {dimension_numbers = #tpu.dot_dimension_numbers<[1], [1], [0], [0], [0, 0, 1, 0], [], []>} : vector<8x8xf32>, vector<8x8xf32>, vector<8x8xf32> -> vector<8x8xf32>
    %cst_188 = arith.constant 0.353553385 : f32
    %413 = vector.broadcast %cst_188 : f32 to vector<8x8xf32>
    %414 = arith.mulf %412, %413 : vector<8x8xf32>
    %415 = vector.broadcast %249 : vector<1x8xf32> to vector<8x8xf32>
    %416 = arith.addf %414, %415 : vector<8x8xf32>
    %cst_189 = arith.constant dense<0xFF800000> : vector<8xf32>
    %417 = vector.multi_reduction <maximumf>, %416, %cst_189 [1] : vector<8x8xf32> to vector<8xf32>
    %418 = vector.shape_cast %417 : vector<8xf32> to vector<8x1xf32>
    %419 = vector.broadcast %418 : vector<8x1xf32> to vector<8x8xf32>
    %420 = arith.subf %416, %419 : vector<8x8xf32>
    %421 = math.exp %420 : vector<8x8xf32>
    %cst_190 = arith.constant dense<0.000000e+00> : vector<8xf32>
    %422 = vector.multi_reduction <add>, %421, %cst_190 [1] : vector<8x8xf32> to vector<8xf32>
    %423 = vector.shape_cast %422 : vector<8xf32> to vector<8x1xf32>
    %424 = tpu.reciprocal %423 {approx = true} : vector<8x1xf32> -> vector<8x1xf32>
    %425 = vector.broadcast %424 : vector<8x1xf32> to vector<8x8xf32>
    %426 = arith.mulf %421, %425 : vector<8x8xf32>
    %427 = arith.truncf %426 : vector<8x8xf32> to vector<8x8xbf16>
    %428 = arith.truncf %411 : vector<8x8xf32> to vector<8x8xbf16>
    %cst_191 = arith.constant dense<0.000000e+00> : vector<8x8xf32>
    %429 = tpu.matmul %427, %428, %cst_191 {dimension_numbers = #tpu.dot_dimension_numbers<[1], [0], [0], [1], [0, 0, 1, 1], [], []>} : vector<8x8xbf16>, vector<8x8xbf16>, vector<8x8xf32> -> vector<8x8xf32>
    %430 = vector.extract_strided_slice %365 {offsets = [8, 8], sizes = [8, 8], strides = [1, 1]} : vector<16x96xf32> to vector<8x8xf32>
    %431 = vector.extract_strided_slice %365 {offsets = [8, 40], sizes = [8, 8], strides = [1, 1]} : vector<16x96xf32> to vector<8x8xf32>
    %432 = vector.extract_strided_slice %365 {offsets = [8, 72], sizes = [8, 8], strides = [1, 1]} : vector<16x96xf32> to vector<8x8xf32>
    %cst_192 = arith.constant dense<0.000000e+00> : vector<8x8xf32>
    %433 = tpu.matmul %430, %431, %cst_192 {dimension_numbers = #tpu.dot_dimension_numbers<[1], [1], [0], [0], [0, 0, 1, 0], [], []>} : vector<8x8xf32>, vector<8x8xf32>, vector<8x8xf32> -> vector<8x8xf32>
    %cst_193 = arith.constant 0.353553385 : f32
    %434 = vector.broadcast %cst_193 : f32 to vector<8x8xf32>
    %435 = arith.mulf %433, %434 : vector<8x8xf32>
    %436 = vector.broadcast %330 : vector<1x8xf32> to vector<8x8xf32>
    %437 = arith.addf %435, %436 : vector<8x8xf32>
    %cst_194 = arith.constant dense<0xFF800000> : vector<8xf32>
    %438 = vector.multi_reduction <maximumf>, %437, %cst_194 [1] : vector<8x8xf32> to vector<8xf32>
    %439 = vector.shape_cast %438 : vector<8xf32> to vector<8x1xf32>
    %440 = vector.broadcast %439 : vector<8x1xf32> to vector<8x8xf32>
    %441 = arith.subf %437, %440 : vector<8x8xf32>
    %442 = math.exp %441 : vector<8x8xf32>
    %cst_195 = arith.constant dense<0.000000e+00> : vector<8xf32>
    %443 = vector.multi_reduction <add>, %442, %cst_195 [1] : vector<8x8xf32> to vector<8xf32>
    %444 = vector.shape_cast %443 : vector<8xf32> to vector<8x1xf32>
    %445 = tpu.reciprocal %444 {approx = true} : vector<8x1xf32> -> vector<8x1xf32>
    %446 = vector.broadcast %445 : vector<8x1xf32> to vector<8x8xf32>
    %447 = arith.mulf %442, %446 : vector<8x8xf32>
    %448 = arith.truncf %447 : vector<8x8xf32> to vector<8x8xbf16>
    %449 = arith.truncf %432 : vector<8x8xf32> to vector<8x8xbf16>
    %cst_196 = arith.constant dense<0.000000e+00> : vector<8x8xf32>
    %450 = tpu.matmul %448, %449, %cst_196 {dimension_numbers = #tpu.dot_dimension_numbers<[1], [0], [0], [1], [0, 0, 1, 1], [], []>} : vector<8x8xbf16>, vector<8x8xbf16>, vector<8x8xf32> -> vector<8x8xf32>
    %451 = tpu.concatenate %429, %450 in 0 : vector<8x8xf32>, vector<8x8xf32> -> vector<16x8xf32>
    %452 = vector.extract_strided_slice %365 {offsets = [0, 16], sizes = [8, 8], strides = [1, 1]} : vector<16x96xf32> to vector<8x8xf32>
    %453 = vector.extract_strided_slice %365 {offsets = [0, 48], sizes = [8, 8], strides = [1, 1]} : vector<16x96xf32> to vector<8x8xf32>
    %454 = vector.extract_strided_slice %365 {offsets = [0, 80], sizes = [8, 8], strides = [1, 1]} : vector<16x96xf32> to vector<8x8xf32>
    %cst_197 = arith.constant dense<0.000000e+00> : vector<8x8xf32>
    %455 = tpu.matmul %452, %453, %cst_197 {dimension_numbers = #tpu.dot_dimension_numbers<[1], [1], [0], [0], [0, 0, 1, 0], [], []>} : vector<8x8xf32>, vector<8x8xf32>, vector<8x8xf32> -> vector<8x8xf32>
    %cst_198 = arith.constant 0.353553385 : f32
    %456 = vector.broadcast %cst_198 : f32 to vector<8x8xf32>
    %457 = arith.mulf %455, %456 : vector<8x8xf32>
    %458 = vector.broadcast %249 : vector<1x8xf32> to vector<8x8xf32>
    %459 = arith.addf %457, %458 : vector<8x8xf32>
    %cst_199 = arith.constant dense<0xFF800000> : vector<8xf32>
    %460 = vector.multi_reduction <maximumf>, %459, %cst_199 [1] : vector<8x8xf32> to vector<8xf32>
    %461 = vector.shape_cast %460 : vector<8xf32> to vector<8x1xf32>
    %462 = vector.broadcast %461 : vector<8x1xf32> to vector<8x8xf32>
    %463 = arith.subf %459, %462 : vector<8x8xf32>
    %464 = math.exp %463 : vector<8x8xf32>
    %cst_200 = arith.constant dense<0.000000e+00> : vector<8xf32>
    %465 = vector.multi_reduction <add>, %464, %cst_200 [1] : vector<8x8xf32> to vector<8xf32>
    %466 = vector.shape_cast %465 : vector<8xf32> to vector<8x1xf32>
    %467 = tpu.reciprocal %466 {approx = true} : vector<8x1xf32> -> vector<8x1xf32>
    %468 = vector.broadcast %467 : vector<8x1xf32> to vector<8x8xf32>
    %469 = arith.mulf %464, %468 : vector<8x8xf32>
    %470 = arith.truncf %469 : vector<8x8xf32> to vector<8x8xbf16>
    %471 = arith.truncf %454 : vector<8x8xf32> to vector<8x8xbf16>
    %cst_201 = arith.constant dense<0.000000e+00> : vector<8x8xf32>
    %472 = tpu.matmul %470, %471, %cst_201 {dimension_numbers = #tpu.dot_dimension_numbers<[1], [0], [0], [1], [0, 0, 1, 1], [], []>} : vector<8x8xbf16>, vector<8x8xbf16>, vector<8x8xf32> -> vector<8x8xf32>
    %473 = vector.extract_strided_slice %365 {offsets = [8, 16], sizes = [8, 8], strides = [1, 1]} : vector<16x96xf32> to vector<8x8xf32>
    %474 = vector.extract_strided_slice %365 {offsets = [8, 48], sizes = [8, 8], strides = [1, 1]} : vector<16x96xf32> to vector<8x8xf32>
    %475 = vector.extract_strided_slice %365 {offsets = [8, 80], sizes = [8, 8], strides = [1, 1]} : vector<16x96xf32> to vector<8x8xf32>
    %cst_202 = arith.constant dense<0.000000e+00> : vector<8x8xf32>
    %476 = tpu.matmul %473, %474, %cst_202 {dimension_numbers = #tpu.dot_dimension_numbers<[1], [1], [0], [0], [0, 0, 1, 0], [], []>} : vector<8x8xf32>, vector<8x8xf32>, vector<8x8xf32> -> vector<8x8xf32>
    %cst_203 = arith.constant 0.353553385 : f32
    %477 = vector.broadcast %cst_203 : f32 to vector<8x8xf32>
    %478 = arith.mulf %476, %477 : vector<8x8xf32>
    %479 = vector.broadcast %330 : vector<1x8xf32> to vector<8x8xf32>
    %480 = arith.addf %478, %479 : vector<8x8xf32>
    %cst_204 = arith.constant dense<0xFF800000> : vector<8xf32>
    %481 = vector.multi_reduction <maximumf>, %480, %cst_204 [1] : vector<8x8xf32> to vector<8xf32>
    %482 = vector.shape_cast %481 : vector<8xf32> to vector<8x1xf32>
    %483 = vector.broadcast %482 : vector<8x1xf32> to vector<8x8xf32>
    %484 = arith.subf %480, %483 : vector<8x8xf32>
    %485 = math.exp %484 : vector<8x8xf32>
    %cst_205 = arith.constant dense<0.000000e+00> : vector<8xf32>
    %486 = vector.multi_reduction <add>, %485, %cst_205 [1] : vector<8x8xf32> to vector<8xf32>
    %487 = vector.shape_cast %486 : vector<8xf32> to vector<8x1xf32>
    %488 = tpu.reciprocal %487 {approx = true} : vector<8x1xf32> -> vector<8x1xf32>
    %489 = vector.broadcast %488 : vector<8x1xf32> to vector<8x8xf32>
    %490 = arith.mulf %485, %489 : vector<8x8xf32>
    %491 = arith.truncf %490 : vector<8x8xf32> to vector<8x8xbf16>
    %492 = arith.truncf %475 : vector<8x8xf32> to vector<8x8xbf16>
    %cst_206 = arith.constant dense<0.000000e+00> : vector<8x8xf32>
    %493 = tpu.matmul %491, %492, %cst_206 {dimension_numbers = #tpu.dot_dimension_numbers<[1], [0], [0], [1], [0, 0, 1, 1], [], []>} : vector<8x8xbf16>, vector<8x8xbf16>, vector<8x8xf32> -> vector<8x8xf32>
    %494 = tpu.concatenate %472, %493 in 0 : vector<8x8xf32>, vector<8x8xf32> -> vector<16x8xf32>
    %495 = vector.extract_strided_slice %365 {offsets = [0, 24], sizes = [8, 8], strides = [1, 1]} : vector<16x96xf32> to vector<8x8xf32>
    %496 = vector.extract_strided_slice %365 {offsets = [0, 56], sizes = [8, 8], strides = [1, 1]} : vector<16x96xf32> to vector<8x8xf32>
    %497 = vector.extract_strided_slice %365 {offsets = [0, 88], sizes = [8, 8], strides = [1, 1]} : vector<16x96xf32> to vector<8x8xf32>
    %cst_207 = arith.constant dense<0.000000e+00> : vector<8x8xf32>
    %498 = tpu.matmul %495, %496, %cst_207 {dimension_numbers = #tpu.dot_dimension_numbers<[1], [1], [0], [0], [0, 0, 1, 0], [], []>} : vector<8x8xf32>, vector<8x8xf32>, vector<8x8xf32> -> vector<8x8xf32>
    %cst_208 = arith.constant 0.353553385 : f32
    %499 = vector.broadcast %cst_208 : f32 to vector<8x8xf32>
    %500 = arith.mulf %498, %499 : vector<8x8xf32>
    %501 = vector.broadcast %249 : vector<1x8xf32> to vector<8x8xf32>
    %502 = arith.addf %500, %501 : vector<8x8xf32>
    %cst_209 = arith.constant dense<0xFF800000> : vector<8xf32>
    %503 = vector.multi_reduction <maximumf>, %502, %cst_209 [1] : vector<8x8xf32> to vector<8xf32>
    %504 = vector.shape_cast %503 : vector<8xf32> to vector<8x1xf32>
    %505 = vector.broadcast %504 : vector<8x1xf32> to vector<8x8xf32>
    %506 = arith.subf %502, %505 : vector<8x8xf32>
    %507 = math.exp %506 : vector<8x8xf32>
    %cst_210 = arith.constant dense<0.000000e+00> : vector<8xf32>
    %508 = vector.multi_reduction <add>, %507, %cst_210 [1] : vector<8x8xf32> to vector<8xf32>
    %509 = vector.shape_cast %508 : vector<8xf32> to vector<8x1xf32>
    %510 = tpu.reciprocal %509 {approx = true} : vector<8x1xf32> -> vector<8x1xf32>
    %511 = vector.broadcast %510 : vector<8x1xf32> to vector<8x8xf32>
    %512 = arith.mulf %507, %511 : vector<8x8xf32>
    %513 = arith.truncf %512 : vector<8x8xf32> to vector<8x8xbf16>
    %514 = arith.truncf %497 : vector<8x8xf32> to vector<8x8xbf16>
    %cst_211 = arith.constant dense<0.000000e+00> : vector<8x8xf32>
    %515 = tpu.matmul %513, %514, %cst_211 {dimension_numbers = #tpu.dot_dimension_numbers<[1], [0], [0], [1], [0, 0, 1, 1], [], []>} : vector<8x8xbf16>, vector<8x8xbf16>, vector<8x8xf32> -> vector<8x8xf32>
    %516 = vector.extract_strided_slice %365 {offsets = [8, 24], sizes = [8, 8], strides = [1, 1]} : vector<16x96xf32> to vector<8x8xf32>
    %517 = vector.extract_strided_slice %365 {offsets = [8, 56], sizes = [8, 8], strides = [1, 1]} : vector<16x96xf32> to vector<8x8xf32>
    %518 = vector.extract_strided_slice %365 {offsets = [8, 88], sizes = [8, 8], strides = [1, 1]} : vector<16x96xf32> to vector<8x8xf32>
    %cst_212 = arith.constant dense<0.000000e+00> : vector<8x8xf32>
    %519 = tpu.matmul %516, %517, %cst_212 {dimension_numbers = #tpu.dot_dimension_numbers<[1], [1], [0], [0], [0, 0, 1, 0], [], []>} : vector<8x8xf32>, vector<8x8xf32>, vector<8x8xf32> -> vector<8x8xf32>
    %cst_213 = arith.constant 0.353553385 : f32
    %520 = vector.broadcast %cst_213 : f32 to vector<8x8xf32>
    %521 = arith.mulf %519, %520 : vector<8x8xf32>
    %522 = vector.broadcast %330 : vector<1x8xf32> to vector<8x8xf32>
    %523 = arith.addf %521, %522 : vector<8x8xf32>
    %cst_214 = arith.constant dense<0xFF800000> : vector<8xf32>
    %524 = vector.multi_reduction <maximumf>, %523, %cst_214 [1] : vector<8x8xf32> to vector<8xf32>
    %525 = vector.shape_cast %524 : vector<8xf32> to vector<8x1xf32>
    %526 = vector.broadcast %525 : vector<8x1xf32> to vector<8x8xf32>
    %527 = arith.subf %523, %526 : vector<8x8xf32>
    %528 = math.exp %527 : vector<8x8xf32>
    %cst_215 = arith.constant dense<0.000000e+00> : vector<8xf32>
    %529 = vector.multi_reduction <add>, %528, %cst_215 [1] : vector<8x8xf32> to vector<8xf32>
    %530 = vector.shape_cast %529 : vector<8xf32> to vector<8x1xf32>
    %531 = tpu.reciprocal %530 {approx = true} : vector<8x1xf32> -> vector<8x1xf32>
    %532 = vector.broadcast %531 : vector<8x1xf32> to vector<8x8xf32>
    %533 = arith.mulf %528, %532 : vector<8x8xf32>
    %534 = arith.truncf %533 : vector<8x8xf32> to vector<8x8xbf16>
    %535 = arith.truncf %518 : vector<8x8xf32> to vector<8x8xbf16>
    %cst_216 = arith.constant dense<0.000000e+00> : vector<8x8xf32>
    %536 = tpu.matmul %534, %535, %cst_216 {dimension_numbers = #tpu.dot_dimension_numbers<[1], [0], [0], [1], [0, 0, 1, 1], [], []>} : vector<8x8xbf16>, vector<8x8xbf16>, vector<8x8xf32> -> vector<8x8xf32>
    %537 = tpu.concatenate %515, %536 in 0 : vector<8x8xf32>, vector<8x8xf32> -> vector<16x8xf32>
    %538 = tpu.concatenate %408, %451, %494, %537 in 1 : vector<16x8xf32>, vector<16x8xf32>, vector<16x8xf32>, vector<16x8xf32> -> vector<16x32xf32>
    %539 = arith.truncf %538 : vector<16x32xf32> to vector<16x32xbf16>
    %c0_217 = arith.constant 0 : index
    %c0_218 = arith.constant 0 : index
    %c0_219 = arith.constant 0 : index
    %540 = vector.load %arg7[%c0_217, %c0_218, %c0_219] : memref<2x32x32xbf16, #tpu.memory_space<vmem>>, vector<1x32x32xbf16>
    %541 = vector.shape_cast %540 : vector<1x32x32xbf16> to vector<32x32xbf16>
    %cst_220 = arith.constant dense<0.000000e+00> : vector<16x32xf32>
    %542 = tpu.matmul %539, %541, %cst_220 {dimension_numbers = #tpu.dot_dimension_numbers<[1], [0], [0], [1], [0, 0, 1, 1], [], []>} : vector<16x32xbf16>, vector<32x32xbf16>, vector<16x32xf32> -> vector<16x32xf32>
    %c0_221 = arith.constant 0 : index
    %c0_222 = arith.constant 0 : index
    %c0_223 = arith.constant 0 : index
    %543 = vector.load %arg8[%c0_221, %c0_222, %c0_223] : memref<2x1x32xf32, #tpu.memory_space<vmem>>, vector<1x1x32xf32>
    %544 = vector.shape_cast %543 : vector<1x1x32xf32> to vector<1x32xf32>
    %545 = vector.broadcast %544 : vector<1x32xf32> to vector<16x32xf32>
    %546 = arith.addf %542, %545 : vector<16x32xf32>
    %547 = arith.addf %167, %546 : vector<16x32xf32>
    %c0_224 = arith.constant 0 : index
    %c0_225 = arith.constant 0 : index
    %c0_226 = arith.constant 0 : index
    %548 = vector.load %arg15[%c0_224, %c0_225, %c0_226] : memref<2x1x32xf32, #tpu.memory_space<vmem>>, vector<1x1x32xf32>
    %549 = vector.shape_cast %548 : vector<1x1x32xf32> to vector<1x32xf32>
    %c0_227 = arith.constant 0 : index
    %c0_228 = arith.constant 0 : index
    %c0_229 = arith.constant 0 : index
    %550 = vector.load %arg16[%c0_227, %c0_228, %c0_229] : memref<2x1x32xf32, #tpu.memory_space<vmem>>, vector<1x1x32xf32>
    %551 = vector.shape_cast %550 : vector<1x1x32xf32> to vector<1x32xf32>
    %cst_230 = arith.constant dense<0.000000e+00> : vector<16xf32>
    %552 = vector.multi_reduction <add>, %547, %cst_230 [1] : vector<16x32xf32> to vector<16xf32>
    %553 = vector.shape_cast %552 : vector<16xf32> to vector<16x1xf32>
    %cst_231 = arith.constant 3.200000e+01 : f32
    %554 = vector.broadcast %cst_231 : f32 to vector<16x1xf32>
    %555 = arith.divf %553, %554 : vector<16x1xf32>
    %556 = vector.broadcast %555 : vector<16x1xf32> to vector<16x32xf32>
    %557 = arith.subf %547, %556 : vector<16x32xf32>
    %558 = arith.mulf %557, %557 : vector<16x32xf32>
    %cst_232 = arith.constant dense<0.000000e+00> : vector<16xf32>
    %559 = vector.multi_reduction <add>, %558, %cst_232 [1] : vector<16x32xf32> to vector<16xf32>
    %560 = vector.shape_cast %559 : vector<16xf32> to vector<16x1xf32>
    %cst_233 = arith.constant 0.0322580636 : f32
    %561 = vector.broadcast %cst_233 : f32 to vector<16x1xf32>
    %562 = arith.mulf %560, %561 : vector<16x1xf32>
    %563 = math.sqrt %562 : vector<16x1xf32>
    %cst_234 = arith.constant 9.99999997E-7 : f32
    %564 = vector.broadcast %cst_234 : f32 to vector<16x1xf32>
    %565 = arith.addf %563, %564 : vector<16x1xf32>
    %566 = tpu.reciprocal %565 {approx = true} : vector<16x1xf32> -> vector<16x1xf32>
    %567 = vector.broadcast %555 : vector<16x1xf32> to vector<16x32xf32>
    %568 = arith.subf %547, %567 : vector<16x32xf32>
    %569 = vector.broadcast %549 : vector<1x32xf32> to vector<16x32xf32>
    %570 = arith.mulf %569, %568 : vector<16x32xf32>
    %571 = vector.broadcast %566 : vector<16x1xf32> to vector<16x32xf32>
    %572 = arith.mulf %570, %571 : vector<16x32xf32>
    %573 = vector.broadcast %551 : vector<1x32xf32> to vector<16x32xf32>
    %574 = arith.addf %572, %573 : vector<16x32xf32>
    %575 = arith.truncf %574 : vector<16x32xf32> to vector<16x32xbf16>
    %c0_235 = arith.constant 0 : index
    %c0_236 = arith.constant 0 : index
    %c0_237 = arith.constant 0 : index
    %576 = vector.load %arg11[%c0_235, %c0_236, %c0_237] : memref<2x32x64xbf16, #tpu.memory_space<vmem>>, vector<1x32x64xbf16>
    %577 = vector.shape_cast %576 : vector<1x32x64xbf16> to vector<32x64xbf16>
    %cst_238 = arith.constant dense<0.000000e+00> : vector<16x64xf32>
    %578 = tpu.matmul %575, %577, %cst_238 {dimension_numbers = #tpu.dot_dimension_numbers<[1], [0], [0], [1], [0, 0, 1, 1], [], []>} : vector<16x32xbf16>, vector<32x64xbf16>, vector<16x64xf32> -> vector<16x64xf32>
    %c0_239 = arith.constant 0 : index
    %c0_240 = arith.constant 0 : index
    %c0_241 = arith.constant 0 : index
    %579 = vector.load %arg12[%c0_239, %c0_240, %c0_241] : memref<2x1x64xf32, #tpu.memory_space<vmem>>, vector<1x1x64xf32>
    %580 = vector.shape_cast %579 : vector<1x1x64xf32> to vector<1x64xf32>
    %581 = vector.broadcast %580 : vector<1x64xf32> to vector<16x64xf32>
    %582 = arith.addf %578, %581 : vector<16x64xf32>
    %cst_242 = arith.constant 0.000000e+00 : f32
    %583 = vector.broadcast %cst_242 : f32 to vector<16x64xf32>
    %584 = arith.maximumf %582, %583 : vector<16x64xf32>
    %585 = arith.truncf %584 : vector<16x64xf32> to vector<16x64xbf16>
    %c0_243 = arith.constant 0 : index
    %c0_244 = arith.constant 0 : index
    %c0_245 = arith.constant 0 : index
    %586 = vector.load %arg13[%c0_243, %c0_244, %c0_245] : memref<2x64x32xbf16, #tpu.memory_space<vmem>>, vector<1x64x32xbf16>
    %587 = vector.shape_cast %586 : vector<1x64x32xbf16> to vector<64x32xbf16>
    %cst_246 = arith.constant dense<0.000000e+00> : vector<16x32xf32>
    %588 = tpu.matmul %585, %587, %cst_246 {dimension_numbers = #tpu.dot_dimension_numbers<[1], [0], [0], [1], [0, 0, 1, 1], [], []>} : vector<16x64xbf16>, vector<64x32xbf16>, vector<16x32xf32> -> vector<16x32xf32>
    %589 = arith.addf %547, %588 : vector<16x32xf32>
    %c0_247 = arith.constant 0 : index
    %c0_248 = arith.constant 0 : index
    %c0_249 = arith.constant 0 : index
    %590 = vector.load %arg14[%c0_247, %c0_248, %c0_249] : memref<2x1x32xf32, #tpu.memory_space<vmem>>, vector<1x1x32xf32>
    %591 = vector.shape_cast %590 : vector<1x1x32xf32> to vector<1x32xf32>
    %592 = vector.broadcast %591 : vector<1x32xf32> to vector<16x32xf32>
    %593 = arith.addf %589, %592 : vector<16x32xf32>
    %c1_250 = arith.constant 1 : index
    %c0_251 = arith.constant 0 : index
    %c0_252 = arith.constant 0 : index
    %594 = vector.load %arg9[%c1_250, %c0_251, %c0_252] : memref<2x1x32xf32, #tpu.memory_space<vmem>>, vector<1x1x32xf32>
    %595 = vector.shape_cast %594 : vector<1x1x32xf32> to vector<1x32xf32>
    %c1_253 = arith.constant 1 : index
    %c0_254 = arith.constant 0 : index
    %c0_255 = arith.constant 0 : index
    %596 = vector.load %arg10[%c1_253, %c0_254, %c0_255] : memref<2x1x32xf32, #tpu.memory_space<vmem>>, vector<1x1x32xf32>
    %597 = vector.shape_cast %596 : vector<1x1x32xf32> to vector<1x32xf32>
    %cst_256 = arith.constant dense<0.000000e+00> : vector<16xf32>
    %598 = vector.multi_reduction <add>, %593, %cst_256 [1] : vector<16x32xf32> to vector<16xf32>
    %599 = vector.shape_cast %598 : vector<16xf32> to vector<16x1xf32>
    %cst_257 = arith.constant 3.200000e+01 : f32
    %600 = vector.broadcast %cst_257 : f32 to vector<16x1xf32>
    %601 = arith.divf %599, %600 : vector<16x1xf32>
    %602 = vector.broadcast %601 : vector<16x1xf32> to vector<16x32xf32>
    %603 = arith.subf %593, %602 : vector<16x32xf32>
    %604 = arith.mulf %603, %603 : vector<16x32xf32>
    %cst_258 = arith.constant dense<0.000000e+00> : vector<16xf32>
    %605 = vector.multi_reduction <add>, %604, %cst_258 [1] : vector<16x32xf32> to vector<16xf32>
    %606 = vector.shape_cast %605 : vector<16xf32> to vector<16x1xf32>
    %cst_259 = arith.constant 0.0322580636 : f32
    %607 = vector.broadcast %cst_259 : f32 to vector<16x1xf32>
    %608 = arith.mulf %606, %607 : vector<16x1xf32>
    %609 = math.sqrt %608 : vector<16x1xf32>
    %cst_260 = arith.constant 9.99999997E-7 : f32
    %610 = vector.broadcast %cst_260 : f32 to vector<16x1xf32>
    %611 = arith.addf %609, %610 : vector<16x1xf32>
    %612 = tpu.reciprocal %611 {approx = true} : vector<16x1xf32> -> vector<16x1xf32>
    %613 = vector.broadcast %601 : vector<16x1xf32> to vector<16x32xf32>
    %614 = arith.subf %593, %613 : vector<16x32xf32>
    %615 = vector.broadcast %595 : vector<1x32xf32> to vector<16x32xf32>
    %616 = arith.mulf %615, %614 : vector<16x32xf32>
    %617 = vector.broadcast %612 : vector<16x1xf32> to vector<16x32xf32>
    %618 = arith.mulf %616, %617 : vector<16x32xf32>
    %619 = vector.broadcast %597 : vector<1x32xf32> to vector<16x32xf32>
    %620 = arith.addf %618, %619 : vector<16x32xf32>
    %621 = arith.truncf %620 : vector<16x32xf32> to vector<16x32xbf16>
    %c1_261 = arith.constant 1 : index
    %c0_262 = arith.constant 0 : index
    %c0_263 = arith.constant 0 : index
    %622 = vector.load %arg5[%c1_261, %c0_262, %c0_263] : memref<2x32x96xbf16, #tpu.memory_space<vmem>>, vector<1x32x96xbf16>
    %623 = vector.shape_cast %622 : vector<1x32x96xbf16> to vector<32x96xbf16>
    %cst_264 = arith.constant dense<0.000000e+00> : vector<16x96xf32>
    %624 = tpu.matmul %621, %623, %cst_264 {dimension_numbers = #tpu.dot_dimension_numbers<[1], [0], [0], [1], [0, 0, 1, 1], [], []>} : vector<16x32xbf16>, vector<32x96xbf16>, vector<16x96xf32> -> vector<16x96xf32>
    %c1_265 = arith.constant 1 : index
    %c0_266 = arith.constant 0 : index
    %c0_267 = arith.constant 0 : index
    %625 = vector.load %arg6[%c1_265, %c0_266, %c0_267] : memref<2x1x96xf32, #tpu.memory_space<vmem>>, vector<1x1x96xf32>
    %626 = vector.shape_cast %625 : vector<1x1x96xf32> to vector<1x96xf32>
    %627 = vector.broadcast %626 : vector<1x96xf32> to vector<16x96xf32>
    %628 = arith.addf %624, %627 : vector<16x96xf32>
    %629 = vector.extract_strided_slice %628 {offsets = [0, 0], sizes = [8, 8], strides = [1, 1]} : vector<16x96xf32> to vector<8x8xf32>
    %630 = vector.extract_strided_slice %628 {offsets = [0, 32], sizes = [8, 8], strides = [1, 1]} : vector<16x96xf32> to vector<8x8xf32>
    %631 = vector.extract_strided_slice %628 {offsets = [0, 64], sizes = [8, 8], strides = [1, 1]} : vector<16x96xf32> to vector<8x8xf32>
    %cst_268 = arith.constant dense<0.000000e+00> : vector<8x8xf32>
    %632 = tpu.matmul %629, %630, %cst_268 {dimension_numbers = #tpu.dot_dimension_numbers<[1], [1], [0], [0], [0, 0, 1, 0], [], []>} : vector<8x8xf32>, vector<8x8xf32>, vector<8x8xf32> -> vector<8x8xf32>
    %cst_269 = arith.constant 0.353553385 : f32
    %633 = vector.broadcast %cst_269 : f32 to vector<8x8xf32>
    %634 = arith.mulf %632, %633 : vector<8x8xf32>
    %635 = vector.broadcast %249 : vector<1x8xf32> to vector<8x8xf32>
    %636 = arith.addf %634, %635 : vector<8x8xf32>
    %cst_270 = arith.constant dense<0xFF800000> : vector<8xf32>
    %637 = vector.multi_reduction <maximumf>, %636, %cst_270 [1] : vector<8x8xf32> to vector<8xf32>
    %638 = vector.shape_cast %637 : vector<8xf32> to vector<8x1xf32>
    %639 = vector.broadcast %638 : vector<8x1xf32> to vector<8x8xf32>
    %640 = arith.subf %636, %639 : vector<8x8xf32>
    %641 = math.exp %640 : vector<8x8xf32>
    %cst_271 = arith.constant dense<0.000000e+00> : vector<8xf32>
    %642 = vector.multi_reduction <add>, %641, %cst_271 [1] : vector<8x8xf32> to vector<8xf32>
    %643 = vector.shape_cast %642 : vector<8xf32> to vector<8x1xf32>
    %644 = tpu.reciprocal %643 {approx = true} : vector<8x1xf32> -> vector<8x1xf32>
    %645 = vector.broadcast %644 : vector<8x1xf32> to vector<8x8xf32>
    %646 = arith.mulf %641, %645 : vector<8x8xf32>
    %647 = arith.truncf %646 : vector<8x8xf32> to vector<8x8xbf16>
    %648 = arith.truncf %631 : vector<8x8xf32> to vector<8x8xbf16>
    %cst_272 = arith.constant dense<0.000000e+00> : vector<8x8xf32>
    %649 = tpu.matmul %647, %648, %cst_272 {dimension_numbers = #tpu.dot_dimension_numbers<[1], [0], [0], [1], [0, 0, 1, 1], [], []>} : vector<8x8xbf16>, vector<8x8xbf16>, vector<8x8xf32> -> vector<8x8xf32>
    %650 = vector.extract_strided_slice %628 {offsets = [8, 0], sizes = [8, 8], strides = [1, 1]} : vector<16x96xf32> to vector<8x8xf32>
    %651 = vector.extract_strided_slice %628 {offsets = [8, 32], sizes = [8, 8], strides = [1, 1]} : vector<16x96xf32> to vector<8x8xf32>
    %652 = vector.extract_strided_slice %628 {offsets = [8, 64], sizes = [8, 8], strides = [1, 1]} : vector<16x96xf32> to vector<8x8xf32>
    %cst_273 = arith.constant dense<0.000000e+00> : vector<8x8xf32>
    %653 = tpu.matmul %650, %651, %cst_273 {dimension_numbers = #tpu.dot_dimension_numbers<[1], [1], [0], [0], [0, 0, 1, 0], [], []>} : vector<8x8xf32>, vector<8x8xf32>, vector<8x8xf32> -> vector<8x8xf32>
    %cst_274 = arith.constant 0.353553385 : f32
    %654 = vector.broadcast %cst_274 : f32 to vector<8x8xf32>
    %655 = arith.mulf %653, %654 : vector<8x8xf32>
    %656 = vector.broadcast %330 : vector<1x8xf32> to vector<8x8xf32>
    %657 = arith.addf %655, %656 : vector<8x8xf32>
    %cst_275 = arith.constant dense<0xFF800000> : vector<8xf32>
    %658 = vector.multi_reduction <maximumf>, %657, %cst_275 [1] : vector<8x8xf32> to vector<8xf32>
    %659 = vector.shape_cast %658 : vector<8xf32> to vector<8x1xf32>
    %660 = vector.broadcast %659 : vector<8x1xf32> to vector<8x8xf32>
    %661 = arith.subf %657, %660 : vector<8x8xf32>
    %662 = math.exp %661 : vector<8x8xf32>
    %cst_276 = arith.constant dense<0.000000e+00> : vector<8xf32>
    %663 = vector.multi_reduction <add>, %662, %cst_276 [1] : vector<8x8xf32> to vector<8xf32>
    %664 = vector.shape_cast %663 : vector<8xf32> to vector<8x1xf32>
    %665 = tpu.reciprocal %664 {approx = true} : vector<8x1xf32> -> vector<8x1xf32>
    %666 = vector.broadcast %665 : vector<8x1xf32> to vector<8x8xf32>
    %667 = arith.mulf %662, %666 : vector<8x8xf32>
    %668 = arith.truncf %667 : vector<8x8xf32> to vector<8x8xbf16>
    %669 = arith.truncf %652 : vector<8x8xf32> to vector<8x8xbf16>
    %cst_277 = arith.constant dense<0.000000e+00> : vector<8x8xf32>
    %670 = tpu.matmul %668, %669, %cst_277 {dimension_numbers = #tpu.dot_dimension_numbers<[1], [0], [0], [1], [0, 0, 1, 1], [], []>} : vector<8x8xbf16>, vector<8x8xbf16>, vector<8x8xf32> -> vector<8x8xf32>
    %671 = tpu.concatenate %649, %670 in 0 : vector<8x8xf32>, vector<8x8xf32> -> vector<16x8xf32>
    %672 = vector.extract_strided_slice %628 {offsets = [0, 8], sizes = [8, 8], strides = [1, 1]} : vector<16x96xf32> to vector<8x8xf32>
    %673 = vector.extract_strided_slice %628 {offsets = [0, 40], sizes = [8, 8], strides = [1, 1]} : vector<16x96xf32> to vector<8x8xf32>
    %674 = vector.extract_strided_slice %628 {offsets = [0, 72], sizes = [8, 8], strides = [1, 1]} : vector<16x96xf32> to vector<8x8xf32>
    %cst_278 = arith.constant dense<0.000000e+00> : vector<8x8xf32>
    %675 = tpu.matmul %672, %673, %cst_278 {dimension_numbers = #tpu.dot_dimension_numbers<[1], [1], [0], [0], [0, 0, 1, 0], [], []>} : vector<8x8xf32>, vector<8x8xf32>, vector<8x8xf32> -> vector<8x8xf32>
    %cst_279 = arith.constant 0.353553385 : f32
    %676 = vector.broadcast %cst_279 : f32 to vector<8x8xf32>
    %677 = arith.mulf %675, %676 : vector<8x8xf32>
    %678 = vector.broadcast %249 : vector<1x8xf32> to vector<8x8xf32>
    %679 = arith.addf %677, %678 : vector<8x8xf32>
    %cst_280 = arith.constant dense<0xFF800000> : vector<8xf32>
    %680 = vector.multi_reduction <maximumf>, %679, %cst_280 [1] : vector<8x8xf32> to vector<8xf32>
    %681 = vector.shape_cast %680 : vector<8xf32> to vector<8x1xf32>
    %682 = vector.broadcast %681 : vector<8x1xf32> to vector<8x8xf32>
    %683 = arith.subf %679, %682 : vector<8x8xf32>
    %684 = math.exp %683 : vector<8x8xf32>
    %cst_281 = arith.constant dense<0.000000e+00> : vector<8xf32>
    %685 = vector.multi_reduction <add>, %684, %cst_281 [1] : vector<8x8xf32> to vector<8xf32>
    %686 = vector.shape_cast %685 : vector<8xf32> to vector<8x1xf32>
    %687 = tpu.reciprocal %686 {approx = true} : vector<8x1xf32> -> vector<8x1xf32>
    %688 = vector.broadcast %687 : vector<8x1xf32> to vector<8x8xf32>
    %689 = arith.mulf %684, %688 : vector<8x8xf32>
    %690 = arith.truncf %689 : vector<8x8xf32> to vector<8x8xbf16>
    %691 = arith.truncf %674 : vector<8x8xf32> to vector<8x8xbf16>
    %cst_282 = arith.constant dense<0.000000e+00> : vector<8x8xf32>
    %692 = tpu.matmul %690, %691, %cst_282 {dimension_numbers = #tpu.dot_dimension_numbers<[1], [0], [0], [1], [0, 0, 1, 1], [], []>} : vector<8x8xbf16>, vector<8x8xbf16>, vector<8x8xf32> -> vector<8x8xf32>
    %693 = vector.extract_strided_slice %628 {offsets = [8, 8], sizes = [8, 8], strides = [1, 1]} : vector<16x96xf32> to vector<8x8xf32>
    %694 = vector.extract_strided_slice %628 {offsets = [8, 40], sizes = [8, 8], strides = [1, 1]} : vector<16x96xf32> to vector<8x8xf32>
    %695 = vector.extract_strided_slice %628 {offsets = [8, 72], sizes = [8, 8], strides = [1, 1]} : vector<16x96xf32> to vector<8x8xf32>
    %cst_283 = arith.constant dense<0.000000e+00> : vector<8x8xf32>
    %696 = tpu.matmul %693, %694, %cst_283 {dimension_numbers = #tpu.dot_dimension_numbers<[1], [1], [0], [0], [0, 0, 1, 0], [], []>} : vector<8x8xf32>, vector<8x8xf32>, vector<8x8xf32> -> vector<8x8xf32>
    %cst_284 = arith.constant 0.353553385 : f32
    %697 = vector.broadcast %cst_284 : f32 to vector<8x8xf32>
    %698 = arith.mulf %696, %697 : vector<8x8xf32>
    %699 = vector.broadcast %330 : vector<1x8xf32> to vector<8x8xf32>
    %700 = arith.addf %698, %699 : vector<8x8xf32>
    %cst_285 = arith.constant dense<0xFF800000> : vector<8xf32>
    %701 = vector.multi_reduction <maximumf>, %700, %cst_285 [1] : vector<8x8xf32> to vector<8xf32>
    %702 = vector.shape_cast %701 : vector<8xf32> to vector<8x1xf32>
    %703 = vector.broadcast %702 : vector<8x1xf32> to vector<8x8xf32>
    %704 = arith.subf %700, %703 : vector<8x8xf32>
    %705 = math.exp %704 : vector<8x8xf32>
    %cst_286 = arith.constant dense<0.000000e+00> : vector<8xf32>
    %706 = vector.multi_reduction <add>, %705, %cst_286 [1] : vector<8x8xf32> to vector<8xf32>
    %707 = vector.shape_cast %706 : vector<8xf32> to vector<8x1xf32>
    %708 = tpu.reciprocal %707 {approx = true} : vector<8x1xf32> -> vector<8x1xf32>
    %709 = vector.broadcast %708 : vector<8x1xf32> to vector<8x8xf32>
    %710 = arith.mulf %705, %709 : vector<8x8xf32>
    %711 = arith.truncf %710 : vector<8x8xf32> to vector<8x8xbf16>
    %712 = arith.truncf %695 : vector<8x8xf32> to vector<8x8xbf16>
    %cst_287 = arith.constant dense<0.000000e+00> : vector<8x8xf32>
    %713 = tpu.matmul %711, %712, %cst_287 {dimension_numbers = #tpu.dot_dimension_numbers<[1], [0], [0], [1], [0, 0, 1, 1], [], []>} : vector<8x8xbf16>, vector<8x8xbf16>, vector<8x8xf32> -> vector<8x8xf32>
    %714 = tpu.concatenate %692, %713 in 0 : vector<8x8xf32>, vector<8x8xf32> -> vector<16x8xf32>
    %715 = vector.extract_strided_slice %628 {offsets = [0, 16], sizes = [8, 8], strides = [1, 1]} : vector<16x96xf32> to vector<8x8xf32>
    %716 = vector.extract_strided_slice %628 {offsets = [0, 48], sizes = [8, 8], strides = [1, 1]} : vector<16x96xf32> to vector<8x8xf32>
    %717 = vector.extract_strided_slice %628 {offsets = [0, 80], sizes = [8, 8], strides = [1, 1]} : vector<16x96xf32> to vector<8x8xf32>
    %cst_288 = arith.constant dense<0.000000e+00> : vector<8x8xf32>
    %718 = tpu.matmul %715, %716, %cst_288 {dimension_numbers = #tpu.dot_dimension_numbers<[1], [1], [0], [0], [0, 0, 1, 0], [], []>} : vector<8x8xf32>, vector<8x8xf32>, vector<8x8xf32> -> vector<8x8xf32>
    %cst_289 = arith.constant 0.353553385 : f32
    %719 = vector.broadcast %cst_289 : f32 to vector<8x8xf32>
    %720 = arith.mulf %718, %719 : vector<8x8xf32>
    %721 = vector.broadcast %249 : vector<1x8xf32> to vector<8x8xf32>
    %722 = arith.addf %720, %721 : vector<8x8xf32>
    %cst_290 = arith.constant dense<0xFF800000> : vector<8xf32>
    %723 = vector.multi_reduction <maximumf>, %722, %cst_290 [1] : vector<8x8xf32> to vector<8xf32>
    %724 = vector.shape_cast %723 : vector<8xf32> to vector<8x1xf32>
    %725 = vector.broadcast %724 : vector<8x1xf32> to vector<8x8xf32>
    %726 = arith.subf %722, %725 : vector<8x8xf32>
    %727 = math.exp %726 : vector<8x8xf32>
    %cst_291 = arith.constant dense<0.000000e+00> : vector<8xf32>
    %728 = vector.multi_reduction <add>, %727, %cst_291 [1] : vector<8x8xf32> to vector<8xf32>
    %729 = vector.shape_cast %728 : vector<8xf32> to vector<8x1xf32>
    %730 = tpu.reciprocal %729 {approx = true} : vector<8x1xf32> -> vector<8x1xf32>
    %731 = vector.broadcast %730 : vector<8x1xf32> to vector<8x8xf32>
    %732 = arith.mulf %727, %731 : vector<8x8xf32>
    %733 = arith.truncf %732 : vector<8x8xf32> to vector<8x8xbf16>
    %734 = arith.truncf %717 : vector<8x8xf32> to vector<8x8xbf16>
    %cst_292 = arith.constant dense<0.000000e+00> : vector<8x8xf32>
    %735 = tpu.matmul %733, %734, %cst_292 {dimension_numbers = #tpu.dot_dimension_numbers<[1], [0], [0], [1], [0, 0, 1, 1], [], []>} : vector<8x8xbf16>, vector<8x8xbf16>, vector<8x8xf32> -> vector<8x8xf32>
    %736 = vector.extract_strided_slice %628 {offsets = [8, 16], sizes = [8, 8], strides = [1, 1]} : vector<16x96xf32> to vector<8x8xf32>
    %737 = vector.extract_strided_slice %628 {offsets = [8, 48], sizes = [8, 8], strides = [1, 1]} : vector<16x96xf32> to vector<8x8xf32>
    %738 = vector.extract_strided_slice %628 {offsets = [8, 80], sizes = [8, 8], strides = [1, 1]} : vector<16x96xf32> to vector<8x8xf32>
    %cst_293 = arith.constant dense<0.000000e+00> : vector<8x8xf32>
    %739 = tpu.matmul %736, %737, %cst_293 {dimension_numbers = #tpu.dot_dimension_numbers<[1], [1], [0], [0], [0, 0, 1, 0], [], []>} : vector<8x8xf32>, vector<8x8xf32>, vector<8x8xf32> -> vector<8x8xf32>
    %cst_294 = arith.constant 0.353553385 : f32
    %740 = vector.broadcast %cst_294 : f32 to vector<8x8xf32>
    %741 = arith.mulf %739, %740 : vector<8x8xf32>
    %742 = vector.broadcast %330 : vector<1x8xf32> to vector<8x8xf32>
    %743 = arith.addf %741, %742 : vector<8x8xf32>
    %cst_295 = arith.constant dense<0xFF800000> : vector<8xf32>
    %744 = vector.multi_reduction <maximumf>, %743, %cst_295 [1] : vector<8x8xf32> to vector<8xf32>
    %745 = vector.shape_cast %744 : vector<8xf32> to vector<8x1xf32>
    %746 = vector.broadcast %745 : vector<8x1xf32> to vector<8x8xf32>
    %747 = arith.subf %743, %746 : vector<8x8xf32>
    %748 = math.exp %747 : vector<8x8xf32>
    %cst_296 = arith.constant dense<0.000000e+00> : vector<8xf32>
    %749 = vector.multi_reduction <add>, %748, %cst_296 [1] : vector<8x8xf32> to vector<8xf32>
    %750 = vector.shape_cast %749 : vector<8xf32> to vector<8x1xf32>
    %751 = tpu.reciprocal %750 {approx = true} : vector<8x1xf32> -> vector<8x1xf32>
    %752 = vector.broadcast %751 : vector<8x1xf32> to vector<8x8xf32>
    %753 = arith.mulf %748, %752 : vector<8x8xf32>
    %754 = arith.truncf %753 : vector<8x8xf32> to vector<8x8xbf16>
    %755 = arith.truncf %738 : vector<8x8xf32> to vector<8x8xbf16>
    %cst_297 = arith.constant dense<0.000000e+00> : vector<8x8xf32>
    %756 = tpu.matmul %754, %755, %cst_297 {dimension_numbers = #tpu.dot_dimension_numbers<[1], [0], [0], [1], [0, 0, 1, 1], [], []>} : vector<8x8xbf16>, vector<8x8xbf16>, vector<8x8xf32> -> vector<8x8xf32>
    %757 = tpu.concatenate %735, %756 in 0 : vector<8x8xf32>, vector<8x8xf32> -> vector<16x8xf32>
    %758 = vector.extract_strided_slice %628 {offsets = [0, 24], sizes = [8, 8], strides = [1, 1]} : vector<16x96xf32> to vector<8x8xf32>
    %759 = vector.extract_strided_slice %628 {offsets = [0, 56], sizes = [8, 8], strides = [1, 1]} : vector<16x96xf32> to vector<8x8xf32>
    %760 = vector.extract_strided_slice %628 {offsets = [0, 88], sizes = [8, 8], strides = [1, 1]} : vector<16x96xf32> to vector<8x8xf32>
    %cst_298 = arith.constant dense<0.000000e+00> : vector<8x8xf32>
    %761 = tpu.matmul %758, %759, %cst_298 {dimension_numbers = #tpu.dot_dimension_numbers<[1], [1], [0], [0], [0, 0, 1, 0], [], []>} : vector<8x8xf32>, vector<8x8xf32>, vector<8x8xf32> -> vector<8x8xf32>
    %cst_299 = arith.constant 0.353553385 : f32
    %762 = vector.broadcast %cst_299 : f32 to vector<8x8xf32>
    %763 = arith.mulf %761, %762 : vector<8x8xf32>
    %764 = vector.broadcast %249 : vector<1x8xf32> to vector<8x8xf32>
    %765 = arith.addf %763, %764 : vector<8x8xf32>
    %cst_300 = arith.constant dense<0xFF800000> : vector<8xf32>
    %766 = vector.multi_reduction <maximumf>, %765, %cst_300 [1] : vector<8x8xf32> to vector<8xf32>
    %767 = vector.shape_cast %766 : vector<8xf32> to vector<8x1xf32>
    %768 = vector.broadcast %767 : vector<8x1xf32> to vector<8x8xf32>
    %769 = arith.subf %765, %768 : vector<8x8xf32>
    %770 = math.exp %769 : vector<8x8xf32>
    %cst_301 = arith.constant dense<0.000000e+00> : vector<8xf32>
    %771 = vector.multi_reduction <add>, %770, %cst_301 [1] : vector<8x8xf32> to vector<8xf32>
    %772 = vector.shape_cast %771 : vector<8xf32> to vector<8x1xf32>
    %773 = tpu.reciprocal %772 {approx = true} : vector<8x1xf32> -> vector<8x1xf32>
    %774 = vector.broadcast %773 : vector<8x1xf32> to vector<8x8xf32>
    %775 = arith.mulf %770, %774 : vector<8x8xf32>
    %776 = arith.truncf %775 : vector<8x8xf32> to vector<8x8xbf16>
    %777 = arith.truncf %760 : vector<8x8xf32> to vector<8x8xbf16>
    %cst_302 = arith.constant dense<0.000000e+00> : vector<8x8xf32>
    %778 = tpu.matmul %776, %777, %cst_302 {dimension_numbers = #tpu.dot_dimension_numbers<[1], [0], [0], [1], [0, 0, 1, 1], [], []>} : vector<8x8xbf16>, vector<8x8xbf16>, vector<8x8xf32> -> vector<8x8xf32>
    %779 = vector.extract_strided_slice %628 {offsets = [8, 24], sizes = [8, 8], strides = [1, 1]} : vector<16x96xf32> to vector<8x8xf32>
    %780 = vector.extract_strided_slice %628 {offsets = [8, 56], sizes = [8, 8], strides = [1, 1]} : vector<16x96xf32> to vector<8x8xf32>
    %781 = vector.extract_strided_slice %628 {offsets = [8, 88], sizes = [8, 8], strides = [1, 1]} : vector<16x96xf32> to vector<8x8xf32>
    %cst_303 = arith.constant dense<0.000000e+00> : vector<8x8xf32>
    %782 = tpu.matmul %779, %780, %cst_303 {dimension_numbers = #tpu.dot_dimension_numbers<[1], [1], [0], [0], [0, 0, 1, 0], [], []>} : vector<8x8xf32>, vector<8x8xf32>, vector<8x8xf32> -> vector<8x8xf32>
    %cst_304 = arith.constant 0.353553385 : f32
    %783 = vector.broadcast %cst_304 : f32 to vector<8x8xf32>
    %784 = arith.mulf %782, %783 : vector<8x8xf32>
    %785 = vector.broadcast %330 : vector<1x8xf32> to vector<8x8xf32>
    %786 = arith.addf %784, %785 : vector<8x8xf32>
    %cst_305 = arith.constant dense<0xFF800000> : vector<8xf32>
    %787 = vector.multi_reduction <maximumf>, %786, %cst_305 [1] : vector<8x8xf32> to vector<8xf32>
    %788 = vector.shape_cast %787 : vector<8xf32> to vector<8x1xf32>
    %789 = vector.broadcast %788 : vector<8x1xf32> to vector<8x8xf32>
    %790 = arith.subf %786, %789 : vector<8x8xf32>
    %791 = math.exp %790 : vector<8x8xf32>
    %cst_306 = arith.constant dense<0.000000e+00> : vector<8xf32>
    %792 = vector.multi_reduction <add>, %791, %cst_306 [1] : vector<8x8xf32> to vector<8xf32>
    %793 = vector.shape_cast %792 : vector<8xf32> to vector<8x1xf32>
    %794 = tpu.reciprocal %793 {approx = true} : vector<8x1xf32> -> vector<8x1xf32>
    %795 = vector.broadcast %794 : vector<8x1xf32> to vector<8x8xf32>
    %796 = arith.mulf %791, %795 : vector<8x8xf32>
    %797 = arith.truncf %796 : vector<8x8xf32> to vector<8x8xbf16>
    %798 = arith.truncf %781 : vector<8x8xf32> to vector<8x8xbf16>
    %cst_307 = arith.constant dense<0.000000e+00> : vector<8x8xf32>
    %799 = tpu.matmul %797, %798, %cst_307 {dimension_numbers = #tpu.dot_dimension_numbers<[1], [0], [0], [1], [0, 0, 1, 1], [], []>} : vector<8x8xbf16>, vector<8x8xbf16>, vector<8x8xf32> -> vector<8x8xf32>
    %800 = tpu.concatenate %778, %799 in 0 : vector<8x8xf32>, vector<8x8xf32> -> vector<16x8xf32>
    %801 = tpu.concatenate %671, %714, %757, %800 in 1 : vector<16x8xf32>, vector<16x8xf32>, vector<16x8xf32>, vector<16x8xf32> -> vector<16x32xf32>
    %802 = arith.truncf %801 : vector<16x32xf32> to vector<16x32xbf16>
    %c1_308 = arith.constant 1 : index
    %c0_309 = arith.constant 0 : index
    %c0_310 = arith.constant 0 : index
    %803 = vector.load %arg7[%c1_308, %c0_309, %c0_310] : memref<2x32x32xbf16, #tpu.memory_space<vmem>>, vector<1x32x32xbf16>
    %804 = vector.shape_cast %803 : vector<1x32x32xbf16> to vector<32x32xbf16>
    %cst_311 = arith.constant dense<0.000000e+00> : vector<16x32xf32>
    %805 = tpu.matmul %802, %804, %cst_311 {dimension_numbers = #tpu.dot_dimension_numbers<[1], [0], [0], [1], [0, 0, 1, 1], [], []>} : vector<16x32xbf16>, vector<32x32xbf16>, vector<16x32xf32> -> vector<16x32xf32>
    %c1_312 = arith.constant 1 : index
    %c0_313 = arith.constant 0 : index
    %c0_314 = arith.constant 0 : index
    %806 = vector.load %arg8[%c1_312, %c0_313, %c0_314] : memref<2x1x32xf32, #tpu.memory_space<vmem>>, vector<1x1x32xf32>
    %807 = vector.shape_cast %806 : vector<1x1x32xf32> to vector<1x32xf32>
    %808 = vector.broadcast %807 : vector<1x32xf32> to vector<16x32xf32>
    %809 = arith.addf %805, %808 : vector<16x32xf32>
    %810 = arith.addf %593, %809 : vector<16x32xf32>
    %c1_315 = arith.constant 1 : index
    %c0_316 = arith.constant 0 : index
    %c0_317 = arith.constant 0 : index
    %811 = vector.load %arg15[%c1_315, %c0_316, %c0_317] : memref<2x1x32xf32, #tpu.memory_space<vmem>>, vector<1x1x32xf32>
    %812 = vector.shape_cast %811 : vector<1x1x32xf32> to vector<1x32xf32>
    %c1_318 = arith.constant 1 : index
    %c0_319 = arith.constant 0 : index
    %c0_320 = arith.constant 0 : index
    %813 = vector.load %arg16[%c1_318, %c0_319, %c0_320] : memref<2x1x32xf32, #tpu.memory_space<vmem>>, vector<1x1x32xf32>
    %814 = vector.shape_cast %813 : vector<1x1x32xf32> to vector<1x32xf32>
    %cst_321 = arith.constant dense<0.000000e+00> : vector<16xf32>
    %815 = vector.multi_reduction <add>, %810, %cst_321 [1] : vector<16x32xf32> to vector<16xf32>
    %816 = vector.shape_cast %815 : vector<16xf32> to vector<16x1xf32>
    %cst_322 = arith.constant 3.200000e+01 : f32
    %817 = vector.broadcast %cst_322 : f32 to vector<16x1xf32>
    %818 = arith.divf %816, %817 : vector<16x1xf32>
    %819 = vector.broadcast %818 : vector<16x1xf32> to vector<16x32xf32>
    %820 = arith.subf %810, %819 : vector<16x32xf32>
    %821 = arith.mulf %820, %820 : vector<16x32xf32>
    %cst_323 = arith.constant dense<0.000000e+00> : vector<16xf32>
    %822 = vector.multi_reduction <add>, %821, %cst_323 [1] : vector<16x32xf32> to vector<16xf32>
    %823 = vector.shape_cast %822 : vector<16xf32> to vector<16x1xf32>
    %cst_324 = arith.constant 0.0322580636 : f32
    %824 = vector.broadcast %cst_324 : f32 to vector<16x1xf32>
    %825 = arith.mulf %823, %824 : vector<16x1xf32>
    %826 = math.sqrt %825 : vector<16x1xf32>
    %cst_325 = arith.constant 9.99999997E-7 : f32
    %827 = vector.broadcast %cst_325 : f32 to vector<16x1xf32>
    %828 = arith.addf %826, %827 : vector<16x1xf32>
    %829 = tpu.reciprocal %828 {approx = true} : vector<16x1xf32> -> vector<16x1xf32>
    %830 = vector.broadcast %818 : vector<16x1xf32> to vector<16x32xf32>
    %831 = arith.subf %810, %830 : vector<16x32xf32>
    %832 = vector.broadcast %812 : vector<1x32xf32> to vector<16x32xf32>
    %833 = arith.mulf %832, %831 : vector<16x32xf32>
    %834 = vector.broadcast %829 : vector<16x1xf32> to vector<16x32xf32>
    %835 = arith.mulf %833, %834 : vector<16x32xf32>
    %836 = vector.broadcast %814 : vector<1x32xf32> to vector<16x32xf32>
    %837 = arith.addf %835, %836 : vector<16x32xf32>
    %838 = arith.truncf %837 : vector<16x32xf32> to vector<16x32xbf16>
    %c1_326 = arith.constant 1 : index
    %c0_327 = arith.constant 0 : index
    %c0_328 = arith.constant 0 : index
    %839 = vector.load %arg11[%c1_326, %c0_327, %c0_328] : memref<2x32x64xbf16, #tpu.memory_space<vmem>>, vector<1x32x64xbf16>
    %840 = vector.shape_cast %839 : vector<1x32x64xbf16> to vector<32x64xbf16>
    %cst_329 = arith.constant dense<0.000000e+00> : vector<16x64xf32>
    %841 = tpu.matmul %838, %840, %cst_329 {dimension_numbers = #tpu.dot_dimension_numbers<[1], [0], [0], [1], [0, 0, 1, 1], [], []>} : vector<16x32xbf16>, vector<32x64xbf16>, vector<16x64xf32> -> vector<16x64xf32>
    %c1_330 = arith.constant 1 : index
    %c0_331 = arith.constant 0 : index
    %c0_332 = arith.constant 0 : index
    %842 = vector.load %arg12[%c1_330, %c0_331, %c0_332] : memref<2x1x64xf32, #tpu.memory_space<vmem>>, vector<1x1x64xf32>
    %843 = vector.shape_cast %842 : vector<1x1x64xf32> to vector<1x64xf32>
    %844 = vector.broadcast %843 : vector<1x64xf32> to vector<16x64xf32>
    %845 = arith.addf %841, %844 : vector<16x64xf32>
    %cst_333 = arith.constant 0.000000e+00 : f32
    %846 = vector.broadcast %cst_333 : f32 to vector<16x64xf32>
    %847 = arith.maximumf %845, %846 : vector<16x64xf32>
    %848 = arith.truncf %847 : vector<16x64xf32> to vector<16x64xbf16>
    %c1_334 = arith.constant 1 : index
    %c0_335 = arith.constant 0 : index
    %c0_336 = arith.constant 0 : index
    %849 = vector.load %arg13[%c1_334, %c0_335, %c0_336] : memref<2x64x32xbf16, #tpu.memory_space<vmem>>, vector<1x64x32xbf16>
    %850 = vector.shape_cast %849 : vector<1x64x32xbf16> to vector<64x32xbf16>
    %cst_337 = arith.constant dense<0.000000e+00> : vector<16x32xf32>
    %851 = tpu.matmul %848, %850, %cst_337 {dimension_numbers = #tpu.dot_dimension_numbers<[1], [0], [0], [1], [0, 0, 1, 1], [], []>} : vector<16x64xbf16>, vector<64x32xbf16>, vector<16x32xf32> -> vector<16x32xf32>
    %852 = arith.addf %810, %851 : vector<16x32xf32>
    %c1_338 = arith.constant 1 : index
    %c0_339 = arith.constant 0 : index
    %c0_340 = arith.constant 0 : index
    %853 = vector.load %arg14[%c1_338, %c0_339, %c0_340] : memref<2x1x32xf32, #tpu.memory_space<vmem>>, vector<1x1x32xf32>
    %854 = vector.shape_cast %853 : vector<1x1x32xf32> to vector<1x32xf32>
    %855 = vector.broadcast %854 : vector<1x32xf32> to vector<16x32xf32>
    %856 = arith.addf %852, %855 : vector<16x32xf32>
    %c0_341 = arith.constant 0 : index
    %c0_342 = arith.constant 0 : index
    %857 = vector.load %arg17[%c0_341, %c0_342] : memref<1x32xf32, #tpu.memory_space<vmem>>, vector<1x32xf32>
    %c0_343 = arith.constant 0 : index
    %c0_344 = arith.constant 0 : index
    %858 = vector.load %arg18[%c0_343, %c0_344] : memref<1x32xf32, #tpu.memory_space<vmem>>, vector<1x32xf32>
    %cst_345 = arith.constant dense<0.000000e+00> : vector<16xf32>
    %859 = vector.multi_reduction <add>, %856, %cst_345 [1] : vector<16x32xf32> to vector<16xf32>
    %860 = vector.shape_cast %859 : vector<16xf32> to vector<16x1xf32>
    %cst_346 = arith.constant 3.200000e+01 : f32
    %861 = vector.broadcast %cst_346 : f32 to vector<16x1xf32>
    %862 = arith.divf %860, %861 : vector<16x1xf32>
    %863 = vector.broadcast %862 : vector<16x1xf32> to vector<16x32xf32>
    %864 = arith.subf %856, %863 : vector<16x32xf32>
    %865 = arith.mulf %864, %864 : vector<16x32xf32>
    %cst_347 = arith.constant dense<0.000000e+00> : vector<16xf32>
    %866 = vector.multi_reduction <add>, %865, %cst_347 [1] : vector<16x32xf32> to vector<16xf32>
    %867 = vector.shape_cast %866 : vector<16xf32> to vector<16x1xf32>
    %cst_348 = arith.constant 0.0322580636 : f32
    %868 = vector.broadcast %cst_348 : f32 to vector<16x1xf32>
    %869 = arith.mulf %867, %868 : vector<16x1xf32>
    %870 = math.sqrt %869 : vector<16x1xf32>
    %cst_349 = arith.constant 9.99999997E-7 : f32
    %871 = vector.broadcast %cst_349 : f32 to vector<16x1xf32>
    %872 = arith.addf %870, %871 : vector<16x1xf32>
    %873 = tpu.reciprocal %872 {approx = true} : vector<16x1xf32> -> vector<16x1xf32>
    %874 = vector.broadcast %862 : vector<16x1xf32> to vector<16x32xf32>
    %875 = arith.subf %856, %874 : vector<16x32xf32>
    %876 = vector.broadcast %857 : vector<1x32xf32> to vector<16x32xf32>
    %877 = arith.mulf %876, %875 : vector<16x32xf32>
    %878 = vector.broadcast %873 : vector<16x1xf32> to vector<16x32xf32>
    %879 = arith.mulf %877, %878 : vector<16x32xf32>
    %880 = vector.broadcast %858 : vector<1x32xf32> to vector<16x32xf32>
    %881 = arith.addf %879, %880 : vector<16x32xf32>
    %882 = vector.extract_strided_slice %881 {offsets = [0, 0], sizes = [8, 32], strides = [1, 1]} : vector<16x32xf32> to vector<8x32xf32>
    %c0_350 = arith.constant 0 : index
    %c0_351 = arith.constant 0 : index
    %c0_352 = arith.constant 0 : index
    %883 = vector.load %arg19[%c0_350, %c0_351, %c0_352] : memref<2x8x32xf32, #tpu.memory_space<vmem>>, vector<1x8x32xf32>
    %884 = vector.shape_cast %883 : vector<1x8x32xf32> to vector<8x32xf32>
    %885 = vector.shape_cast %882 : vector<8x32xf32> to vector<1x8x32xf32>
    tpu.vector_store %arg19[%c0_350, %c0_351, %c0_352], %885 {strides = array<i32>} : memref<2x8x32xf32, #tpu.memory_space<vmem>>, vector<1x8x32xf32>,
    %886 = vector.extract_strided_slice %881 {offsets = [8, 0], sizes = [8, 32], strides = [1, 1]} : vector<16x32xf32> to vector<8x32xf32>
    %c1_353 = arith.constant 1 : index
    %c0_354 = arith.constant 0 : index
    %c0_355 = arith.constant 0 : index
    %887 = vector.load %arg19[%c1_353, %c0_354, %c0_355] : memref<2x8x32xf32, #tpu.memory_space<vmem>>, vector<1x8x32xf32>
    %888 = vector.shape_cast %887 : vector<1x8x32xf32> to vector<8x32xf32>
    %889 = vector.shape_cast %886 : vector<8x32xf32> to vector<1x8x32xf32>
    tpu.vector_store %arg19[%c1_353, %c0_354, %c0_355], %889 {strides = array<i32>} : memref<2x8x32xf32, #tpu.memory_space<vmem>>, vector<1x8x32xf32>,
    return
  }
  func.func @transform_0(%arg0: i32, %arg1: memref<2x8xi32, #tpu.memory_space<smem>>, %arg2: memref<2x8xi32, #tpu.memory_space<smem>>) -> (i32, i32) {
    %c0_i32 = arith.constant 0 : i32
    %c0_i32_0 = arith.constant 0 : i32
    %c0_i32_1 = arith.constant 0 : i32
    return %c0_i32, %c0_i32_0 : i32, i32
  }
  func.func @transform_1(%arg0: i32, %arg1: memref<2x8xi32, #tpu.memory_space<smem>>, %arg2: memref<2x8xi32, #tpu.memory_space<smem>>) -> (i32, i32) {
    %c0_i32 = arith.constant 0 : i32
    %c0_i32_0 = arith.constant 0 : i32
    %c0_i32_1 = arith.constant 0 : i32
    return %c0_i32, %c0_i32_0 : i32, i32
  }
  func.func @transform_2(%arg0: i32, %arg1: memref<2x8xi32, #tpu.memory_space<smem>>, %arg2: memref<2x8xi32, #tpu.memory_space<smem>>) -> (i32, i32, i32) {
    %c0_i32 = arith.constant 0 : i32
    %c0_i32_0 = arith.constant 0 : i32
    %c0_i32_1 = arith.constant 0 : i32
    %c0_i32_2 = arith.constant 0 : i32
    return %c0_i32, %c0_i32_0, %c0_i32_1 : i32, i32, i32
  }
  func.func @transform_3(%arg0: i32, %arg1: memref<2x8xi32, #tpu.memory_space<smem>>, %arg2: memref<2x8xi32, #tpu.memory_space<smem>>) -> (i32, i32, i32) {
    %c0_i32 = arith.constant 0 : i32
    %c0_i32_0 = arith.constant 0 : i32
    %c0_i32_1 = arith.constant 0 : i32
    %c0_i32_2 = arith.constant 0 : i32
    return %c0_i32, %c0_i32_0, %c0_i32_1 : i32, i32, i32
  }
  func.func @transform_4(%arg0: i32, %arg1: memref<2x8xi32, #tpu.memory_space<smem>>, %arg2: memref<2x8xi32, #tpu.memory_space<smem>>) -> (i32, i32, i32) {
    %c0_i32 = arith.constant 0 : i32
    %c0_i32_0 = arith.constant 0 : i32
    %c0_i32_1 = arith.constant 0 : i32
    %c0_i32_2 = arith.constant 0 : i32
    return %c0_i32, %c0_i32_0, %c0_i32_1 : i32, i32, i32
  }
  func.func @transform_5(%arg0: i32, %arg1: memref<2x8xi32, #tpu.memory_space<smem>>, %arg2: memref<2x8xi32, #tpu.memory_space<smem>>) -> (i32, i32, i32) {
    %c0_i32 = arith.constant 0 : i32
    %c0_i32_0 = arith.constant 0 : i32
    %c0_i32_1 = arith.constant 0 : i32
    %c0_i32_2 = arith.constant 0 : i32
    return %c0_i32, %c0_i32_0, %c0_i32_1 : i32, i32, i32
  }
  func.func @transform_6(%arg0: i32, %arg1: memref<2x8xi32, #tpu.memory_space<smem>>, %arg2: memref<2x8xi32, #tpu.memory_space<smem>>) -> (i32, i32, i32) {
    %c0_i32 = arith.constant 0 : i32
    %c0_i32_0 = arith.constant 0 : i32
    %c0_i32_1 = arith.constant 0 : i32
    %c0_i32_2 = arith.constant 0 : i32
    return %c0_i32, %c0_i32_0, %c0_i32_1 : i32, i32, i32
  }
  func.func @transform_7(%arg0: i32, %arg1: memref<2x8xi32, #tpu.memory_space<smem>>, %arg2: memref<2x8xi32, #tpu.memory_space<smem>>) -> (i32, i32, i32) {
    %c0_i32 = arith.constant 0 : i32
    %c0_i32_0 = arith.constant 0 : i32
    %c0_i32_1 = arith.constant 0 : i32
    %c0_i32_2 = arith.constant 0 : i32
    return %c0_i32, %c0_i32_0, %c0_i32_1 : i32, i32, i32
  }
  func.func @transform_8(%arg0: i32, %arg1: memref<2x8xi32, #tpu.memory_space<smem>>, %arg2: memref<2x8xi32, #tpu.memory_space<smem>>) -> (i32, i32, i32) {
    %c0_i32 = arith.constant 0 : i32
    %c0_i32_0 = arith.constant 0 : i32
    %c0_i32_1 = arith.constant 0 : i32
    %c0_i32_2 = arith.constant 0 : i32
    return %c0_i32, %c0_i32_0, %c0_i32_1 : i32, i32, i32
  }
  func.func @transform_9(%arg0: i32, %arg1: memref<2x8xi32, #tpu.memory_space<smem>>, %arg2: memref<2x8xi32, #tpu.memory_space<smem>>) -> (i32, i32, i32) {
    %c0_i32 = arith.constant 0 : i32
    %c0_i32_0 = arith.constant 0 : i32
    %c0_i32_1 = arith.constant 0 : i32
    %c0_i32_2 = arith.constant 0 : i32
    return %c0_i32, %c0_i32_0, %c0_i32_1 : i32, i32, i32
  }
  func.func @transform_10(%arg0: i32, %arg1: memref<2x8xi32, #tpu.memory_space<smem>>, %arg2: memref<2x8xi32, #tpu.memory_space<smem>>) -> (i32, i32, i32) {
    %c0_i32 = arith.constant 0 : i32
    %c0_i32_0 = arith.constant 0 : i32
    %c0_i32_1 = arith.constant 0 : i32
    %c0_i32_2 = arith.constant 0 : i32
    return %c0_i32, %c0_i32_0, %c0_i32_1 : i32, i32, i32
  }
  func.func @transform_11(%arg0: i32, %arg1: memref<2x8xi32, #tpu.memory_space<smem>>, %arg2: memref<2x8xi32, #tpu.memory_space<smem>>) -> (i32, i32, i32) {
    %c0_i32 = arith.constant 0 : i32
    %c0_i32_0 = arith.constant 0 : i32
    %c0_i32_1 = arith.constant 0 : i32
    %c0_i32_2 = arith.constant 0 : i32
    return %c0_i32, %c0_i32_0, %c0_i32_1 : i32, i32, i32
  }
  func.func @transform_12(%arg0: i32, %arg1: memref<2x8xi32, #tpu.memory_space<smem>>, %arg2: memref<2x8xi32, #tpu.memory_space<smem>>) -> (i32, i32, i32) {
    %c0_i32 = arith.constant 0 : i32
    %c0_i32_0 = arith.constant 0 : i32
    %c0_i32_1 = arith.constant 0 : i32
    %c0_i32_2 = arith.constant 0 : i32
    return %c0_i32, %c0_i32_0, %c0_i32_1 : i32, i32, i32
  }
  func.func @transform_13(%arg0: i32, %arg1: memref<2x8xi32, #tpu.memory_space<smem>>, %arg2: memref<2x8xi32, #tpu.memory_space<smem>>) -> (i32, i32, i32) {
    %c0_i32 = arith.constant 0 : i32
    %c0_i32_0 = arith.constant 0 : i32
    %c0_i32_1 = arith.constant 0 : i32
    %c0_i32_2 = arith.constant 0 : i32
    return %c0_i32, %c0_i32_0, %c0_i32_1 : i32, i32, i32
  }
  func.func @transform_14(%arg0: i32, %arg1: memref<2x8xi32, #tpu.memory_space<smem>>, %arg2: memref<2x8xi32, #tpu.memory_space<smem>>) -> (i32, i32) {
    %c0_i32 = arith.constant 0 : i32
    %c0_i32_0 = arith.constant 0 : i32
    %c0_i32_1 = arith.constant 0 : i32
    return %c0_i32, %c0_i32_0 : i32, i32
  }
  func.func @transform_15(%arg0: i32, %arg1: memref<2x8xi32, #tpu.memory_space<smem>>, %arg2: memref<2x8xi32, #tpu.memory_space<smem>>) -> (i32, i32) {
    %c0_i32 = arith.constant 0 : i32
    %c0_i32_0 = arith.constant 0 : i32
    %c0_i32_1 = arith.constant 0 : i32
    return %c0_i32, %c0_i32_0 : i32, i32
  }
  func.func @transform_16(%arg0: i32, %arg1: memref<2x8xi32, #tpu.memory_space<smem>>, %arg2: memref<2x8xi32, #tpu.memory_space<smem>>) -> (i32, i32, i32) {
    %c0_i32 = arith.constant 0 : i32
    %c0_i32_0 = arith.constant 0 : i32
    %c0_i32_1 = arith.constant 0 : i32
    %c0_i32_2 = arith.constant 0 : i32
    return %c0_i32, %c0_i32_0, %c0_i32_1 : i32, i32, i32
  }
}

</mosaic_0001>

<llo_original>
// kernel: bert_forward.1
$region0: #{bert_forward.1}
  #allocation0 [shape = 'u32[]', space=smem, size = 0x4, offset = 0x4, fixed_abs, tag = 'smem constant byte address 0x4 - core index']
  #allocation1 [shape = 'u32[144,128]{1,0:T(1,128)}', space=vmem, size = 0x12000, scoped, tag = 'internal scratch']
  #allocation2 [shape = 's32[1]{0}', space=sflag, size = 0x4, scoped, tag = 'scoped memory for bert_forward.1']
  #allocation3 [shape = 'u8[1024]{0}', space=smem, size = 0x400, scoped, tag = 'prefetched SMEM operand 0']
  #allocation4 [shape = 'u8[1024]{0}', space=smem, size = 0x400, scoped, tag = 'prefetched SMEM operand 1']
  %s0 = inlined_call_operand.vmem [shape: s32[2,8], index: 0, kind: input, shape index: {}]
  %s1 = inlined_call_operand.vmem [shape: s32[2,8], index: 1, kind: input, shape index: {}]
  %s2 = inlined_call_operand.vmem [shape: f32[50,32], index: 2, kind: input, shape index: {}]
  %s3 = inlined_call_operand.vmem [shape: f32[512,32], index: 3, kind: input, shape index: {}]
  %s4 = inlined_call_operand.vmem [shape: bf16[2,32,96], index: 4, kind: input, shape index: {}]
  %s5 = inlined_call_operand.vmem [shape: f32[2,1,96], index: 5, kind: input, shape index: {}]
  %s6 = inlined_call_operand.vmem [shape: bf16[2,32,32], index: 6, kind: input, shape index: {}]
  %s7 = inlined_call_operand.vmem [shape: f32[2,1,32], index: 7, kind: input, shape index: {}]
  %s8 = inlined_call_operand.vmem [shape: f32[2,1,32], index: 8, kind: input, shape index: {}]
  %s9 = inlined_call_operand.vmem [shape: f32[2,1,32], index: 9, kind: input, shape index: {}]
  %s10 = inlined_call_operand.vmem [shape: bf16[2,32,64], index: 10, kind: input, shape index: {}]
  %s11 = inlined_call_operand.vmem [shape: f32[2,1,64], index: 11, kind: input, shape index: {}]
  %s12 = inlined_call_operand.vmem [shape: bf16[2,64,32], index: 12, kind: input, shape index: {}]
  %s13 = inlined_call_operand.vmem [shape: f32[2,1,32], index: 13, kind: input, shape index: {}]
  %s14 = inlined_call_operand.vmem [shape: f32[2,1,32], index: 14, kind: input, shape index: {}]
  %s15 = inlined_call_operand.vmem [shape: f32[2,1,32], index: 15, kind: input, shape index: {}]
  %s16 = inlined_call_operand.vmem [shape: f32[1,32], index: 16, kind: input, shape index: {}]
  %s17 = inlined_call_operand.vmem [shape: f32[1,32], index: 17, kind: input, shape index: {}]
  %s18 = inlined_call_operand.hbm [shape: f32[2,8,32], index: 18, kind: output, shape index: {}]
  %s19 = sld [smem:[#allocation0]]
  $region74: #{bert_forward.1} parent=0
    _
  %s21 = ssub.s32 1, %s19
  %s22 = scalar_select 0, %s21, %s19
  %s23 = sshll.u32 %s0, 4
  %s24 = int_to_ptr.vmem [resolvable:$true] %s23
  %26 = dma.vmem_to_smem %s24, 32, [#allocation3], [#allocation2]
  %s27 = sshll.u32 %s1, 4
  %s28 = int_to_ptr.vmem [resolvable:$true] %s27
  %30 = dma.vmem_to_smem %s28, 32, [#allocation4], [#allocation2]
  %31 = dma.done [#allocation2], 64
  %32 = sfence
  $region1: #{bert_forward.1} parent=0
    #allocation5 [shape = 'u8[8192]{0}', space=vmem, size = 0x2000, scoped, tag = 'output window, operand 0, single buffered']
    #allocation6 [shape = 's32[1]{0}', space=sflag, size = 0x4, scoped, tag = 'scoped memory for bert_forward.1']
    %33 = vsyncpa [#allocation6], 0
    // Predicated region
    $region2: #{bert_forward.1} parent=1 // pred_check
      _
    $region3: #{bert_forward.1} parent=1 // pred_check_branch
      %35 = sbr.rel (0) target = $region5
    $region4: #{bert_forward.1} parent=1 // pred_region
      _
    $region5: #{bert_forward.1} parent=1 // pred_fallthru
      _
    // Predicated region
    $region6: #{bert_forward.1} parent=1 // pred_check
      _
    $region7: #{bert_forward.1} parent=1 // pred_check_branch
      %37 = sbr.rel (0) target = $region9
    $region8: #{bert_forward.1} parent=1 // pred_region
      _
    $region9: #{bert_forward.1} parent=1 // pred_fallthru
      _
    // Predicated region
    $region10: #{bert_forward.1} parent=1 // pred_check
      _
    $region11: #{bert_forward.1} parent=1 // pred_check_branch
      %39 = sbr.rel (0) target = $region13
    $region12: #{bert_forward.1} parent=1 // pred_region
      _
    $region13: #{bert_forward.1} parent=1 // pred_fallthru
      _
    // Predicated region
    $region14: #{bert_forward.1} parent=1 // pred_check
      _
    $region15: #{bert_forward.1} parent=1 // pred_check_branch
      %41 = sbr.rel (0) target = $region17
    $region16: #{bert_forward.1} parent=1 // pred_region
      _
    $region17: #{bert_forward.1} parent=1 // pred_fallthru
      _
    // Predicated region
    $region18: #{bert_forward.1} parent=1 // pred_check
      _
    $region19: #{bert_forward.1} parent=1 // pred_check_branch
      %43 = sbr.rel (0) target = $region21
    $region20: #{bert_forward.1} parent=1 // pred_region
      _
    $region21: #{bert_forward.1} parent=1 // pred_fallthru
      _
    // Predicated region
    $region22: #{bert_forward.1} parent=1 // pred_check
      _
    $region23: #{bert_forward.1} parent=1 // pred_check_branch
      %45 = sbr.rel (0) target = $region25
    $region24: #{bert_forward.1} parent=1 // pred_region
      _
    $region25: #{bert_forward.1} parent=1 // pred_fallthru
      _
    // Predicated region
    $region26: #{bert_forward.1} parent=1 // pred_check
      _
    $region27: #{bert_forward.1} parent=1 // pred_check_branch
      %47 = sbr.rel (0) target = $region29
    $region28: #{bert_forward.1} parent=1 // pred_region
      _
    $region29: #{bert_forward.1} parent=1 // pred_fallthru
      _
    // Predicated region
    $region30: #{bert_forward.1} parent=1 // pred_check
      _
    $region31: #{bert_forward.1} parent=1 // pred_check_branch
      %49 = sbr.rel (0) target = $region33
    $region32: #{bert_forward.1} parent=1 // pred_region
      _
    $region33: #{bert_forward.1} parent=1 // pred_fallthru
      _
    // Predicated region
    $region34: #{bert_forward.1} parent=1 // pred_check
      _
    $region35: #{bert_forward.1} parent=1 // pred_check_branch
      %51 = sbr.rel (0) target = $region37
    $region36: #{bert_forward.1} parent=1 // pred_region
      _
    $region37: #{bert_forward.1} parent=1 // pred_fallthru
      _
    // Predicated region
    $region38: #{bert_forward.1} parent=1 // pred_check
      _
    $region39: #{bert_forward.1} parent=1 // pred_check_branch
      %53 = sbr.rel (0) target = $region41
    $region40: #{bert_forward.1} parent=1 // pred_region
      _
    $region41: #{bert_forward.1} parent=1 // pred_fallthru
      _
    // Predicated region
    $region42: #{bert_forward.1} parent=1 // pred_check
      _
    $region43: #{bert_forward.1} parent=1 // pred_check_branch
      %55 = sbr.rel (0) target = $region45
    $region44: #{bert_forward.1} parent=1 // pred_region
      _
    $region45: #{bert_forward.1} parent=1 // pred_fallthru
      _
    // Predicated region
    $region46: #{bert_forward.1} parent=1 // pred_check
      _
    $region47: #{bert_forward.1} parent=1 // pred_check_branch
      %57 = sbr.rel (0) target = $region49
    $region48: #{bert_forward.1} parent=1 // pred_region
      _
    $region49: #{bert_forward.1} parent=1 // pred_fallthru
      _
    // Predicated region
    $region50: #{bert_forward.1} parent=1 // pred_check
      _
    $region51: #{bert_forward.1} parent=1 // pred_check_branch
      %59 = sbr.rel (0) target = $region53
    $region52: #{bert_forward.1} parent=1 // pred_region
      _
    $region53: #{bert_forward.1} parent=1 // pred_fallthru
      _
    // Predicated region
    $region54: #{bert_forward.1} parent=1 // pred_check
      _
    $region55: #{bert_forward.1} parent=1 // pred_check_branch
      %61 = sbr.rel (0) target = $region57
    $region56: #{bert_forward.1} parent=1 // pred_region
      _
    $region57: #{bert_forward.1} parent=1 // pred_fallthru
      _
    // Predicated region
    $region58: #{bert_forward.1} parent=1 // pred_check
      _
    $region59: #{bert_forward.1} parent=1 // pred_check_branch
      %63 = sbr.rel (0) target = $region61
    $region60: #{bert_forward.1} parent=1 // pred_region
      _
    $region61: #{bert_forward.1} parent=1 // pred_fallthru
      _
    // Predicated region
    $region62: #{bert_forward.1} parent=1 // pred_check
      _
    $region63: #{bert_forward.1} parent=1 // pred_check_branch
      %65 = sbr.rel (0) target = $region65
    $region64: #{bert_forward.1} parent=1 // pred_region
      _
    $region65: #{bert_forward.1} parent=1 // pred_fallthru
      _
    %v67 = vlaneseq
    %v68 = vshrl.u32 %v67, 7
    %v69 = vadd.s32 %v68, 8
    %v70 = vlaneseq
    %v71 = vand.u32 %v70, 127
    %s72 = sld [smem:[#allocation3]]
    %vm73 = vcmp.eq.s32.totalorder %v68, 0
    %vm74 = vcmp.eq.s32.totalorder %v69, 0
    %v75 = vstv %s72
    %vm76 = vcmp.eq.s32.totalorder %v71, %v75
    %vm77 = vmand %vm73, %vm76
    %vm78 = vmand %vm74, %vm76
    %v79 = vsel %vm77, 5.656854, 0.0
    %v80 = vsel %vm78, 5.656854, 0.0
    %v81 = vadd.f32 %v79, 0.0
    %v82 = vadd.f32 %v80, 0.0
    %s83 = sld [smem:[#allocation3 + $0x1]]
    %vm84 = vcmp.eq.s32.totalorder %v68, 1
    %vm85 = vcmp.eq.s32.totalorder %v69, 1
    %v86 = vstv %s83
    %vm87 = vcmp.eq.s32.totalorder %v71, %v86
    %vm88 = vmand %vm84, %vm87
    %vm89 = vmand %vm85, %vm87
    %v90 = vsel %vm88, 5.656854, 0.0
    %v91 = vsel %vm89, 5.656854, 0.0
    %v92 = vadd.f32 %v81, %v90
    %v93 = vadd.f32 %v82, %v91
    %s94 = sld [smem:[#allocation3 + $0x2]]
    %vm95 = vcmp.eq.s32.totalorder %v68, 2
    %vm96 = vcmp.eq.s32.totalorder %v69, 2
    %v97 = vstv %s94
    %vm98 = vcmp.eq.s32.totalorder %v71, %v97
    %vm99 = vmand %vm95, %vm98
    %vm100 = vmand %vm96, %vm98
    %v101 = vsel %vm99, 5.656854, 0.0
    %v102 = vsel %vm100, 5.656854, 0.0
    %v103 = vadd.f32 %v92, %v101
    %v104 = vadd.f32 %v93, %v102
    %s105 = sld [smem:[#allocation3 + $0x3]]
    %vm106 = vcmp.eq.s32.totalorder %v68, 3
    %vm107 = vcmp.eq.s32.totalorder %v69, 3
    %v108 = vstv %s105
    %vm109 = vcmp.eq.s32.totalorder %v71, %v108
    %vm110 = vmand %vm106, %vm109
    %vm111 = vmand %vm107, %vm109
    %v112 = vsel %vm110, 5.656854, 0.0
    %v113 = vsel %vm111, 5.656854, 0.0
    %v114 = vadd.f32 %v103, %v112
    %v115 = vadd.f32 %v104, %v113
    %s116 = sld [smem:[#allocation3 + $0x4]]
    %vm117 = vcmp.eq.s32.totalorder %v68, 4
    %vm118 = vcmp.eq.s32.totalorder %v69, 4
    %v119 = vstv %s116
    %vm120 = vcmp.eq.s32.totalorder %v71, %v119
    %vm121 = vmand %vm117, %vm120
    %vm122 = vmand %vm118, %vm120
    %v123 = vsel %vm121, 5.656854, 0.0
    %v124 = vsel %vm122, 5.656854, 0.0
    %v125 = vadd.f32 %v114, %v123
    %v126 = vadd.f32 %v115, %v124
    %s127 = sld [smem:[#allocation3 + $0x5]]
    %vm128 = vcmp.eq.s32.totalorder %v68, 5
    %vm129 = vcmp.eq.s32.totalorder %v69, 5
    %v130 = vstv %s127
    %vm131 = vcmp.eq.s32.totalorder %v71, %v130
    %vm132 = vmand %vm128, %vm131
    %vm133 = vmand %vm129, %vm131
    %v134 = vsel %vm132, 5.656854, 0.0
    %v135 = vsel %vm133, 5.656854, 0.0
    %v136 = vadd.f32 %v125, %v134
    %v137 = vadd.f32 %v126, %v135
    %s138 = sld [smem:[#allocation3 + $0x6]]
    %vm139 = vcmp.eq.s32.totalorder %v68, 6
    %vm140 = vcmp.eq.s32.totalorder %v69, 6
    %v141 = vstv %s138
    %vm142 = vcmp.eq.s32.totalorder %v71, %v141
    %vm143 = vmand %vm139, %vm142
    %vm144 = vmand %vm140, %vm142
    %v145 = vsel %vm143, 5.656854, 0.0
    %v146 = vsel %vm144, 5.656854, 0.0
    %v147 = vadd.f32 %v136, %v145
    %v148 = vadd.f32 %v137, %v146
    %s149 = sld [smem:[#allocation3 + $0x7]]
    %vm150 = vcmp.eq.s32.totalorder %v68, 7
    %vm151 = vcmp.eq.s32.totalorder %v69, 7
    %v152 = vstv %s149
    %vm153 = vcmp.eq.s32.totalorder %v71, %v152
    %vm154 = vmand %vm150, %vm153
    %vm155 = vmand %vm151, %vm153
    %v156 = vsel %vm154, 5.656854, 0.0
    %v157 = vsel %vm155, 5.656854, 0.0
    %v158 = vadd.f32 %v147, %v156
    %v159 = vadd.f32 %v148, %v157
    %s160 = sld [smem:[#allocation3 + $0x80]]
    %vm161 = vcmp.eq.s32.totalorder %v68, 8
    %vm162 = vcmp.eq.s32.totalorder %v69, 8
    %v163 = vstv %s160
    %vm164 = vcmp.eq.s32.totalorder %v71, %v163
    %vm165 = vmand %vm161, %vm164
    %vm166 = vmand %vm162, %vm164
    %v167 = vsel %vm165, 5.656854, 0.0
    %v168 = vsel %vm166, 5.656854, 0.0
    %v169 = vadd.f32 %v158, %v167
    %v170 = vadd.f32 %v159, %v168
    %s171 = sld [smem:[#allocation3 + $0x81]]
    %vm172 = vcmp.eq.s32.totalorder %v68, 9
    %vm173 = vcmp.eq.s32.totalorder %v69, 9
    %v174 = vstv %s171
    %vm175 = vcmp.eq.s32.totalorder %v71, %v174
    %vm176 = vmand %vm172, %vm175
    %vm177 = vmand %vm173, %vm175
    %v178 = vsel %vm176, 5.656854, 0.0
    %v179 = vsel %vm177, 5.656854, 0.0
    %v180 = vadd.f32 %v169, %v178
    %v181 = vadd.f32 %v170, %v179
    %s182 = sld [smem:[#allocation3 + $0x82]]
    %vm183 = vcmp.eq.s32.totalorder %v68, 10
    %vm184 = vcmp.eq.s32.totalorder %v69, 10
    %v185 = vstv %s182
    %vm186 = vcmp.eq.s32.totalorder %v71, %v185
    %vm187 = vmand %vm183, %vm186
    %vm188 = vmand %vm184, %vm186
    %v189 = vsel %vm187, 5.656854, 0.0
    %v190 = vsel %vm188, 5.656854, 0.0
    %v191 = vadd.f32 %v180, %v189
    %v192 = vadd.f32 %v181, %v190
    %s193 = sld [smem:[#allocation3 + $0x83]]
    %vm194 = vcmp.eq.s32.totalorder %v68, 11
    %vm195 = vcmp.eq.s32.totalorder %v69, 11
    %v196 = vstv %s193
    %vm197 = vcmp.eq.s32.totalorder %v71, %v196
    %vm198 = vmand %vm194, %vm197
    %vm199 = vmand %vm195, %vm197
    %v200 = vsel %vm198, 5.656854, 0.0
    %v201 = vsel %vm199, 5.656854, 0.0
    %v202 = vadd.f32 %v191, %v200
    %v203 = vadd.f32 %v192, %v201
    %s204 = sld [smem:[#allocation3 + $0x84]]
    %vm205 = vcmp.eq.s32.totalorder %v68, 12
    %vm206 = vcmp.eq.s32.totalorder %v69, 12
    %v207 = vstv %s204
    %vm208 = vcmp.eq.s32.totalorder %v71, %v207
    %vm209 = vmand %vm205, %vm208
    %vm210 = vmand %vm206, %vm208
    %v211 = vsel %vm209, 5.656854, 0.0
    %v212 = vsel %vm210, 5.656854, 0.0
    %v213 = vadd.f32 %v202, %v211
    %v214 = vadd.f32 %v203, %v212
    %s215 = sld [smem:[#allocation3 + $0x85]]
    %vm216 = vcmp.eq.s32.totalorder %v68, 13
    %vm217 = vcmp.eq.s32.totalorder %v69, 13
    %v218 = vstv %s215
    %vm219 = vcmp.eq.s32.totalorder %v71, %v218
    %vm220 = vmand %vm216, %vm219
    %vm221 = vmand %vm217, %vm219
    %v222 = vsel %vm220, 5.656854, 0.0
    %v223 = vsel %vm221, 5.656854, 0.0
    %v224 = vadd.f32 %v213, %v222
    %v225 = vadd.f32 %v214, %v223
    %s226 = sld [smem:[#allocation3 + $0x86]]
    %vm227 = vcmp.eq.s32.totalorder %v68, 14
    %vm228 = vcmp.eq.s32.totalorder %v69, 14
    %v229 = vstv %s226
    %vm230 = vcmp.eq.s32.totalorder %v71, %v229
    %vm231 = vmand %vm227, %vm230
    %vm232 = vmand %vm228, %vm230
    %v233 = vsel %vm231, 5.656854, 0.0
    %v234 = vsel %vm232, 5.656854, 0.0
    %v235 = vadd.f32 %v224, %v233
    %v236 = vadd.f32 %v225, %v234
    %s237 = sld [smem:[#allocation3 + $0x87]]
    %vm238 = vcmp.eq.s32.totalorder %v68, 15
    %vm239 = vcmp.eq.s32.totalorder %v69, 15
    %v240 = vstv %s237
    %vm241 = vcmp.eq.s32.totalorder %v71, %v240
    %vm242 = vmand %vm238, %vm241
    %vm243 = vmand %vm239, %vm241
    %v244 = vsel %vm242, 5.656854, 0.0
    %v245 = vsel %vm243, 5.656854, 0.0
    %v246 = vadd.f32 %v235, %v244
    %v247 = vadd.f32 %v236, %v245
    %v248 = vld [vmem:[%s2] sm:$0xff]
    %v249 = vld [vmem:[%s2 + $0x8] sm:$0xff]
    %v250 = vld [vmem:[%s2 + $0x10] sm:$0xff]
    %v251 = vld [vmem:[%s2 + $0x18] sm:$0xff]
    %v252 = vld [vmem:[%s2 + $0x20] sm:$0xff]
    %v253 = vld [vmem:[%s2 + $0x28] sm:$0xff]
    %v254 = vld [vmem:[%s2 + $0x30] sm:$0x3]
    %v255 = vld [vmem:[%s3] sm:$0xff]
    %vm256 = vcmask 408576
    %v258 = vsel %vm256, %v246, 0
    %v261 = vsel %vm256, %v247, 0
    %vm263 = vcmask 1041408
    %v265 = vsel %vm263, %v254, 0
    %267 = vmatprep.subr.mxu0 0.0
    %268 = vmatpush1.msra.mxu0 %v248
    %269 = vmatprep.subr.mxu0 0.0
    %270 = vmatpush1.msra.mxu0 %v249
    %271 = vmatprep.subr.mxu0 0.0
    %272 = vmatpush1.msra.mxu0 %v250
    %273 = vmatprep.subr.mxu0 0.0
    %274 = vmatpush1.msra.mxu0 %v251
    %275 = vmatprep.subr.mxu0 0.0
    %276 = vmatpush1.msra.mxu0 %v252
    %277 = vmatprep.subr.mxu0 0.0
    %278 = vmatpush1.msra.mxu0 %v253
    %279 = vmatprep.subr.mxu0 0.0
    %280 = vmatpush1.msra.mxu0 %v265
    %281 = vmatprep.subr.mxu0 0.0
    %282 = vmatpush1.msra.mxu0 0.0
    %283 = vmatprep.subr.mxu0 0.0
    %284 = vmatpush1.msra.mxu0 0.0
    %285 = vmatprep.subr.mxu0 0.0
    %286 = vmatpush1.msra.mxu0 0.0
    %287 = vmatprep.subr.mxu0 0.0
    %288 = vmatpush1.msra.mxu0 0.0
    %289 = vmatprep.subr.mxu0 0.0
    %290 = vmatpush1.msra.mxu0 0.0
    %291 = vmatprep.subr.mxu0 0.0
    %292 = vmatpush1.msra.mxu0 0.0
    %293 = vmatprep.subr.mxu0 0.0
    %294 = vmatpush1.msra.mxu0 0.0
    %295 = vmatprep.subr.mxu0 0.0
    %296 = vmatpush1.msra.mxu0 0.0
    %297 = vmatprep.subr.mxu0 0.0
    %298 = vmatpush1.msra.mxu0 0.0
    %299 = vmatprep.subr.mxu0 0.0
    %300 = vmatpush1.msra.mxu0 0.0
    %301 = vmatprep.subr.mxu0 0.0
    %302 = vmatpush1.msra.mxu0 0.0
    %303 = vmatprep.subr.mxu0 0.0
    %304 = vmatpush1.msra.mxu0 0.0
    %305 = vmatprep.subr.mxu0 0.0
    %306 = vmatpush1.msra.mxu0 0.0
    %307 = vmatprep.subr.mxu0 0.0
    %308 = vmatpush1.msra.mxu0 0.0
    %309 = vmatprep.subr.mxu0 0.0
    %310 = vmatpush1.msra.mxu0 0.0
    %311 = vmatprep.subr.mxu0 0.0
    %312 = vmatpush1.msra.mxu0 0.0
    %313 = vmatprep.subr.mxu0 0.0
    %314 = vmatpush1.msra.mxu0 0.0
    %315 = vmatprep.subr.mxu0 0.0
    %316 = vmatpush1.msra.mxu0 0.0
    %317 = vmatprep.subr.mxu0 0.0
    %318 = vmatpush1.msra.mxu0 0.0
    %319 = vmatprep.subr.mxu0 0.0
    %320 = vmatpush1.msra.mxu0 0.0
    %321 = vmatprep.subr.mxu0 0.0
    %322 = vmatpush1.msra.mxu0 0.0
    %323 = vmatprep.subr.mxu0 0.0
    %324 = vmatpush1.msra.mxu0 0.0
    %325 = vmatprep.subr.mxu0 0.0
    %326 = vmatpush1.msra.mxu0 0.0
    %327 = vmatprep.subr.mxu0 0.0
    %328 = vmatpush1.msra.mxu0 0.0
    %329 = vmatprep.subr.mxu0 0.0
    %330 = vmatpush1.msra.mxu0 0.0
    %331 = vmatprep.mubr.f32.mxu0 0.0
    %332 = vmatmul.mubr.f32.gmra.mrb[0].mxu0 %v258
    %v333 = vpop.f32.mrb[0].mxu0
    %v334 = vadd.f32 %v255, %v333
    %v335 = vpop.f32.mrb[0].mxu0
    %336 = vmatprep.mubr.f32.mxu0 0.0
    %337 = vmatmul.mubr.f32.gmra.mrb[0].mxu0 %v261
    %v338 = vpop.f32.mrb[0].mxu0
    %v339 = vadd.f32 %v255, %v338
    %v340 = vpop.f32.mrb[0].mxu0
    %341 = vdwg.mxu0
    %s342 = sld [smem:[#allocation4]]
    %vm343 = vcmp.eq.s32.totalorder %v71, 0
    %p344 = scmp.eq.s32.totalorder %s342, 0
    %s345 = scalar_select %p344, 1, 0
    %v346 = vstv %s345
    %vm347 = vcmp.eq.s32.totalorder %v346, 1
    %vm348 = vmand %vm343, %vm347
    %v349 = vsel %vm348, -1e+09, 0.0
    %v350 = vadd.f32 %v349, 0.0
    %s351 = sld [smem:[#allocation4 + $0x1]]
    %vm352 = vcmp.eq.s32.totalorder %v71, 1
    %p353 = scmp.eq.s32.totalorder %s351, 0
    %s354 = scalar_select %p353, 1, 0
    %v355 = vstv %s354
    %vm356 = vcmp.eq.s32.totalorder %v355, 1
    %vm357 = vmand %vm352, %vm356
    %v358 = vsel %vm357, -1e+09, 0.0
    %v359 = vadd.f32 %v350, %v358
    %s360 = sld [smem:[#allocation4 + $0x2]]
    %vm361 = vcmp.eq.s32.totalorder %v71, 2
    %p362 = scmp.eq.s32.totalorder %s360, 0
    %s363 = scalar_select %p362, 1, 0
    %v364 = vstv %s363
    %vm365 = vcmp.eq.s32.totalorder %v364, 1
    %vm366 = vmand %vm361, %vm365
    %v367 = vsel %vm366, -1e+09, 0.0
    %v368 = vadd.f32 %v359, %v367
    %s369 = sld [smem:[#allocation4 + $0x3]]
    %vm370 = vcmp.eq.s32.totalorder %v71, 3
    %p371 = scmp.eq.s32.totalorder %s369, 0
    %s372 = scalar_select %p371, 1, 0
    %v373 = vstv %s372
    %vm374 = vcmp.eq.s32.totalorder %v373, 1
    %vm375 = vmand %vm370, %vm374
    %v376 = vsel %vm375, -1e+09, 0.0
    %v377 = vadd.f32 %v368, %v376
    %s378 = sld [smem:[#allocation4 + $0x4]]
    %vm379 = vcmp.eq.s32.totalorder %v71, 4
    %p380 = scmp.eq.s32.totalorder %s378, 0
    %s381 = scalar_select %p380, 1, 0
    %v382 = vstv %s381
    %vm383 = vcmp.eq.s32.totalorder %v382, 1
    %vm384 = vmand %vm379, %vm383
    %v385 = vsel %vm384, -1e+09, 0.0
    %v386 = vadd.f32 %v377, %v385
    %s387 = sld [smem:[#allocation4 + $0x5]]
    %vm388 = vcmp.eq.s32.totalorder %v71, 5
    %p389 = scmp.eq.s32.totalorder %s387, 0
    %s390 = scalar_select %p389, 1, 0
    %v391 = vstv %s390
    %vm392 = vcmp.eq.s32.totalorder %v391, 1
    %vm393 = vmand %vm388, %vm392
    %v394 = vsel %vm393, -1e+09, 0.0
    %v395 = vadd.f32 %v386, %v394
    %s396 = sld [smem:[#allocation4 + $0x6]]
    %vm397 = vcmp.eq.s32.totalorder %v71, 6
    %p398 = scmp.eq.s32.totalorder %s396, 0
    %s399 = scalar_select %p398, 1, 0
    %v400 = vstv %s399
    %vm401 = vcmp.eq.s32.totalorder %v400, 1
    %vm402 = vmand %vm397, %vm401
    %v403 = vsel %vm402, -1e+09, 0.0
    %v404 = vadd.f32 %v395, %v403
    %s405 = sld [smem:[#allocation4 + $0x7]]
    %vm406 = vcmp.eq.s32.totalorder %v71, 7
    %p407 = scmp.eq.s32.totalorder %s405, 0
    %s408 = scalar_select %p407, 1, 0
    %v409 = vstv %s408
    %vm410 = vcmp.eq.s32.totalorder %v409, 1
    %vm411 = vmand %vm406, %vm410
    %v412 = vsel %vm411, -1e+09, 0.0
    %v413 = vadd.f32 %v404, %v412
    %s414 = sld [smem:[#allocation4 + $0x80]]
    %p415 = scmp.eq.s32.totalorder %s414, 0
    %s416 = scalar_select %p415, 1, 0
    %v417 = vstv %s416
    %vm418 = vcmp.eq.s32.totalorder %v417, 1
    %vm419 = vmand %vm343, %vm418
    %v420 = vsel %vm419, -1e+09, 0.0
    %v421 = vadd.f32 %v420, 0.0
    %s422 = sld [smem:[#allocation4 + $0x81]]
    %p423 = scmp.eq.s32.totalorder %s422, 0
    %s424 = scalar_select %p423, 1, 0
    %v425 = vstv %s424
    %vm426 = vcmp.eq.s32.totalorder %v425, 1
    %vm427 = vmand %vm352, %vm426
    %v428 = vsel %vm427, -1e+09, 0.0
    %v429 = vadd.f32 %v421, %v428
    %s430 = sld [smem:[#allocation4 + $0x82]]
    %p431 = scmp.eq.s32.totalorder %s430, 0
    %s432 = scalar_select %p431, 1, 0
    %v433 = vstv %s432
    %vm434 = vcmp.eq.s32.totalorder %v433, 1
    %vm435 = vmand %vm361, %vm434
    %v436 = vsel %vm435, -1e+09, 0.0
    %v437 = vadd.f32 %v429, %v436
    %s438 = sld [smem:[#allocation4 + $0x83]]
    %p439 = scmp.eq.s32.totalorder %s438, 0
    %s440 = scalar_select %p439, 1, 0
    %v441 = vstv %s440
    %vm442 = vcmp.eq.s32.totalorder %v441, 1
    %vm443 = vmand %vm370, %vm442
    %v444 = vsel %vm443, -1e+09, 0.0
    %v445 = vadd.f32 %v437, %v444
    %s446 = sld [smem:[#allocation4 + $0x84]]
    %p447 = scmp.eq.s32.totalorder %s446, 0
    %s448 = scalar_select %p447, 1, 0
    %v449 = vstv %s448
    %vm450 = vcmp.eq.s32.totalorder %v449, 1
    %vm451 = vmand %vm379, %vm450
    %v452 = vsel %vm451, -1e+09, 0.0
    %v453 = vadd.f32 %v445, %v452
    %s454 = sld [smem:[#allocation4 + $0x85]]
    %p455 = scmp.eq.s32.totalorder %s454, 0
    %s456 = scalar_select %p455, 1, 0
    %v457 = vstv %s456
    %vm458 = vcmp.eq.s32.totalorder %v457, 1
    %vm459 = vmand %vm388, %vm458
    %v460 = vsel %vm459, -1e+09, 0.0
    %v461 = vadd.f32 %v453, %v460
    %s462 = sld [smem:[#allocation4 + $0x86]]
    %p463 = scmp.eq.s32.totalorder %s462, 0
    %s464 = scalar_select %p463, 1, 0
    %v465 = vstv %s464
    %vm466 = vcmp.eq.s32.totalorder %v465, 1
    %vm467 = vmand %vm397, %vm466
    %v468 = vsel %vm467, -1e+09, 0.0
    %v469 = vadd.f32 %v461, %v468
    %s470 = sld [smem:[#allocation4 + $0x87]]
    %p471 = scmp.eq.s32.totalorder %s470, 0
    %s472 = scalar_select %p471, 1, 0
    %v473 = vstv %s472
    %vm474 = vcmp.eq.s32.totalorder %v473, 1
    %vm475 = vmand %vm406, %vm474
    %v476 = vsel %vm475, -1e+09, 0.0
    %v477 = vadd.f32 %v469, %v476
    %v478 = vld [vmem:[%s8] sm:$0x1]
    %v479 = vld [vmem:[%s9] sm:$0x1]
    %vm480 = vcmask 261120
    %v481 = vsel %vm480, %v334, 0.0
    %482 = vadd.xlane.f32.xlu0 %v481
    %v483 = vpop.xlane.xlu0 %482
    %v484 = vsel %vm480, %v339, 0.0
    %485 = vadd.xlane.f32.xlu0 %v484
    %v486 = vpop.xlane.xlu0 %485
    %v487 = vrcp.pop 32.0
    %v488 = vmul.f32 %v483, %v487
    %v489 = vmul.f32 %v486, %v487
    %v490 = vsub.f32 %v334, %v488
    %v491 = vsub.f32 %v339, %v489
    %v492 = vmul.f32 %v490, %v490
    %v493 = vmul.f32 %v491, %v491
    %v494 = vsel %vm480, %v492, 0.0
    %495 = vadd.xlane.f32.xlu0 %v494
    %v496 = vpop.xlane.xlu0 %495
    %v497 = vsel %vm480, %v493, 0.0
    %498 = vadd.xlane.f32.xlu0 %v497
    %v499 = vpop.xlane.xlu0 %498
    %v500 = vmul.f32 %v496, 0.032258064
    %v501 = vmul.f32 %v499, 0.032258064
    %v502 = vrsqrt.pop %v500
    %v503 = vmul.f32 %v500, %v502
    %vm504 = vcmp.eq.f32.partialorder %v500, inf
    %v505 = vsel %vm504, %v500, %v503
    %vm506 = vcmp.eq.f32.partialorder %v500, 0.0
    %v507 = vand.u32 %v500, 2147483648
    %v508 = vsel %vm506, %v507, %v505
    %v509 = vrsqrt.pop %v501
    %v510 = vmul.f32 %v501, %v509
    %vm511 = vcmp.eq.f32.partialorder %v501, inf
    %v512 = vsel %vm511, %v501, %v510
    %vm513 = vcmp.eq.f32.partialorder %v501, 0.0
    %v514 = vand.u32 %v501, 2147483648
    %v515 = vsel %vm513, %v514, %v512
    %v516 = vadd.f32 %v508, 1e-06
    %v517 = vadd.f32 %v515, 1e-06
    %v518 = vrcp.pop %v516
    %v519 = vrcp.pop %v517
    %v521 = vlaneseq
    %v522 = vshrl.u32 %v521, 7
    %v523 = vsub.s32 0, %v522
    %v524 = vrot.slane %v478, %v523
    %v526 = vmul.f32 %v524, %v490
    %v527 = vmul.f32 %v524, %v491
    %v528 = vmul.f32 %v526, %v518
    %v529 = vmul.f32 %v527, %v519
    %v531 = vlaneseq
    %v532 = vshrl.u32 %v531, 7
    %v533 = vsub.s32 0, %v532
    %v534 = vrot.slane %v479, %v533
    %v536 = vadd.f32 %v528, %v534
    %v537 = vadd.f32 %v529, %v534
    %v538 = vpack.c.bf16 %v537, %v536
    %v539 = vld [vmem:[%s4] sm:$0xf]
    %v540 = vld [vmem:[%s4 + $0x4] sm:$0xf]
    %v541 = vld [vmem:[%s4 + $0x8] sm:$0xf]
    %v542 = vld [vmem:[%s4 + $0xc] sm:$0xf]
    %v543 = vld [vmem:[%s5] sm:$0x1]
    %v545 = vlaneseq
    %v546 = vshrl.u32 %v545, 7
    %v547 = vsub.s32 0, %v546
    %v548 = vrot.slane %v543, %v547
    %v554 = vunpack.c.l.b16 %v539
    %v555 = vunpack.c.l.b16 %v540
    %v556 = vunpack.c.l.b16 %v541
    %v557 = vunpack.c.l.b16 %v542
    %v558 = vpack.c.b16 %v555, %v554
    %v559 = vpack.c.b16 %v557, %v556
    %v563 = vsel %vm480, %v538, 0
    %565 = vmatprep.subr.bf16.mxu0 0
    %566 = vmatpush1.bf16.msra.mxu0 %v558
    %567 = vmatprep.subr.bf16.mxu0 0
    %568 = vmatpush1.bf16.msra.mxu0 %v559
    %569 = vmatprep.subr.bf16.mxu0 0
    %570 = vmatpush1.bf16.msra.mxu0 0
    %571 = vmatprep.subr.bf16.mxu0 0
    %572 = vmatpush1.bf16.msra.mxu0 0
    %573 = vmatprep.subr.bf16.mxu0 0
    %574 = vmatpush1.bf16.msra.mxu0 0
    %575 = vmatprep.subr.bf16.mxu0 0
    %576 = vmatpush1.bf16.msra.mxu0 0
    %577 = vmatprep.subr.bf16.mxu0 0
    %578 = vmatpush1.bf16.msra.mxu0 0
    %579 = vmatprep.subr.bf16.mxu0 0
    %580 = vmatpush1.bf16.msra.mxu0 0
    %581 = vmatprep.subr.bf16.mxu0 0
    %582 = vmatpush1.bf16.msra.mxu0 0
    %583 = vmatprep.subr.bf16.mxu0 0
    %584 = vmatpush1.bf16.msra.mxu0 0
    %585 = vmatprep.subr.bf16.mxu0 0
    %586 = vmatpush1.bf16.msra.mxu0 0
    %587 = vmatprep.subr.bf16.mxu0 0
    %588 = vmatpush1.bf16.msra.mxu0 0
    %589 = vmatprep.subr.bf16.mxu0 0
    %590 = vmatpush1.bf16.msra.mxu0 0
    %591 = vmatprep.subr.bf16.mxu0 0
    %592 = vmatpush1.bf16.msra.mxu0 0
    %593 = vmatprep.subr.bf16.mxu0 0
    %594 = vmatpush1.bf16.msra.mxu0 0
    %595 = vmatprep.subr.bf16.mxu0 0
    %596 = vmatpush1.bf16.msra.mxu0 0
    %597 = vmatprep.mubr.bf16.mxu0 0
    %598 = vmatmul.mubr.bf16.gmra.mrb[0].mxu0 %v563
    %v599 = vpop.f32.mrb[0].mxu0
    %v600 = vadd.f32 %v548, %v599
    %v601 = vpop.f32.mrb[0].mxu0
    %v602 = vpop.f32.mrb[0].mxu0
    %v603 = vadd.f32 %v548, %v602
    %v604 = vpop.f32.mrb[0].mxu0
    %605 = vdwg.mxu0
    %607 = vrot.lane.b32.xlu0 %v600, 96
    %v608 = vpop.permute.xlu0 %607
    %vm609 = vcmask 64512
    %v610 = vsel %vm609, %v600, 0
    %v612 = vsel %vm609, %v608, 0
    %614 = vmatprep.subr.mxu0 0.0
    %615 = vmatpush1.xpose.msra.mxu0 %v612
    %616 = vmatprep.subr.mxu0 0.0
    %617 = vmatpush1.xpose.msra.mxu0 0.0
    %618 = vmatprep.subr.mxu0 0.0
    %619 = vmatpush1.xpose.msra.mxu0 0.0
    %620 = vmatprep.subr.mxu0 0.0
    %621 = vmatpush1.xpose.msra.mxu0 0.0
    %622 = vmatprep.subr.mxu0 0.0
    %623 = vmatpush1.xpose.msra.mxu0 0.0
    %624 = vmatprep.subr.mxu0 0.0
    %625 = vmatpush1.xpose.msra.mxu0 0.0
    %626 = vmatprep.subr.mxu0 0.0
    %627 = vmatpush1.xpose.msra.mxu0 0.0
    %628 = vmatprep.subr.mxu0 0.0
    %629 = vmatpush1.xpose.msra.mxu0 0.0
    %630 = vmatprep.subr.mxu0 0.0
    %631 = vmatpush1.xpose.msra.mxu0 0.0
    %632 = vmatprep.subr.mxu0 0.0
    %633 = vmatpush1.xpose.msra.mxu0 0.0
    %634 = vmatprep.subr.mxu0 0.0
    %635 = vmatpush1.xpose.msra.mxu0 0.0
    %636 = vmatprep.subr.mxu0 0.0
    %637 = vmatpush1.xpose.msra.mxu0 0.0
    %638 = vmatprep.subr.mxu0 0.0
    %639 = vmatpush1.xpose.msra.mxu0 0.0
    %640 = vmatprep.subr.mxu0 0.0
    %641 = vmatpush1.xpose.msra.mxu0 0.0
    %642 = vmatprep.subr.mxu0 0.0
    %643 = vmatpush1.xpose.msra.mxu0 0.0
    %644 = vmatprep.subr.mxu0 0.0
    %645 = vmatpush1.xpose.msra.mxu0 0.0
    %646 = vmatprep.subr.mxu0 0.0
    %647 = vmatpush1.xpose.msra.mxu0 0.0
    %648 = vmatprep.subr.mxu0 0.0
    %649 = vmatpush1.xpose.msra.mxu0 0.0
    %650 = vmatprep.subr.mxu0 0.0
    %651 = vmatpush1.xpose.msra.mxu0 0.0
    %652 = vmatprep.subr.mxu0 0.0
    %653 = vmatpush1.xpose.msra.mxu0 0.0
    %654 = vmatprep.subr.mxu0 0.0
    %655 = vmatpush1.xpose.msra.mxu0 0.0
    %656 = vmatprep.subr.mxu0 0.0
    %657 = vmatpush1.xpose.msra.mxu0 0.0
    %658 = vmatprep.subr.mxu0 0.0
    %659 = vmatpush1.xpose.msra.mxu0 0.0
    %660 = vmatprep.subr.mxu0 0.0
    %661 = vmatpush1.xpose.msra.mxu0 0.0
    %662 = vmatprep.subr.mxu0 0.0
    %663 = vmatpush1.xpose.msra.mxu0 0.0
    %664 = vmatprep.subr.mxu0 0.0
    %665 = vmatpush1.xpose.msra.mxu0 0.0
    %666 = vmatprep.subr.mxu0 0.0
    %667 = vmatpush1.xpose.msra.mxu0 0.0
    %668 = vmatprep.subr.mxu0 0.0
    %669 = vmatpush1.xpose.msra.mxu0 0.0
    %670 = vmatprep.subr.mxu0 0.0
    %671 = vmatpush1.xpose.msra.mxu0 0.0
    %672 = vmatprep.subr.mxu0 0.0
    %673 = vmatpush1.xpose.msra.mxu0 0.0
    %674 = vmatprep.subr.mxu0 0.0
    %675 = vmatpush1.xpose.msra.mxu0 0.0
    %676 = vmatprep.subr.mxu0 0.0
    %677 = vmatpush1.xpose.msra.mxu0 0.0
    %678 = vmatprep.mubr.f32.mxu0 0.0
    %679 = vmatmul.mubr.f32.gmra.mrb[0].mxu0 %v610
    %v680 = vpop.f32.mrb[0].mxu0
    %v681 = vadd.f32 0.0, %v680
    %v682 = vpop.f32.mrb[0].mxu0
    %683 = vdwg.mxu0
    %v684 = vmul.f32 %v681, 0.35355338
    %v685 = vadd.f32 %v684, %v413
    %v686 = vsel %vm609, %v685, -inf
    %687 = vmax.xlane.f32.xlu0 %v686
    %v688 = vpop.xlane.xlu0 %687
    %v689 = vsub.f32 %v685, %v688
    %v690 = vmul.f32 %v689, 1.442695
    %v691 = vpow.pop %v690
    %v692 = vsel %vm609, %v691, 0.0
    %693 = vadd.xlane.f32.xlu0 %v692
    %v694 = vpop.xlane.xlu0 %693
    %v695 = vrcp.pop %v694
    %v696 = vmul.f32 %v691, %v695
    %v697 = vpack.c.bf16 %v696, %v696
    %v698 = vpack.c.bf16 %v600, %v600
    %700 = vrot.lane.b32.xlu0 %v698, 64
    %v701 = vpop.permute.xlu0 %700
    %v703 = vsel %vm609, %v697, 0
    %vm705 = vcmask 1043456
    %v707 = vsel %vm705, %v701, 0
    %709 = vmatprep.subr.bf16.mxu0 0
    %710 = vmatpush1.bf16.msra.mxu0 %v707
    %711 = vmatprep.subr.bf16.mxu0 0
    %712 = vmatpush1.bf16.msra.mxu0 0
    %713 = vmatprep.subr.bf16.mxu0 0
    %714 = vmatpush1.bf16.msra.mxu0 0
    %715 = vmatprep.subr.bf16.mxu0 0
    %716 = vmatpush1.bf16.msra.mxu0 0
    %717 = vmatprep.subr.bf16.mxu0 0
    %718 = vmatpush1.bf16.msra.mxu0 0
    %719 = vmatprep.subr.bf16.mxu0 0
    %720 = vmatpush1.bf16.msra.mxu0 0
    %721 = vmatprep.subr.bf16.mxu0 0
    %722 = vmatpush1.bf16.msra.mxu0 0
    %723 = vmatprep.subr.bf16.mxu0 0
    %724 = vmatpush1.bf16.msra.mxu0 0
    %725 = vmatprep.subr.bf16.mxu0 0
    %726 = vmatpush1.bf16.msra.mxu0 0
    %727 = vmatprep.subr.bf16.mxu0 0
    %728 = vmatpush1.bf16.msra.mxu0 0
    %729 = vmatprep.subr.bf16.mxu0 0
    %730 = vmatpush1.bf16.msra.mxu0 0
    %731 = vmatprep.subr.bf16.mxu0 0
    %732 = vmatpush1.bf16.msra.mxu0 0
    %733 = vmatprep.subr.bf16.mxu0 0
    %734 = vmatpush1.bf16.msra.mxu0 0
    %735 = vmatprep.subr.bf16.mxu0 0
    %736 = vmatpush1.bf16.msra.mxu0 0
    %737 = vmatprep.subr.bf16.mxu0 0
    %738 = vmatpush1.bf16.msra.mxu0 0
    %739 = vmatprep.subr.bf16.mxu0 0
    %740 = vmatpush1.bf16.msra.mxu0 0
    %741 = vmatprep.mubr.bf16.mxu0 0
    %742 = vmatmul.mubr.bf16.gmra.mrb[0].mxu0 %v703
    %v743 = vpop.f32.mrb[0].mxu0
    %v744 = vadd.f32 0.0, %v743
    %v745 = vpop.f32.mrb[0].mxu0
    %v746 = vpop.f32.mrb[0].mxu0
    %v747 = vpop.f32.mrb[0].mxu0
    %748 = vdwg.mxu0
    %750 = vrot.lane.b32.xlu0 %v603, 96
    %v751 = vpop.permute.xlu0 %750
    %v752 = vsel %vm609, %v603, 0
    %v754 = vsel %vm609, %v751, 0
    %756 = vmatprep.subr.mxu0 0.0
    %757 = vmatpush1.xpose.msra.mxu0 %v754
    %758 = vmatprep.subr.mxu0 0.0
    %759 = vmatpush1.xpose.msra.mxu0 0.0
    %760 = vmatprep.subr.mxu0 0.0
    %761 = vmatpush1.xpose.msra.mxu0 0.0
    %762 = vmatprep.subr.mxu0 0.0
    %763 = vmatpush1.xpose.msra.mxu0 0.0
    %764 = vmatprep.subr.mxu0 0.0
    %765 = vmatpush1.xpose.msra.mxu0 0.0
    %766 = vmatprep.subr.mxu0 0.0
    %767 = vmatpush1.xpose.msra.mxu0 0.0
    %768 = vmatprep.subr.mxu0 0.0
    %769 = vmatpush1.xpose.msra.mxu0 0.0
    %770 = vmatprep.subr.mxu0 0.0
    %771 = vmatpush1.xpose.msra.mxu0 0.0
    %772 = vmatprep.subr.mxu0 0.0
    %773 = vmatpush1.xpose.msra.mxu0 0.0
    %774 = vmatprep.subr.mxu0 0.0
    %775 = vmatpush1.xpose.msra.mxu0 0.0
    %776 = vmatprep.subr.mxu0 0.0
    %777 = vmatpush1.xpose.msra.mxu0 0.0
    %778 = vmatprep.subr.mxu0 0.0
    %779 = vmatpush1.xpose.msra.mxu0 0.0
    %780 = vmatprep.subr.mxu0 0.0
    %781 = vmatpush1.xpose.msra.mxu0 0.0
    %782 = vmatprep.subr.mxu0 0.0
    %783 = vmatpush1.xpose.msra.mxu0 0.0
    %784 = vmatprep.subr.mxu0 0.0
    %785 = vmatpush1.xpose.msra.mxu0 0.0
    %786 = vmatprep.subr.mxu0 0.0
    %787 = vmatpush1.xpose.msra.mxu0 0.0
    %788 = vmatprep.subr.mxu0 0.0
    %789 = vmatpush1.xpose.msra.mxu0 0.0
    %790 = vmatprep.subr.mxu0 0.0
    %791 = vmatpush1.xpose.msra.mxu0 0.0
    %792 = vmatprep.subr.mxu0 0.0
    %793 = vmatpush1.xpose.msra.mxu0 0.0
    %794 = vmatprep.subr.mxu0 0.0
    %795 = vmatpush1.xpose.msra.mxu0 0.0
    %796 = vmatprep.subr.mxu0 0.0
    %797 = vmatpush1.xpose.msra.mxu0 0.0
    %798 = vmatprep.subr.mxu0 0.0
    %799 = vmatpush1.xpose.msra.mxu0 0.0
    %800 = vmatprep.subr.mxu0 0.0
    %801 = vmatpush1.xpose.msra.mxu0 0.0
    %802 = vmatprep.subr.mxu0 0.0
    %803 = vmatpush1.xpose.msra.mxu0 0.0
    %804 = vmatprep.subr.mxu0 0.0
    %805 = vmatpush1.xpose.msra.mxu0 0.0
    %806 = vmatprep.subr.mxu0 0.0
    %807 = vmatpush1.xpose.msra.mxu0 0.0
    %808 = vmatprep.subr.mxu0 0.0
    %809 = vmatpush1.xpose.msra.mxu0 0.0
    %810 = vmatprep.subr.mxu0 0.0
    %811 = vmatpush1.xpose.msra.mxu0 0.0
    %812 = vmatprep.subr.mxu0 0.0
    %813 = vmatpush1.xpose.msra.mxu0 0.0
    %814 = vmatprep.subr.mxu0 0.0
    %815 = vmatpush1.xpose.msra.mxu0 0.0
    %816 = vmatprep.subr.mxu0 0.0
    %817 = vmatpush1.xpose.msra.mxu0 0.0
    %818 = vmatprep.subr.mxu0 0.0
    %819 = vmatpush1.xpose.msra.mxu0 0.0
    %820 = vmatprep.mubr.f32.mxu0 0.0
    %821 = vmatmul.mubr.f32.gmra.mrb[0].mxu0 %v752
    %v822 = vpop.f32.mrb[0].mxu0
    %v823 = vadd.f32 0.0, %v822
    %v824 = vpop.f32.mrb[0].mxu0
    %825 = vdwg.mxu0
    %v826 = vmul.f32 %v823, 0.35355338
    %v827 = vadd.f32 %v826, %v477
    %v828 = vsel %vm609, %v827, -inf
    %829 = vmax.xlane.f32.xlu0 %v828
    %v830 = vpop.xlane.xlu0 %829
    %v831 = vsub.f32 %v827, %v830
    %v832 = vmul.f32 %v831, 1.442695
    %v833 = vpow.pop %v832
    %v834 = vsel %vm609, %v833, 0.0
    %835 = vadd.xlane.f32.xlu0 %v834
    %v836 = vpop.xlane.xlu0 %835
    %v837 = vrcp.pop %v836
    %v838 = vmul.f32 %v833, %v837
    %v839 = vpack.c.bf16 %v838, %v838
    %v840 = vpack.c.bf16 %v603, %v603
    %842 = vrot.lane.b32.xlu0 %v840, 64
    %v843 = vpop.permute.xlu0 %842
    %v845 = vsel %vm609, %v839, 0
    %v848 = vsel %vm705, %v843, 0
    %850 = vmatprep.subr.bf16.mxu0 0
    %851 = vmatpush1.bf16.msra.mxu0 %v848
    %852 = vmatprep.subr.bf16.mxu0 0
    %853 = vmatpush1.bf16.msra.mxu0 0
    %854 = vmatprep.subr.bf16.mxu0 0
    %855 = vmatpush1.bf16.msra.mxu0 0
    %856 = vmatprep.subr.bf16.mxu0 0
    %857 = vmatpush1.bf16.msra.mxu0 0
    %858 = vmatprep.subr.bf16.mxu0 0
    %859 = vmatpush1.bf16.msra.mxu0 0
    %860 = vmatprep.subr.bf16.mxu0 0
    %861 = vmatpush1.bf16.msra.mxu0 0
    %862 = vmatprep.subr.bf16.mxu0 0
    %863 = vmatpush1.bf16.msra.mxu0 0
    %864 = vmatprep.subr.bf16.mxu0 0
    %865 = vmatpush1.bf16.msra.mxu0 0
    %866 = vmatprep.subr.bf16.mxu0 0
    %867 = vmatpush1.bf16.msra.mxu0 0
    %868 = vmatprep.subr.bf16.mxu0 0
    %869 = vmatpush1.bf16.msra.mxu0 0
    %870 = vmatprep.subr.bf16.mxu0 0
    %871 = vmatpush1.bf16.msra.mxu0 0
    %872 = vmatprep.subr.bf16.mxu0 0
    %873 = vmatpush1.bf16.msra.mxu0 0
    %874 = vmatprep.subr.bf16.mxu0 0
    %875 = vmatpush1.bf16.msra.mxu0 0
    %876 = vmatprep.subr.bf16.mxu0 0
    %877 = vmatpush1.bf16.msra.mxu0 0
    %878 = vmatprep.subr.bf16.mxu0 0
    %879 = vmatpush1.bf16.msra.mxu0 0
    %880 = vmatprep.subr.bf16.mxu0 0
    %881 = vmatpush1.bf16.msra.mxu0 0
    %882 = vmatprep.mubr.bf16.mxu0 0
    %883 = vmatmul.mubr.bf16.gmra.mrb[0].mxu0 %v845
    %v884 = vpop.f32.mrb[0].mxu0
    %v885 = vadd.f32 0.0, %v884
    %v886 = vpop.f32.mrb[0].mxu0
    %v887 = vpop.f32.mrb[0].mxu0
    %v888 = vpop.f32.mrb[0].mxu0
    %889 = vdwg.mxu0
    %890 = vrot.lane.b32.xlu0 %v600, 120
    %v891 = vpop.permute.xlu0 %890
    %892 = vrot.lane.b32.xlu0 %v600, 88
    %v893 = vpop.permute.xlu0 %892
    %v894 = vsel %vm609, %v891, 0
    %v896 = vsel %vm609, %v893, 0
    %898 = vmatprep.subr.mxu0 0.0
    %899 = vmatpush1.xpose.msra.mxu0 %v896
    %900 = vmatprep.subr.mxu0 0.0
    %901 = vmatpush1.xpose.msra.mxu0 0.0
    %902 = vmatprep.subr.mxu0 0.0
    %903 = vmatpush1.xpose.msra.mxu0 0.0
    %904 = vmatprep.subr.mxu0 0.0
    %905 = vmatpush1.xpose.msra.mxu0 0.0
    %906 = vmatprep.subr.mxu0 0.0
    %907 = vmatpush1.xpose.msra.mxu0 0.0
    %908 = vmatprep.subr.mxu0 0.0
    %909 = vmatpush1.xpose.msra.mxu0 0.0
    %910 = vmatprep.subr.mxu0 0.0
    %911 = vmatpush1.xpose.msra.mxu0 0.0
    %912 = vmatprep.subr.mxu0 0.0
    %913 = vmatpush1.xpose.msra.mxu0 0.0
    %914 = vmatprep.subr.mxu0 0.0
    %915 = vmatpush1.xpose.msra.mxu0 0.0
    %916 = vmatprep.subr.mxu0 0.0
    %917 = vmatpush1.xpose.msra.mxu0 0.0
    %918 = vmatprep.subr.mxu0 0.0
    %919 = vmatpush1.xpose.msra.mxu0 0.0
    %920 = vmatprep.subr.mxu0 0.0
    %921 = vmatpush1.xpose.msra.mxu0 0.0
    %922 = vmatprep.subr.mxu0 0.0
    %923 = vmatpush1.xpose.msra.mxu0 0.0
    %924 = vmatprep.subr.mxu0 0.0
    %925 = vmatpush1.xpose.msra.mxu0 0.0
    %926 = vmatprep.subr.mxu0 0.0
    %927 = vmatpush1.xpose.msra.mxu0 0.0
    %928 = vmatprep.subr.mxu0 0.0
    %929 = vmatpush1.xpose.msra.mxu0 0.0
    %930 = vmatprep.subr.mxu0 0.0
    %931 = vmatpush1.xpose.msra.mxu0 0.0
    %932 = vmatprep.subr.mxu0 0.0
    %933 = vmatpush1.xpose.msra.mxu0 0.0
    %934 = vmatprep.subr.mxu0 0.0
    %935 = vmatpush1.xpose.msra.mxu0 0.0
    %936 = vmatprep.subr.mxu0 0.0
    %937 = vmatpush1.xpose.msra.mxu0 0.0
    %938 = vmatprep.subr.mxu0 0.0
    %939 = vmatpush1.xpose.msra.mxu0 0.0
    %940 = vmatprep.subr.mxu0 0.0
    %941 = vmatpush1.xpose.msra.mxu0 0.0
    %942 = vmatprep.subr.mxu0 0.0
    %943 = vmatpush1.xpose.msra.mxu0 0.0
    %944 = vmatprep.subr.mxu0 0.0
    %945 = vmatpush1.xpose.msra.mxu0 0.0
    %946 = vmatprep.subr.mxu0 0.0
    %947 = vmatpush1.xpose.msra.mxu0 0.0
    %948 = vmatprep.subr.mxu0 0.0
    %949 = vmatpush1.xpose.msra.mxu0 0.0
    %950 = vmatprep.subr.mxu0 0.0
    %951 = vmatpush1.xpose.msra.mxu0 0.0
    %952 = vmatprep.subr.mxu0 0.0
    %953 = vmatpush1.xpose.msra.mxu0 0.0
    %954 = vmatprep.subr.mxu0 0.0
    %955 = vmatpush1.xpose.msra.mxu0 0.0
    %956 = vmatprep.subr.mxu0 0.0
    %957 = vmatpush1.xpose.msra.mxu0 0.0
    %958 = vmatprep.subr.mxu0 0.0
    %959 = vmatpush1.xpose.msra.mxu0 0.0
    %960 = vmatprep.subr.mxu0 0.0
    %961 = vmatpush1.xpose.msra.mxu0 0.0
    %962 = vmatprep.mubr.f32.mxu0 0.0
    %963 = vmatmul.mubr.f32.gmra.mrb[0].mxu0 %v894
    %v964 = vpop.f32.mrb[0].mxu0
    %v965 = vadd.f32 0.0, %v964
    %v966 = vpop.f32.mrb[0].mxu0
    %967 = vdwg.mxu0
    %v968 = vmul.f32 %v965, 0.35355338
    %v969 = vadd.f32 %v968, %v413
    %v970 = vsel %vm609, %v969, -inf
    %971 = vmax.xlane.f32.xlu0 %v970
    %v972 = vpop.xlane.xlu0 %971
    %v973 = vsub.f32 %v969, %v972
    %v974 = vmul.f32 %v973, 1.442695
    %v975 = vpow.pop %v974
    %v976 = vsel %vm609, %v975, 0.0
    %977 = vadd.xlane.f32.xlu0 %v976
    %v978 = vpop.xlane.xlu0 %977
    %v979 = vrcp.pop %v978
    %v980 = vmul.f32 %v975, %v979
    %v981 = vpack.c.bf16 %v980, %v980
    %982 = vrot.lane.b32.xlu0 %v698, 56
    %v983 = vpop.permute.xlu0 %982
    %v985 = vsel %vm609, %v981, 0
    %v988 = vsel %vm705, %v983, 0
    %990 = vmatprep.subr.bf16.mxu0 0
    %991 = vmatpush1.bf16.msra.mxu0 %v988
    %992 = vmatprep.subr.bf16.mxu0 0
    %993 = vmatpush1.bf16.msra.mxu0 0
    %994 = vmatprep.subr.bf16.mxu0 0
    %995 = vmatpush1.bf16.msra.mxu0 0
    %996 = vmatprep.subr.bf16.mxu0 0
    %997 = vmatpush1.bf16.msra.mxu0 0
    %998 = vmatprep.subr.bf16.mxu0 0
    %999 = vmatpush1.bf16.msra.mxu0 0
    %1000 = vmatprep.subr.bf16.mxu0 0
    %1001 = vmatpush1.bf16.msra.mxu0 0
    %1002 = vmatprep.subr.bf16.mxu0 0
    %1003 = vmatpush1.bf16.msra.mxu0 0
    %1004 = vmatprep.subr.bf16.mxu0 0
    %1005 = vmatpush1.bf16.msra.mxu0 0
    %1006 = vmatprep.subr.bf16.mxu0 0
    %1007 = vmatpush1.bf16.msra.mxu0 0
    %1008 = vmatprep.subr.bf16.mxu0 0
    %1009 = vmatpush1.bf16.msra.mxu0 0
    %1010 = vmatprep.subr.bf16.mxu0 0
    %1011 = vmatpush1.bf16.msra.mxu0 0
    %1012 = vmatprep.subr.bf16.mxu0 0
    %1013 = vmatpush1.bf16.msra.mxu0 0
    %1014 = vmatprep.subr.bf16.mxu0 0
    %1015 = vmatpush1.bf16.msra.mxu0 0
    %1016 = vmatprep.subr.bf16.mxu0 0
    %1017 = vmatpush1.bf16.msra.mxu0 0
    %1018 = vmatprep.subr.bf16.mxu0 0
    %1019 = vmatpush1.bf16.msra.mxu0 0
    %1020 = vmatprep.subr.bf16.mxu0 0
    %1021 = vmatpush1.bf16.msra.mxu0 0
    %1022 = vmatprep.mubr.bf16.mxu0 0
    %1023 = vmatmul.mubr.bf16.gmra.mrb[0].mxu0 %v985
    %v1024 = vpop.f32.mrb[0].mxu0
    %v1025 = vadd.f32 0.0, %v1024
    %v1026 = vpop.f32.mrb[0].mxu0
    %v1027 = vpop.f32.mrb[0].mxu0
    %v1028 = vpop.f32.mrb[0].mxu0
    %1029 = vdwg.mxu0
    %1030 = vrot.lane.b32.xlu0 %v603, 120
    %v1031 = vpop.permute.xlu0 %1030
    %1032 = vrot.lane.b32.xlu0 %v603, 88
    %v1033 = vpop.permute.xlu0 %1032
    %v1034 = vsel %vm609, %v1031, 0
    %v1036 = vsel %vm609, %v1033, 0
    %1038 = vmatprep.subr.mxu0 0.0
    %1039 = vmatpush1.xpose.msra.mxu0 %v1036
    %1040 = vmatprep.subr.mxu0 0.0
    %1041 = vmatpush1.xpose.msra.mxu0 0.0
    %1042 = vmatprep.subr.mxu0 0.0
    %1043 = vmatpush1.xpose.msra.mxu0 0.0
    %1044 = vmatprep.subr.mxu0 0.0
    %1045 = vmatpush1.xpose.msra.mxu0 0.0
    %1046 = vmatprep.subr.mxu0 0.0
    %1047 = vmatpush1.xpose.msra.mxu0 0.0
    %1048 = vmatprep.subr.mxu0 0.0
    %1049 = vmatpush1.xpose.msra.mxu0 0.0
    %1050 = vmatprep.subr.mxu0 0.0
    %1051 = vmatpush1.xpose.msra.mxu0 0.0
    %1052 = vmatprep.subr.mxu0 0.0
    %1053 = vmatpush1.xpose.msra.mxu0 0.0
    %1054 = vmatprep.subr.mxu0 0.0
    %1055 = vmatpush1.xpose.msra.mxu0 0.0
    %1056 = vmatprep.subr.mxu0 0.0
    %1057 = vmatpush1.xpose.msra.mxu0 0.0
    %1058 = vmatprep.subr.mxu0 0.0
    %1059 = vmatpush1.xpose.msra.mxu0 0.0
    %1060 = vmatprep.subr.mxu0 0.0
    %1061 = vmatpush1.xpose.msra.mxu0 0.0
    %1062 = vmatprep.subr.mxu0 0.0
    %1063 = vmatpush1.xpose.msra.mxu0 0.0
    %1064 = vmatprep.subr.mxu0 0.0
    %1065 = vmatpush1.xpose.msra.mxu0 0.0
    %1066 = vmatprep.subr.mxu0 0.0
    %1067 = vmatpush1.xpose.msra.mxu0 0.0
    %1068 = vmatprep.subr.mxu0 0.0
    %1069 = vmatpush1.xpose.msra.mxu0 0.0
    %1070 = vmatprep.subr.mxu0 0.0
    %1071 = vmatpush1.xpose.msra.mxu0 0.0
    %1072 = vmatprep.subr.mxu0 0.0
    %1073 = vmatpush1.xpose.msra.mxu0 0.0
    %1074 = vmatprep.subr.mxu0 0.0
    %1075 = vmatpush1.xpose.msra.mxu0 0.0
    %1076 = vmatprep.subr.mxu0 0.0
    %1077 = vmatpush1.xpose.msra.mxu0 0.0
    %1078 = vmatprep.subr.mxu0 0.0
    %1079 = vmatpush1.xpose.msra.mxu0 0.0
    %1080 = vmatprep.subr.mxu0 0.0
    %1081 = vmatpush1.xpose.msra.mxu0 0.0
    %1082 = vmatprep.subr.mxu0 0.0
    %1083 = vmatpush1.xpose.msra.mxu0 0.0
    %1084 = vmatprep.subr.mxu0 0.0
    %1085 = vmatpush1.xpose.msra.mxu0 0.0
    %1086 = vmatprep.subr.mxu0 0.0
    %1087 = vmatpush1.xpose.msra.mxu0 0.0
    %1088 = vmatprep.subr.mxu0 0.0
    %1089 = vmatpush1.xpose.msra.mxu0 0.0
    %1090 = vmatprep.subr.mxu0 0.0
    %1091 = vmatpush1.xpose.msra.mxu0 0.0
    %1092 = vmatprep.subr.mxu0 0.0
    %1093 = vmatpush1.xpose.msra.mxu0 0.0
    %1094 = vmatprep.subr.mxu0 0.0
    %1095 = vmatpush1.xpose.msra.mxu0 0.0
    %1096 = vmatprep.subr.mxu0 0.0
    %1097 = vmatpush1.xpose.msra.mxu0 0.0
    %1098 = vmatprep.subr.mxu0 0.0
    %1099 = vmatpush1.xpose.msra.mxu0 0.0
    %1100 = vmatprep.subr.mxu0 0.0
    %1101 = vmatpush1.xpose.msra.mxu0 0.0
    %1102 = vmatprep.mubr.f32.mxu0 0.0
    %1103 = vmatmul.mubr.f32.gmra.mrb[0].mxu0 %v1034
    %v1104 = vpop.f32.mrb[0].mxu0
    %v1105 = vadd.f32 0.0, %v1104
    %v1106 = vpop.f32.mrb[0].mxu0
    %1107 = vdwg.mxu0
    %v1108 = vmul.f32 %v1105, 0.35355338
    %v1109 = vadd.f32 %v1108, %v477
    %v1110 = vsel %vm609, %v1109, -inf
    %1111 = vmax.xlane.f32.xlu0 %v1110
    %v1112 = vpop.xlane.xlu0 %1111
    %v1113 = vsub.f32 %v1109, %v1112
    %v1114 = vmul.f32 %v1113, 1.442695
    %v1115 = vpow.pop %v1114
    %v1116 = vsel %vm609, %v1115, 0.0
    %1117 = vadd.xlane.f32.xlu0 %v1116
    %v1118 = vpop.xlane.xlu0 %1117
    %v1119 = vrcp.pop %v1118
    %v1120 = vmul.f32 %v1115, %v1119
    %v1121 = vpack.c.bf16 %v1120, %v1120
    %1122 = vrot.lane.b32.xlu0 %v840, 56
    %v1123 = vpop.permute.xlu0 %1122
    %v1125 = vsel %vm609, %v1121, 0
    %v1128 = vsel %vm705, %v1123, 0
    %1130 = vmatprep.subr.bf16.mxu0 0
    %1131 = vmatpush1.bf16.msra.mxu0 %v1128
    %1132 = vmatprep.subr.bf16.mxu0 0
    %1133 = vmatpush1.bf16.msra.mxu0 0
    %1134 = vmatprep.subr.bf16.mxu0 0
    %1135 = vmatpush1.bf16.msra.mxu0 0
    %1136 = vmatprep.subr.bf16.mxu0 0
    %1137 = vmatpush1.bf16.msra.mxu0 0
    %1138 = vmatprep.subr.bf16.mxu0 0
    %1139 = vmatpush1.bf16.msra.mxu0 0
    %1140 = vmatprep.subr.bf16.mxu0 0
    %1141 = vmatpush1.bf16.msra.mxu0 0
    %1142 = vmatprep.subr.bf16.mxu0 0
    %1143 = vmatpush1.bf16.msra.mxu0 0
    %1144 = vmatprep.subr.bf16.mxu0 0
    %1145 = vmatpush1.bf16.msra.mxu0 0
    %1146 = vmatprep.subr.bf16.mxu0 0
    %1147 = vmatpush1.bf16.msra.mxu0 0
    %1148 = vmatprep.subr.bf16.mxu0 0
    %1149 = vmatpush1.bf16.msra.mxu0 0
    %1150 = vmatprep.subr.bf16.mxu0 0
    %1151 = vmatpush1.bf16.msra.mxu0 0
    %1152 = vmatprep.subr.bf16.mxu0 0
    %1153 = vmatpush1.bf16.msra.mxu0 0
    %1154 = vmatprep.subr.bf16.mxu0 0
    %1155 = vmatpush1.bf16.msra.mxu0 0
    %1156 = vmatprep.subr.bf16.mxu0 0
    %1157 = vmatpush1.bf16.msra.mxu0 0
    %1158 = vmatprep.subr.bf16.mxu0 0
    %1159 = vmatpush1.bf16.msra.mxu0 0
    %1160 = vmatprep.subr.bf16.mxu0 0
    %1161 = vmatpush1.bf16.msra.mxu0 0
    %1162 = vmatprep.mubr.bf16.mxu0 0
    %1163 = vmatmul.mubr.bf16.gmra.mrb[0].mxu0 %v1125
    %v1164 = vpop.f32.mrb[0].mxu0
    %v1165 = vadd.f32 0.0, %v1164
    %v1166 = vpop.f32.mrb[0].mxu0
    %v1167 = vpop.f32.mrb[0].mxu0
    %v1168 = vpop.f32.mrb[0].mxu0
    %1169 = vdwg.mxu0
    %1170 = vrot.lane.b32.xlu0 %v600, 112
    %v1171 = vpop.permute.xlu0 %1170
    %1172 = vrot.lane.b32.xlu0 %v600, 80
    %v1173 = vpop.permute.xlu0 %1172
    %v1174 = vsel %vm609, %v1171, 0
    %v1176 = vsel %vm609, %v1173, 0
    %1178 = vmatprep.subr.mxu0 0.0
    %1179 = vmatpush1.xpose.msra.mxu0 %v1176
    %1180 = vmatprep.subr.mxu0 0.0
    %1181 = vmatpush1.xpose.msra.mxu0 0.0
    %1182 = vmatprep.subr.mxu0 0.0
    %1183 = vmatpush1.xpose.msra.mxu0 0.0
    %1184 = vmatprep.subr.mxu0 0.0
    %1185 = vmatpush1.xpose.msra.mxu0 0.0
    %1186 = vmatprep.subr.mxu0 0.0
    %1187 = vmatpush1.xpose.msra.mxu0 0.0
    %1188 = vmatprep.subr.mxu0 0.0
    %1189 = vmatpush1.xpose.msra.mxu0 0.0
    %1190 = vmatprep.subr.mxu0 0.0
    %1191 = vmatpush1.xpose.msra.mxu0 0.0
    %1192 = vmatprep.subr.mxu0 0.0
    %1193 = vmatpush1.xpose.msra.mxu0 0.0
    %1194 = vmatprep.subr.mxu0 0.0
    %1195 = vmatpush1.xpose.msra.mxu0 0.0
    %1196 = vmatprep.subr.mxu0 0.0
    %1197 = vmatpush1.xpose.msra.mxu0 0.0
    %1198 = vmatprep.subr.mxu0 0.0
    %1199 = vmatpush1.xpose.msra.mxu0 0.0
    %1200 = vmatprep.subr.mxu0 0.0
    %1201 = vmatpush1.xpose.msra.mxu0 0.0
    %1202 = vmatprep.subr.mxu0 0.0
    %1203 = vmatpush1.xpose.msra.mxu0 0.0
    %1204 = vmatprep.subr.mxu0 0.0
    %1205 = vmatpush1.xpose.msra.mxu0 0.0
    %1206 = vmatprep.subr.mxu0 0.0
    %1207 = vmatpush1.xpose.msra.mxu0 0.0
    %1208 = vmatprep.subr.mxu0 0.0
    %1209 = vmatpush1.xpose.msra.mxu0 0.0
    %1210 = vmatprep.subr.mxu0 0.0
    %1211 = vmatpush1.xpose.msra.mxu0 0.0
    %1212 = vmatprep.subr.mxu0 0.0
    %1213 = vmatpush1.xpose.msra.mxu0 0.0
    %1214 = vmatprep.subr.mxu0 0.0
    %1215 = vmatpush1.xpose.msra.mxu0 0.0
    %1216 = vmatprep.subr.mxu0 0.0
    %1217 = vmatpush1.xpose.msra.mxu0 0.0
    %1218 = vmatprep.subr.mxu0 0.0
    %1219 = vmatpush1.xpose.msra.mxu0 0.0
    %1220 = vmatprep.subr.mxu0 0.0
    %1221 = vmatpush1.xpose.msra.mxu0 0.0
    %1222 = vmatprep.subr.mxu0 0.0
    %1223 = vmatpush1.xpose.msra.mxu0 0.0
    %1224 = vmatprep.subr.mxu0 0.0
    %1225 = vmatpush1.xpose.msra.mxu0 0.0
    %1226 = vmatprep.subr.mxu0 0.0
    %1227 = vmatpush1.xpose.msra.mxu0 0.0
    %1228 = vmatprep.subr.mxu0 0.0
    %1229 = vmatpush1.xpose.msra.mxu0 0.0
    %1230 = vmatprep.subr.mxu0 0.0
    %1231 = vmatpush1.xpose.msra.mxu0 0.0
    %1232 = vmatprep.subr.mxu0 0.0
    %1233 = vmatpush1.xpose.msra.mxu0 0.0
    %1234 = vmatprep.subr.mxu0 0.0
    %1235 = vmatpush1.xpose.msra.mxu0 0.0
    %1236 = vmatprep.subr.mxu0 0.0
    %1237 = vmatpush1.xpose.msra.mxu0 0.0
    %1238 = vmatprep.subr.mxu0 0.0
    %1239 = vmatpush1.xpose.msra.mxu0 0.0
    %1240 = vmatprep.subr.mxu0 0.0
    %1241 = vmatpush1.xpose.msra.mxu0 0.0
    %1242 = vmatprep.mubr.f32.mxu0 0.0
    %1243 = vmatmul.mubr.f32.gmra.mrb[0].mxu0 %v1174
    %v1244 = vpop.f32.mrb[0].mxu0
    %v1245 = vadd.f32 0.0, %v1244
    %v1246 = vpop.f32.mrb[0].mxu0
    %1247 = vdwg.mxu0
    %v1248 = vmul.f32 %v1245, 0.35355338
    %v1249 = vadd.f32 %v1248, %v413
    %v1250 = vsel %vm609, %v1249, -inf
    %1251 = vmax.xlane.f32.xlu0 %v1250
    %v1252 = vpop.xlane.xlu0 %1251
    %v1253 = vsub.f32 %v1249, %v1252
    %v1254 = vmul.f32 %v1253, 1.442695
    %v1255 = vpow.pop %v1254
    %v1256 = vsel %vm609, %v1255, 0.0
    %1257 = vadd.xlane.f32.xlu0 %v1256
    %v1258 = vpop.xlane.xlu0 %1257
    %v1259 = vrcp.pop %v1258
    %v1260 = vmul.f32 %v1255, %v1259
    %v1261 = vpack.c.bf16 %v1260, %v1260
    %1262 = vrot.lane.b32.xlu0 %v698, 48
    %v1263 = vpop.permute.xlu0 %1262
    %v1265 = vsel %vm609, %v1261, 0
    %v1268 = vsel %vm705, %v1263, 0
    %1270 = vmatprep.subr.bf16.mxu0 0
    %1271 = vmatpush1.bf16.msra.mxu0 %v1268
    %1272 = vmatprep.subr.bf16.mxu0 0
    %1273 = vmatpush1.bf16.msra.mxu0 0
    %1274 = vmatprep.subr.bf16.mxu0 0
    %1275 = vmatpush1.bf16.msra.mxu0 0
    %1276 = vmatprep.subr.bf16.mxu0 0
    %1277 = vmatpush1.bf16.msra.mxu0 0
    %1278 = vmatprep.subr.bf16.mxu0 0
    %1279 = vmatpush1.bf16.msra.mxu0 0
    %1280 = vmatprep.subr.bf16.mxu0 0
    %1281 = vmatpush1.bf16.msra.mxu0 0
    %1282 = vmatprep.subr.bf16.mxu0 0
    %1283 = vmatpush1.bf16.msra.mxu0 0
    %1284 = vmatprep.subr.bf16.mxu0 0
    %1285 = vmatpush1.bf16.msra.mxu0 0
    %1286 = vmatprep.subr.bf16.mxu0 0
    %1287 = vmatpush1.bf16.msra.mxu0 0
    %1288 = vmatprep.subr.bf16.mxu0 0
    %1289 = vmatpush1.bf16.msra.mxu0 0
    %1290 = vmatprep.subr.bf16.mxu0 0
    %1291 = vmatpush1.bf16.msra.mxu0 0
    %1292 = vmatprep.subr.bf16.mxu0 0
    %1293 = vmatpush1.bf16.msra.mxu0 0
    %1294 = vmatprep.subr.bf16.mxu0 0
    %1295 = vmatpush1.bf16.msra.mxu0 0
    %1296 = vmatprep.subr.bf16.mxu0 0
    %1297 = vmatpush1.bf16.msra.mxu0 0
    %1298 = vmatprep.subr.bf16.mxu0 0
    %1299 = vmatpush1.bf16.msra.mxu0 0
    %1300 = vmatprep.subr.bf16.mxu0 0
    %1301 = vmatpush1.bf16.msra.mxu0 0
    %1302 = vmatprep.mubr.bf16.mxu0 0
    %1303 = vmatmul.mubr.bf16.gmra.mrb[0].mxu0 %v1265
    %v1304 = vpop.f32.mrb[0].mxu0
    %v1305 = vadd.f32 0.0, %v1304
    %v1306 = vpop.f32.mrb[0].mxu0
    %v1307 = vpop.f32.mrb[0].mxu0
    %v1308 = vpop.f32.mrb[0].mxu0
    %1309 = vdwg.mxu0
    %1310 = vrot.lane.b32.xlu0 %v603, 112
    %v1311 = vpop.permute.xlu0 %1310
    %1312 = vrot.lane.b32.xlu0 %v603, 80
    %v1313 = vpop.permute.xlu0 %1312
    %v1314 = vsel %vm609, %v1311, 0
    %v1316 = vsel %vm609, %v1313, 0
    %1318 = vmatprep.subr.mxu0 0.0
    %1319 = vmatpush1.xpose.msra.mxu0 %v1316
    %1320 = vmatprep.subr.mxu0 0.0
    %1321 = vmatpush1.xpose.msra.mxu0 0.0
    %1322 = vmatprep.subr.mxu0 0.0
    %1323 = vmatpush1.xpose.msra.mxu0 0.0
    %1324 = vmatprep.subr.mxu0 0.0
    %1325 = vmatpush1.xpose.msra.mxu0 0.0
    %1326 = vmatprep.subr.mxu0 0.0
    %1327 = vmatpush1.xpose.msra.mxu0 0.0
    %1328 = vmatprep.subr.mxu0 0.0
    %1329 = vmatpush1.xpose.msra.mxu0 0.0
    %1330 = vmatprep.subr.mxu0 0.0
    %1331 = vmatpush1.xpose.msra.mxu0 0.0
    %1332 = vmatprep.subr.mxu0 0.0
    %1333 = vmatpush1.xpose.msra.mxu0 0.0
    %1334 = vmatprep.subr.mxu0 0.0
    %1335 = vmatpush1.xpose.msra.mxu0 0.0
    %1336 = vmatprep.subr.mxu0 0.0
    %1337 = vmatpush1.xpose.msra.mxu0 0.0
    %1338 = vmatprep.subr.mxu0 0.0
    %1339 = vmatpush1.xpose.msra.mxu0 0.0
    %1340 = vmatprep.subr.mxu0 0.0
    %1341 = vmatpush1.xpose.msra.mxu0 0.0
    %1342 = vmatprep.subr.mxu0 0.0
    %1343 = vmatpush1.xpose.msra.mxu0 0.0
    %1344 = vmatprep.subr.mxu0 0.0
    %1345 = vmatpush1.xpose.msra.mxu0 0.0
    %1346 = vmatprep.subr.mxu0 0.0
    %1347 = vmatpush1.xpose.msra.mxu0 0.0
    %1348 = vmatprep.subr.mxu0 0.0
    %1349 = vmatpush1.xpose.msra.mxu0 0.0
    %1350 = vmatprep.subr.mxu0 0.0
    %1351 = vmatpush1.xpose.msra.mxu0 0.0
    %1352 = vmatprep.subr.mxu0 0.0
    %1353 = vmatpush1.xpose.msra.mxu0 0.0
    %1354 = vmatprep.subr.mxu0 0.0
    %1355 = vmatpush1.xpose.msra.mxu0 0.0
    %1356 = vmatprep.subr.mxu0 0.0
    %1357 = vmatpush1.xpose.msra.mxu0 0.0
    %1358 = vmatprep.subr.mxu0 0.0
    %1359 = vmatpush1.xpose.msra.mxu0 0.0
    %1360 = vmatprep.subr.mxu0 0.0
    %1361 = vmatpush1.xpose.msra.mxu0 0.0
    %1362 = vmatprep.subr.mxu0 0.0
    %1363 = vmatpush1.xpose.msra.mxu0 0.0
    %1364 = vmatprep.subr.mxu0 0.0
    %1365 = vmatpush1.xpose.msra.mxu0 0.0
    %1366 = vmatprep.subr.mxu0 0.0
    %1367 = vmatpush1.xpose.msra.mxu0 0.0
    %1368 = vmatprep.subr.mxu0 0.0
    %1369 = vmatpush1.xpose.msra.mxu0 0.0
    %1370 = vmatprep.subr.mxu0 0.0
    %1371 = vmatpush1.xpose.msra.mxu0 0.0
    %1372 = vmatprep.subr.mxu0 0.0
    %1373 = vmatpush1.xpose.msra.mxu0 0.0
    %1374 = vmatprep.subr.mxu0 0.0
    %1375 = vmatpush1.xpose.msra.mxu0 0.0
    %1376 = vmatprep.subr.mxu0 0.0
    %1377 = vmatpush1.xpose.msra.mxu0 0.0
    %1378 = vmatprep.subr.mxu0 0.0
    %1379 = vmatpush1.xpose.msra.mxu0 0.0
    %1380 = vmatprep.subr.mxu0 0.0
    %1381 = vmatpush1.xpose.msra.mxu0 0.0
    %1382 = vmatprep.mubr.f32.mxu0 0.0
    %1383 = vmatmul.mubr.f32.gmra.mrb[0].mxu0 %v1314
    %v1384 = vpop.f32.mrb[0].mxu0
    %v1385 = vadd.f32 0.0, %v1384
    %v1386 = vpop.f32.mrb[0].mxu0
    %1387 = vdwg.mxu0
    %v1388 = vmul.f32 %v1385, 0.35355338
    %v1389 = vadd.f32 %v1388, %v477
    %v1390 = vsel %vm609, %v1389, -inf
    %1391 = vmax.xlane.f32.xlu0 %v1390
    %v1392 = vpop.xlane.xlu0 %1391
    %v1393 = vsub.f32 %v1389, %v1392
    %v1394 = vmul.f32 %v1393, 1.442695
    %v1395 = vpow.pop %v1394
    %v1396 = vsel %vm609, %v1395, 0.0
    %1397 = vadd.xlane.f32.xlu0 %v1396
    %v1398 = vpop.xlane.xlu0 %1397
    %v1399 = vrcp.pop %v1398
    %v1400 = vmul.f32 %v1395, %v1399
    %v1401 = vpack.c.bf16 %v1400, %v1400
    %1402 = vrot.lane.b32.xlu0 %v840, 48
    %v1403 = vpop.permute.xlu0 %1402
    %v1405 = vsel %vm609, %v1401, 0
    %v1408 = vsel %vm705, %v1403, 0
    %1410 = vmatprep.subr.bf16.mxu0 0
    %1411 = vmatpush1.bf16.msra.mxu0 %v1408
    %1412 = vmatprep.subr.bf16.mxu0 0
    %1413 = vmatpush1.bf16.msra.mxu0 0
    %1414 = vmatprep.subr.bf16.mxu0 0
    %1415 = vmatpush1.bf16.msra.mxu0 0
    %1416 = vmatprep.subr.bf16.mxu0 0
    %1417 = vmatpush1.bf16.msra.mxu0 0
    %1418 = vmatprep.subr.bf16.mxu0 0
    %1419 = vmatpush1.bf16.msra.mxu0 0
    %1420 = vmatprep.subr.bf16.mxu0 0
    %1421 = vmatpush1.bf16.msra.mxu0 0
    %1422 = vmatprep.subr.bf16.mxu0 0
    %1423 = vmatpush1.bf16.msra.mxu0 0
    %1424 = vmatprep.subr.bf16.mxu0 0
    %1425 = vmatpush1.bf16.msra.mxu0 0
    %1426 = vmatprep.subr.bf16.mxu0 0
    %1427 = vmatpush1.bf16.msra.mxu0 0
    %1428 = vmatprep.subr.bf16.mxu0 0
    %1429 = vmatpush1.bf16.msra.mxu0 0
    %1430 = vmatprep.subr.bf16.mxu0 0
    %1431 = vmatpush1.bf16.msra.mxu0 0
    %1432 = vmatprep.subr.bf16.mxu0 0
    %1433 = vmatpush1.bf16.msra.mxu0 0
    %1434 = vmatprep.subr.bf16.mxu0 0
    %1435 = vmatpush1.bf16.msra.mxu0 0
    %1436 = vmatprep.subr.bf16.mxu0 0
    %1437 = vmatpush1.bf16.msra.mxu0 0
    %1438 = vmatprep.subr.bf16.mxu0 0
    %1439 = vmatpush1.bf16.msra.mxu0 0
    %1440 = vmatprep.subr.bf16.mxu0 0
    %1441 = vmatpush1.bf16.msra.mxu0 0
    %1442 = vmatprep.mubr.bf16.mxu0 0
    %1443 = vmatmul.mubr.bf16.gmra.mrb[0].mxu0 %v1405
    %v1444 = vpop.f32.mrb[0].mxu0
    %v1445 = vadd.f32 0.0, %v1444
    %v1446 = vpop.f32.mrb[0].mxu0
    %v1447 = vpop.f32.mrb[0].mxu0
    %v1448 = vpop.f32.mrb[0].mxu0
    %1449 = vdwg.mxu0
    %1450 = vrot.lane.b32.xlu0 %v600, 104
    %v1451 = vpop.permute.xlu0 %1450
    %1452 = vrot.lane.b32.xlu0 %v600, 72
    %v1453 = vpop.permute.xlu0 %1452
    %v1454 = vsel %vm609, %v1451, 0
    %v1456 = vsel %vm609, %v1453, 0
    %1458 = vmatprep.subr.mxu0 0.0
    %1459 = vmatpush1.xpose.msra.mxu0 %v1456
    %1460 = vmatprep.subr.mxu0 0.0
    %1461 = vmatpush1.xpose.msra.mxu0 0.0
    %1462 = vmatprep.subr.mxu0 0.0
    %1463 = vmatpush1.xpose.msra.mxu0 0.0
    %1464 = vmatprep.subr.mxu0 0.0
    %1465 = vmatpush1.xpose.msra.mxu0 0.0
    %1466 = vmatprep.subr.mxu0 0.0
    %1467 = vmatpush1.xpose.msra.mxu0 0.0
    %1468 = vmatprep.subr.mxu0 0.0
    %1469 = vmatpush1.xpose.msra.mxu0 0.0
    %1470 = vmatprep.subr.mxu0 0.0
    %1471 = vmatpush1.xpose.msra.mxu0 0.0
    %1472 = vmatprep.subr.mxu0 0.0
    %1473 = vmatpush1.xpose.msra.mxu0 0.0
    %1474 = vmatprep.subr.mxu0 0.0
    %1475 = vmatpush1.xpose.msra.mxu0 0.0
    %1476 = vmatprep.subr.mxu0 0.0
    %1477 = vmatpush1.xpose.msra.mxu0 0.0
    %1478 = vmatprep.subr.mxu0 0.0
    %1479 = vmatpush1.xpose.msra.mxu0 0.0
    %1480 = vmatprep.subr.mxu0 0.0
    %1481 = vmatpush1.xpose.msra.mxu0 0.0
    %1482 = vmatprep.subr.mxu0 0.0
    %1483 = vmatpush1.xpose.msra.mxu0 0.0
    %1484 = vmatprep.subr.mxu0 0.0
    %1485 = vmatpush1.xpose.msra.mxu0 0.0
    %1486 = vmatprep.subr.mxu0 0.0
    %1487 = vmatpush1.xpose.msra.mxu0 0.0
    %1488 = vmatprep.subr.mxu0 0.0
    %1489 = vmatpush1.xpose.msra.mxu0 0.0
    %1490 = vmatprep.subr.mxu0 0.0
    %1491 = vmatpush1.xpose.msra.mxu0 0.0
    %1492 = vmatprep.subr.mxu0 0.0
    %1493 = vmatpush1.xpose.msra.mxu0 0.0
    %1494 = vmatprep.subr.mxu0 0.0
    %1495 = vmatpush1.xpose.msra.mxu0 0.0
    %1496 = vmatprep.subr.mxu0 0.0
    %1497 = vmatpush1.xpose.msra.mxu0 0.0
    %1498 = vmatprep.subr.mxu0 0.0
    %1499 = vmatpush1.xpose.msra.mxu0 0.0
    %1500 = vmatprep.subr.mxu0 0.0
    %1501 = vmatpush1.xpose.msra.mxu0 0.0
    %1502 = vmatprep.subr.mxu0 0.0
    %1503 = vmatpush1.xpose.msra.mxu0 0.0
    %1504 = vmatprep.subr.mxu0 0.0
    %1505 = vmatpush1.xpose.msra.mxu0 0.0
    %1506 = vmatprep.subr.mxu0 0.0
    %1507 = vmatpush1.xpose.msra.mxu0 0.0
    %1508 = vmatprep.subr.mxu0 0.0
    %1509 = vmatpush1.xpose.msra.mxu0 0.0
    %1510 = vmatprep.subr.mxu0 0.0
    %1511 = vmatpush1.xpose.msra.mxu0 0.0
    %1512 = vmatprep.subr.mxu0 0.0
    %1513 = vmatpush1.xpose.msra.mxu0 0.0
    %1514 = vmatprep.subr.mxu0 0.0
    %1515 = vmatpush1.xpose.msra.mxu0 0.0
    %1516 = vmatprep.subr.mxu0 0.0
    %1517 = vmatpush1.xpose.msra.mxu0 0.0
    %1518 = vmatprep.subr.mxu0 0.0
    %1519 = vmatpush1.xpose.msra.mxu0 0.0
    %1520 = vmatprep.subr.mxu0 0.0
    %1521 = vmatpush1.xpose.msra.mxu0 0.0
    %1522 = vmatprep.mubr.f32.mxu0 0.0
    %1523 = vmatmul.mubr.f32.gmra.mrb[0].mxu0 %v1454
    %v1524 = vpop.f32.mrb[0].mxu0
    %v1525 = vadd.f32 0.0, %v1524
    %v1526 = vpop.f32.mrb[0].mxu0
    %1527 = vdwg.mxu0
    %v1528 = vmul.f32 %v1525, 0.35355338
    %v1529 = vadd.f32 %v1528, %v413
    %v1530 = vsel %vm609, %v1529, -inf
    %1531 = vmax.xlane.f32.xlu0 %v1530
    %v1532 = vpop.xlane.xlu0 %1531
    %v1533 = vsub.f32 %v1529, %v1532
    %v1534 = vmul.f32 %v1533, 1.442695
    %v1535 = vpow.pop %v1534
    %v1536 = vsel %vm609, %v1535, 0.0
    %1537 = vadd.xlane.f32.xlu0 %v1536
    %v1538 = vpop.xlane.xlu0 %1537
    %v1539 = vrcp.pop %v1538
    %v1540 = vmul.f32 %v1535, %v1539
    %v1541 = vpack.c.bf16 %v1540, %v1540
    %1542 = vrot.lane.b32.xlu0 %v698, 40
    %v1543 = vpop.permute.xlu0 %1542
    %v1545 = vsel %vm609, %v1541, 0
    %v1548 = vsel %vm705, %v1543, 0
    %1550 = vmatprep.subr.bf16.mxu0 0
    %1551 = vmatpush1.bf16.msra.mxu0 %v1548
    %1552 = vmatprep.subr.bf16.mxu0 0
    %1553 = vmatpush1.bf16.msra.mxu0 0
    %1554 = vmatprep.subr.bf16.mxu0 0
    %1555 = vmatpush1.bf16.msra.mxu0 0
    %1556 = vmatprep.subr.bf16.mxu0 0
    %1557 = vmatpush1.bf16.msra.mxu0 0
    %1558 = vmatprep.subr.bf16.mxu0 0
    %1559 = vmatpush1.bf16.msra.mxu0 0
    %1560 = vmatprep.subr.bf16.mxu0 0
    %1561 = vmatpush1.bf16.msra.mxu0 0
    %1562 = vmatprep.subr.bf16.mxu0 0
    %1563 = vmatpush1.bf16.msra.mxu0 0
    %1564 = vmatprep.subr.bf16.mxu0 0
    %1565 = vmatpush1.bf16.msra.mxu0 0
    %1566 = vmatprep.subr.bf16.mxu0 0
    %1567 = vmatpush1.bf16.msra.mxu0 0
    %1568 = vmatprep.subr.bf16.mxu0 0
    %1569 = vmatpush1.bf16.msra.mxu0 0
    %1570 = vmatprep.subr.bf16.mxu0 0
    %1571 = vmatpush1.bf16.msra.mxu0 0
    %1572 = vmatprep.subr.bf16.mxu0 0
    %1573 = vmatpush1.bf16.msra.mxu0 0
    %1574 = vmatprep.subr.bf16.mxu0 0
    %1575 = vmatpush1.bf16.msra.mxu0 0
    %1576 = vmatprep.subr.bf16.mxu0 0
    %1577 = vmatpush1.bf16.msra.mxu0 0
    %1578 = vmatprep.subr.bf16.mxu0 0
    %1579 = vmatpush1.bf16.msra.mxu0 0
    %1580 = vmatprep.subr.bf16.mxu0 0
    %1581 = vmatpush1.bf16.msra.mxu0 0
    %1582 = vmatprep.mubr.bf16.mxu0 0
    %1583 = vmatmul.mubr.bf16.gmra.mrb[0].mxu0 %v1545
    %v1584 = vpop.f32.mrb[0].mxu0
    %v1585 = vadd.f32 0.0, %v1584
    %v1586 = vpop.f32.mrb[0].mxu0
    %v1587 = vpop.f32.mrb[0].mxu0
    %v1588 = vpop.f32.mrb[0].mxu0
    %1589 = vdwg.mxu0
    %1590 = vrot.lane.b32.xlu0 %v603, 104
    %v1591 = vpop.permute.xlu0 %1590
    %1592 = vrot.lane.b32.xlu0 %v603, 72
    %v1593 = vpop.permute.xlu0 %1592
    %v1594 = vsel %vm609, %v1591, 0
    %v1596 = vsel %vm609, %v1593, 0
    %1598 = vmatprep.subr.mxu0 0.0
    %1599 = vmatpush1.xpose.msra.mxu0 %v1596
    %1600 = vmatprep.subr.mxu0 0.0
    %1601 = vmatpush1.xpose.msra.mxu0 0.0
    %1602 = vmatprep.subr.mxu0 0.0
    %1603 = vmatpush1.xpose.msra.mxu0 0.0
    %1604 = vmatprep.subr.mxu0 0.0
    %1605 = vmatpush1.xpose.msra.mxu0 0.0
    %1606 = vmatprep.subr.mxu0 0.0
    %1607 = vmatpush1.xpose.msra.mxu0 0.0
    %1608 = vmatprep.subr.mxu0 0.0
    %1609 = vmatpush1.xpose.msra.mxu0 0.0
    %1610 = vmatprep.subr.mxu0 0.0
    %1611 = vmatpush1.xpose.msra.mxu0 0.0
    %1612 = vmatprep.subr.mxu0 0.0
    %1613 = vmatpush1.xpose.msra.mxu0 0.0
    %1614 = vmatprep.subr.mxu0 0.0
    %1615 = vmatpush1.xpose.msra.mxu0 0.0
    %1616 = vmatprep.subr.mxu0 0.0
    %1617 = vmatpush1.xpose.msra.mxu0 0.0
    %1618 = vmatprep.subr.mxu0 0.0
    %1619 = vmatpush1.xpose.msra.mxu0 0.0
    %1620 = vmatprep.subr.mxu0 0.0
    %1621 = vmatpush1.xpose.msra.mxu0 0.0
    %1622 = vmatprep.subr.mxu0 0.0
    %1623 = vmatpush1.xpose.msra.mxu0 0.0
    %1624 = vmatprep.subr.mxu0 0.0
    %1625 = vmatpush1.xpose.msra.mxu0 0.0
    %1626 = vmatprep.subr.mxu0 0.0
    %1627 = vmatpush1.xpose.msra.mxu0 0.0
    %1628 = vmatprep.subr.mxu0 0.0
    %1629 = vmatpush1.xpose.msra.mxu0 0.0
    %1630 = vmatprep.subr.mxu0 0.0
    %1631 = vmatpush1.xpose.msra.mxu0 0.0
    %1632 = vmatprep.subr.mxu0 0.0
    %1633 = vmatpush1.xpose.msra.mxu0 0.0
    %1634 = vmatprep.subr.mxu0 0.0
    %1635 = vmatpush1.xpose.msra.mxu0 0.0
    %1636 = vmatprep.subr.mxu0 0.0
    %1637 = vmatpush1.xpose.msra.mxu0 0.0
    %1638 = vmatprep.subr.mxu0 0.0
    %1639 = vmatpush1.xpose.msra.mxu0 0.0
    %1640 = vmatprep.subr.mxu0 0.0
    %1641 = vmatpush1.xpose.msra.mxu0 0.0
    %1642 = vmatprep.subr.mxu0 0.0
    %1643 = vmatpush1.xpose.msra.mxu0 0.0
    %1644 = vmatprep.subr.mxu0 0.0
    %1645 = vmatpush1.xpose.msra.mxu0 0.0
    %1646 = vmatprep.subr.mxu0 0.0
    %1647 = vmatpush1.xpose.msra.mxu0 0.0
    %1648 = vmatprep.subr.mxu0 0.0
    %1649 = vmatpush1.xpose.msra.mxu0 0.0
    %1650 = vmatprep.subr.mxu0 0.0
    %1651 = vmatpush1.xpose.msra.mxu0 0.0
    %1652 = vmatprep.subr.mxu0 0.0
    %1653 = vmatpush1.xpose.msra.mxu0 0.0
    %1654 = vmatprep.subr.mxu0 0.0
    %1655 = vmatpush1.xpose.msra.mxu0 0.0
    %1656 = vmatprep.subr.mxu0 0.0
    %1657 = vmatpush1.xpose.msra.mxu0 0.0
    %1658 = vmatprep.subr.mxu0 0.0
    %1659 = vmatpush1.xpose.msra.mxu0 0.0
    %1660 = vmatprep.subr.mxu0 0.0
    %1661 = vmatpush1.xpose.msra.mxu0 0.0
    %1662 = vmatprep.mubr.f32.mxu0 0.0
    %1663 = vmatmul.mubr.f32.gmra.mrb[0].mxu0 %v1594
    %v1664 = vpop.f32.mrb[0].mxu0
    %v1665 = vadd.f32 0.0, %v1664
    %v1666 = vpop.f32.mrb[0].mxu0
    %1667 = vdwg.mxu0
    %v1668 = vmul.f32 %v1665, 0.35355338
    %v1669 = vadd.f32 %v1668, %v477
    %v1670 = vsel %vm609, %v1669, -inf
    %1671 = vmax.xlane.f32.xlu0 %v1670
    %v1672 = vpop.xlane.xlu0 %1671
    %v1673 = vsub.f32 %v1669, %v1672
    %v1674 = vmul.f32 %v1673, 1.442695
    %v1675 = vpow.pop %v1674
    %v1676 = vsel %vm609, %v1675, 0.0
    %1677 = vadd.xlane.f32.xlu0 %v1676
    %v1678 = vpop.xlane.xlu0 %1677
    %v1679 = vrcp.pop %v1678
    %v1680 = vmul.f32 %v1675, %v1679
    %v1681 = vpack.c.bf16 %v1680, %v1680
    %1682 = vrot.lane.b32.xlu0 %v840, 40
    %v1683 = vpop.permute.xlu0 %1682
    %v1685 = vsel %vm609, %v1681, 0
    %v1688 = vsel %vm705, %v1683, 0
    %1690 = vmatprep.subr.bf16.mxu0 0
    %1691 = vmatpush1.bf16.msra.mxu0 %v1688
    %1692 = vmatprep.subr.bf16.mxu0 0
    %1693 = vmatpush1.bf16.msra.mxu0 0
    %1694 = vmatprep.subr.bf16.mxu0 0
    %1695 = vmatpush1.bf16.msra.mxu0 0
    %1696 = vmatprep.subr.bf16.mxu0 0
    %1697 = vmatpush1.bf16.msra.mxu0 0
    %1698 = vmatprep.subr.bf16.mxu0 0
    %1699 = vmatpush1.bf16.msra.mxu0 0
    %1700 = vmatprep.subr.bf16.mxu0 0
    %1701 = vmatpush1.bf16.msra.mxu0 0
    %1702 = vmatprep.subr.bf16.mxu0 0
    %1703 = vmatpush1.bf16.msra.mxu0 0
    %1704 = vmatprep.subr.bf16.mxu0 0
    %1705 = vmatpush1.bf16.msra.mxu0 0
    %1706 = vmatprep.subr.bf16.mxu0 0
    %1707 = vmatpush1.bf16.msra.mxu0 0
    %1708 = vmatprep.subr.bf16.mxu0 0
    %1709 = vmatpush1.bf16.msra.mxu0 0
    %1710 = vmatprep.subr.bf16.mxu0 0
    %1711 = vmatpush1.bf16.msra.mxu0 0
    %1712 = vmatprep.subr.bf16.mxu0 0
    %1713 = vmatpush1.bf16.msra.mxu0 0
    %1714 = vmatprep.subr.bf16.mxu0 0
    %1715 = vmatpush1.bf16.msra.mxu0 0
    %1716 = vmatprep.subr.bf16.mxu0 0
    %1717 = vmatpush1.bf16.msra.mxu0 0
    %1718 = vmatprep.subr.bf16.mxu0 0
    %1719 = vmatpush1.bf16.msra.mxu0 0
    %1720 = vmatprep.subr.bf16.mxu0 0
    %1721 = vmatpush1.bf16.msra.mxu0 0
    %1722 = vmatprep.mubr.bf16.mxu0 0
    %1723 = vmatmul.mubr.bf16.gmra.mrb[0].mxu0 %v1685
    %v1724 = vpop.f32.mrb[0].mxu0
    %v1725 = vadd.f32 0.0, %v1724
    %v1726 = vpop.f32.mrb[0].mxu0
    %v1727 = vpop.f32.mrb[0].mxu0
    %v1728 = vpop.f32.mrb[0].mxu0
    %1729 = vdwg.mxu0
    %1732 = vrot.lane.b32.xlu0 %v1025, 8
    %v1733 = vpop.permute.xlu0 %1732
    %1734 = vrot.lane.b32.xlu0 %v1165, 8
    %v1735 = vpop.permute.xlu0 %1734
    %1740 = vrot.lane.b32.xlu0 %v1305, 16
    %v1741 = vpop.permute.xlu0 %1740
    %1742 = vrot.lane.b32.xlu0 %v1445, 16
    %v1743 = vpop.permute.xlu0 %1742
    %1748 = vrot.lane.b32.xlu0 %v1585, 24
    %v1749 = vpop.permute.xlu0 %1748
    %1750 = vrot.lane.b32.xlu0 %v1725, 24
    %v1751 = vpop.permute.xlu0 %1750
    %v1754 = vsel %vm609, %v744, %v1733
    %v1755 = vsel %vm609, %v885, %v1735
    %vm1756 = vcmask 130048
    %v1757 = vsel %vm1756, %v1754, %v1741
    %v1758 = vsel %vm1756, %v1755, %v1743
    %vm1759 = vcmask 195584
    %v1760 = vsel %vm1759, %v1757, %v1749
    %v1761 = vsel %vm1759, %v1758, %v1751
    %v1762 = vpack.c.bf16 %v1761, %v1760
    %v1763 = vld [vmem:[%s6] sm:$0xf]
    %v1764 = vld [vmem:[%s6 + $0x4] sm:$0xf]
    %v1765 = vld [vmem:[%s6 + $0x8] sm:$0xf]
    %v1766 = vld [vmem:[%s6 + $0xc] sm:$0xf]
    %v1767 = vld [vmem:[%s7] sm:$0x1]
    %v1769 = vlaneseq
    %v1770 = vshrl.u32 %v1769, 7
    %v1771 = vsub.s32 0, %v1770
    %v1772 = vrot.slane %v1767, %v1771
    %v1778 = vunpack.c.l.b16 %v1763
    %v1779 = vunpack.c.l.b16 %v1764
    %v1780 = vunpack.c.l.b16 %v1765
    %v1781 = vunpack.c.l.b16 %v1766
    %v1782 = vpack.c.b16 %v1779, %v1778
    %v1783 = vpack.c.b16 %v1781, %v1780
    %v1787 = vsel %vm480, %v1762, 0
    %1789 = vmatprep.subr.bf16.mxu0 0
    %1790 = vmatpush1.bf16.msra.mxu0 %v1782
    %1791 = vmatprep.subr.bf16.mxu0 0
    %1792 = vmatpush1.bf16.msra.mxu0 %v1783
    %1793 = vmatprep.subr.bf16.mxu0 0
    %1794 = vmatpush1.bf16.msra.mxu0 0
    %1795 = vmatprep.subr.bf16.mxu0 0
    %1796 = vmatpush1.bf16.msra.mxu0 0
    %1797 = vmatprep.subr.bf16.mxu0 0
    %1798 = vmatpush1.bf16.msra.mxu0 0
    %1799 = vmatprep.subr.bf16.mxu0 0
    %1800 = vmatpush1.bf16.msra.mxu0 0
    %1801 = vmatprep.subr.bf16.mxu0 0
    %1802 = vmatpush1.bf16.msra.mxu0 0
    %1803 = vmatprep.subr.bf16.mxu0 0
    %1804 = vmatpush1.bf16.msra.mxu0 0
    %1805 = vmatprep.subr.bf16.mxu0 0
    %1806 = vmatpush1.bf16.msra.mxu0 0
    %1807 = vmatprep.subr.bf16.mxu0 0
    %1808 = vmatpush1.bf16.msra.mxu0 0
    %1809 = vmatprep.subr.bf16.mxu0 0
    %1810 = vmatpush1.bf16.msra.mxu0 0
    %1811 = vmatprep.subr.bf16.mxu0 0
    %1812 = vmatpush1.bf16.msra.mxu0 0
    %1813 = vmatprep.subr.bf16.mxu0 0
    %1814 = vmatpush1.bf16.msra.mxu0 0
    %1815 = vmatprep.subr.bf16.mxu0 0
    %1816 = vmatpush1.bf16.msra.mxu0 0
    %1817 = vmatprep.subr.bf16.mxu0 0
    %1818 = vmatpush1.bf16.msra.mxu0 0
    %1819 = vmatprep.subr.bf16.mxu0 0
    %1820 = vmatpush1.bf16.msra.mxu0 0
    %1821 = vmatprep.mubr.bf16.mxu0 0
    %1822 = vmatmul.mubr.bf16.gmra.mrb[0].mxu0 %v1787
    %v1823 = vpop.f32.mrb[0].mxu0
    %v1824 = vadd.f32 %v1772, %v1823
    %v1825 = vpop.f32.mrb[0].mxu0
    %v1826 = vpop.f32.mrb[0].mxu0
    %v1827 = vadd.f32 %v1772, %v1826
    %v1828 = vpop.f32.mrb[0].mxu0
    %1829 = vdwg.mxu0
    %v1830 = vadd.f32 %v334, %v1824
    %v1831 = vadd.f32 %v339, %v1827
    %v1832 = vld [vmem:[%s14] sm:$0x1]
    %v1833 = vld [vmem:[%s15] sm:$0x1]
    %v1834 = vsel %vm480, %v1830, 0.0
    %1835 = vadd.xlane.f32.xlu0 %v1834
    %v1836 = vpop.xlane.xlu0 %1835
    %v1837 = vsel %vm480, %v1831, 0.0
    %1838 = vadd.xlane.f32.xlu0 %v1837
    %v1839 = vpop.xlane.xlu0 %1838
    %v1840 = vmul.f32 %v1836, %v487
    %v1841 = vmul.f32 %v1839, %v487
    %v1842 = vsub.f32 %v1830, %v1840
    %v1843 = vsub.f32 %v1831, %v1841
    %v1844 = vmul.f32 %v1842, %v1842
    %v1845 = vmul.f32 %v1843, %v1843
    %v1846 = vsel %vm480, %v1844, 0.0
    %1847 = vadd.xlane.f32.xlu0 %v1846
    %v1848 = vpop.xlane.xlu0 %1847
    %v1849 = vsel %vm480, %v1845, 0.0
    %1850 = vadd.xlane.f32.xlu0 %v1849
    %v1851 = vpop.xlane.xlu0 %1850
    %v1852 = vmul.f32 %v1848, 0.032258064
    %v1853 = vmul.f32 %v1851, 0.032258064
    %v1854 = vrsqrt.pop %v1852
    %v1855 = vmul.f32 %v1852, %v1854
    %vm1856 = vcmp.eq.f32.partialorder %v1852, inf
    %v1857 = vsel %vm1856, %v1852, %v1855
    %vm1858 = vcmp.eq.f32.partialorder %v1852, 0.0
    %v1859 = vand.u32 %v1852, 2147483648
    %v1860 = vsel %vm1858, %v1859, %v1857
    %v1861 = vrsqrt.pop %v1853
    %v1862 = vmul.f32 %v1853, %v1861
    %vm1863 = vcmp.eq.f32.partialorder %v1853, inf
    %v1864 = vsel %vm1863, %v1853, %v1862
    %vm1865 = vcmp.eq.f32.partialorder %v1853, 0.0
    %v1866 = vand.u32 %v1853, 2147483648
    %v1867 = vsel %vm1865, %v1866, %v1864
    %v1868 = vadd.f32 %v1860, 1e-06
    %v1869 = vadd.f32 %v1867, 1e-06
    %v1870 = vrcp.pop %v1868
    %v1871 = vrcp.pop %v1869
    %v1873 = vlaneseq
    %v1874 = vshrl.u32 %v1873, 7
    %v1875 = vsub.s32 0, %v1874
    %v1876 = vrot.slane %v1832, %v1875
    %v1878 = vmul.f32 %v1876, %v1842
    %v1879 = vmul.f32 %v1876, %v1843
    %v1880 = vmul.f32 %v1878, %v1870
    %v1881 = vmul.f32 %v1879, %v1871
    %v1883 = vlaneseq
    %v1884 = vshrl.u32 %v1883, 7
    %v1885 = vsub.s32 0, %v1884
    %v1886 = vrot.slane %v1833, %v1885
    %v1888 = vadd.f32 %v1880, %v1886
    %v1889 = vadd.f32 %v1881, %v1886
    %v1890 = vpack.c.bf16 %v1889, %v1888
    %v1891 = vld [vmem:[%s10] sm:$0xf]
    %v1892 = vld [vmem:[%s10 + $0x4] sm:$0xf]
    %v1893 = vld [vmem:[%s10 + $0x8] sm:$0xf]
    %v1894 = vld [vmem:[%s10 + $0xc] sm:$0xf]
    %v1895 = vld [vmem:[%s11] sm:$0x1]
    %v1897 = vlaneseq
    %v1898 = vshrl.u32 %v1897, 7
    %v1899 = vsub.s32 0, %v1898
    %v1900 = vrot.slane %v1895, %v1899
    %v1906 = vunpack.c.l.b16 %v1891
    %v1907 = vunpack.c.l.b16 %v1892
    %v1908 = vunpack.c.l.b16 %v1893
    %v1909 = vunpack.c.l.b16 %v1894
    %v1910 = vpack.c.b16 %v1907, %v1906
    %v1911 = vpack.c.b16 %v1909, %v1908
    %v1915 = vsel %vm480, %v1890, 0
    %1917 = vmatprep.subr.bf16.mxu0 0
    %1918 = vmatpush1.bf16.msra.mxu0 %v1910
    %1919 = vmatprep.subr.bf16.mxu0 0
    %1920 = vmatpush1.bf16.msra.mxu0 %v1911
    %1921 = vmatprep.subr.bf16.mxu0 0
    %1922 = vmatpush1.bf16.msra.mxu0 0
    %1923 = vmatprep.subr.bf16.mxu0 0
    %1924 = vmatpush1.bf16.msra.mxu0 0
    %1925 = vmatprep.subr.bf16.mxu0 0
    %1926 = vmatpush1.bf16.msra.mxu0 0
    %1927 = vmatprep.subr.bf16.mxu0 0
    %1928 = vmatpush1.bf16.msra.mxu0 0
    %1929 = vmatprep.subr.bf16.mxu0 0
    %1930 = vmatpush1.bf16.msra.mxu0 0
    %1931 = vmatprep.subr.bf16.mxu0 0
    %1932 = vmatpush1.bf16.msra.mxu0 0
    %1933 = vmatprep.subr.bf16.mxu0 0
    %1934 = vmatpush1.bf16.msra.mxu0 0
    %1935 = vmatprep.subr.bf16.mxu0 0
    %1936 = vmatpush1.bf16.msra.mxu0 0
    %1937 = vmatprep.subr.bf16.mxu0 0
    %1938 = vmatpush1.bf16.msra.mxu0 0
    %1939 = vmatprep.subr.bf16.mxu0 0
    %1940 = vmatpush1.bf16.msra.mxu0 0
    %1941 = vmatprep.subr.bf16.mxu0 0
    %1942 = vmatpush1.bf16.msra.mxu0 0
    %1943 = vmatprep.subr.bf16.mxu0 0
    %1944 = vmatpush1.bf16.msra.mxu0 0
    %1945 = vmatprep.subr.bf16.mxu0 0
    %1946 = vmatpush1.bf16.msra.mxu0 0
    %1947 = vmatprep.subr.bf16.mxu0 0
    %1948 = vmatpush1.bf16.msra.mxu0 0
    %1949 = vmatprep.mubr.bf16.mxu0 0
    %1950 = vmatmul.mubr.bf16.gmra.mrb[0].mxu0 %v1915
    %v1951 = vpop.f32.mrb[0].mxu0
    %v1952 = vadd.f32 %v1900, %v1951
    %v1953 = vpop.f32.mrb[0].mxu0
    %v1954 = vpop.f32.mrb[0].mxu0
    %v1955 = vadd.f32 %v1900, %v1954
    %v1956 = vpop.f32.mrb[0].mxu0
    %1957 = vdwg.mxu0
    %v1958 = vmax.f32 %v1952, 0.0
    %v1959 = vmax.f32 %v1955, 0.0
    %v1960 = vpack.c.bf16 %v1959, %v1958
    %v1961 = vld [vmem:[%s12] sm:$0xf]
    %v1962 = vld [vmem:[%s12 + $0x4] sm:$0xf]
    %v1963 = vld [vmem:[%s12 + $0x8] sm:$0xf]
    %v1964 = vld [vmem:[%s12 + $0xc] sm:$0xf]
    %v1965 = vld [vmem:[%s12 + $0x10] sm:$0xf]
    %v1966 = vld [vmem:[%s12 + $0x14] sm:$0xf]
    %v1967 = vld [vmem:[%s12 + $0x18] sm:$0xf]
    %v1968 = vld [vmem:[%s12 + $0x1c] sm:$0xf]
    %v1977 = vunpack.c.l.b16 %v1961
    %v1978 = vunpack.c.l.b16 %v1962
    %v1979 = vunpack.c.l.b16 %v1963
    %v1980 = vunpack.c.l.b16 %v1964
    %v1981 = vunpack.c.l.b16 %v1965
    %v1982 = vunpack.c.l.b16 %v1966
    %v1983 = vunpack.c.l.b16 %v1967
    %v1984 = vunpack.c.l.b16 %v1968
    %v1985 = vpack.c.b16 %v1978, %v1977
    %v1986 = vpack.c.b16 %v1980, %v1979
    %v1987 = vpack.c.b16 %v1982, %v1981
    %v1988 = vpack.c.b16 %v1984, %v1983
    %vm1993 = vcmask 523264
    %v1995 = vsel %vm1993, %v1960, 0
    %1997 = vmatprep.subr.bf16.mxu0 0
    %1998 = vmatpush1.bf16.msra.mxu0 %v1985
    %1999 = vmatprep.subr.bf16.mxu0 0
    %2000 = vmatpush1.bf16.msra.mxu0 %v1986
    %2001 = vmatprep.subr.bf16.mxu0 0
    %2002 = vmatpush1.bf16.msra.mxu0 %v1987
    %2003 = vmatprep.subr.bf16.mxu0 0
    %2004 = vmatpush1.bf16.msra.mxu0 %v1988
    %2005 = vmatprep.subr.bf16.mxu0 0
    %2006 = vmatpush1.bf16.msra.mxu0 0
    %2007 = vmatprep.subr.bf16.mxu0 0
    %2008 = vmatpush1.bf16.msra.mxu0 0
    %2009 = vmatprep.subr.bf16.mxu0 0
    %2010 = vmatpush1.bf16.msra.mxu0 0
    %2011 = vmatprep.subr.bf16.mxu0 0
    %2012 = vmatpush1.bf16.msra.mxu0 0
    %2013 = vmatprep.subr.bf16.mxu0 0
    %2014 = vmatpush1.bf16.msra.mxu0 0
    %2015 = vmatprep.subr.bf16.mxu0 0
    %2016 = vmatpush1.bf16.msra.mxu0 0
    %2017 = vmatprep.subr.bf16.mxu0 0
    %2018 = vmatpush1.bf16.msra.mxu0 0
    %2019 = vmatprep.subr.bf16.mxu0 0
    %2020 = vmatpush1.bf16.msra.mxu0 0
    %2021 = vmatprep.subr.bf16.mxu0 0
    %2022 = vmatpush1.bf16.msra.mxu0 0
    %2023 = vmatprep.subr.bf16.mxu0 0
    %2024 = vmatpush1.bf16.msra.mxu0 0
    %2025 = vmatprep.subr.bf16.mxu0 0
    %2026 = vmatpush1.bf16.msra.mxu0 0
    %2027 = vmatprep.subr.bf16.mxu0 0
    %2028 = vmatpush1.bf16.msra.mxu0 0
    %2029 = vmatprep.mubr.bf16.mxu0 0
    %2030 = vmatmul.mubr.bf16.gmra.mrb[0].mxu0 %v1995
    %v2031 = vpop.f32.mrb[0].mxu0
    %v2032 = vadd.f32 0.0, %v2031
    %v2033 = vpop.f32.mrb[0].mxu0
    %v2034 = vpop.f32.mrb[0].mxu0
    %v2035 = vadd.f32 0.0, %v2034
    %v2036 = vpop.f32.mrb[0].mxu0
    %2037 = vdwg.mxu0
    %v2038 = vadd.f32 %v1830, %v2032
    %v2039 = vadd.f32 %v1831, %v2035
    %v2040 = vld [vmem:[%s13] sm:$0x1]
    %v2042 = vlaneseq
    %v2043 = vshrl.u32 %v2042, 7
    %v2044 = vsub.s32 0, %v2043
    %v2045 = vrot.slane %v2040, %v2044
    %v2047 = vadd.f32 %v2038, %v2045
    %v2048 = vadd.f32 %v2039, %v2045
    %s2049 = scalar_lea.vmem %s8, 1
    %v2050 = vld [vmem:[%s2049] sm:$0x1]
    %s2051 = scalar_lea.vmem %s9, 1
    %v2052 = vld [vmem:[%s2051] sm:$0x1]
    %v2053 = vsel %vm480, %v2047, 0.0
    %2054 = vadd.xlane.f32.xlu0 %v2053
    %v2055 = vpop.xlane.xlu0 %2054
    %v2056 = vsel %vm480, %v2048, 0.0
    %2057 = vadd.xlane.f32.xlu0 %v2056
    %v2058 = vpop.xlane.xlu0 %2057
    %v2059 = vmul.f32 %v2055, %v487
    %v2060 = vmul.f32 %v2058, %v487
    %v2061 = vsub.f32 %v2047, %v2059
    %v2062 = vsub.f32 %v2048, %v2060
    %v2063 = vmul.f32 %v2061, %v2061
    %v2064 = vmul.f32 %v2062, %v2062
    %v2065 = vsel %vm480, %v2063, 0.0
    %2066 = vadd.xlane.f32.xlu0 %v2065
    %v2067 = vpop.xlane.xlu0 %2066
    %v2068 = vsel %vm480, %v2064, 0.0
    %2069 = vadd.xlane.f32.xlu0 %v2068
    %v2070 = vpop.xlane.xlu0 %2069
    %v2071 = vmul.f32 %v2067, 0.032258064
    %v2072 = vmul.f32 %v2070, 0.032258064
    %v2073 = vrsqrt.pop %v2071
    %v2074 = vmul.f32 %v2071, %v2073
    %vm2075 = vcmp.eq.f32.partialorder %v2071, inf
    %v2076 = vsel %vm2075, %v2071, %v2074
    %vm2077 = vcmp.eq.f32.partialorder %v2071, 0.0
    %v2078 = vand.u32 %v2071, 2147483648
    %v2079 = vsel %vm2077, %v2078, %v2076
    %v2080 = vrsqrt.pop %v2072
    %v2081 = vmul.f32 %v2072, %v2080
    %vm2082 = vcmp.eq.f32.partialorder %v2072, inf
    %v2083 = vsel %vm2082, %v2072, %v2081
    %vm2084 = vcmp.eq.f32.partialorder %v2072, 0.0
    %v2085 = vand.u32 %v2072, 2147483648
    %v2086 = vsel %vm2084, %v2085, %v2083
    %v2087 = vadd.f32 %v2079, 1e-06
    %v2088 = vadd.f32 %v2086, 1e-06
    %v2089 = vrcp.pop %v2087
    %v2090 = vrcp.pop %v2088
    %v2092 = vlaneseq
    %v2093 = vshrl.u32 %v2092, 7
    %v2094 = vsub.s32 0, %v2093
    %v2095 = vrot.slane %v2050, %v2094
    %v2097 = vmul.f32 %v2095, %v2061
    %v2098 = vmul.f32 %v2095, %v2062
    %v2099 = vmul.f32 %v2097, %v2089
    %v2100 = vmul.f32 %v2098, %v2090
    %v2102 = vlaneseq
    %v2103 = vshrl.u32 %v2102, 7
    %v2104 = vsub.s32 0, %v2103
    %v2105 = vrot.slane %v2052, %v2104
    %v2107 = vadd.f32 %v2099, %v2105
    %v2108 = vadd.f32 %v2100, %v2105
    %v2109 = vpack.c.bf16 %v2108, %v2107
    %s2110 = scalar_lea.vmem %s4, 16
    %v2111 = vld [vmem:[%s2110] sm:$0xf]
    %v2112 = vld [vmem:[%s2110 + $0x4] sm:$0xf]
    %v2113 = vld [vmem:[%s2110 + $0x8] sm:$0xf]
    %v2114 = vld [vmem:[%s2110 + $0xc] sm:$0xf]
    %s2115 = scalar_lea.vmem %s5, 1
    %v2116 = vld [vmem:[%s2115] sm:$0x1]
    %v2118 = vlaneseq
    %v2119 = vshrl.u32 %v2118, 7
    %v2120 = vsub.s32 0, %v2119
    %v2121 = vrot.slane %v2116, %v2120
    %v2127 = vunpack.c.l.b16 %v2111
    %v2128 = vunpack.c.l.b16 %v2112
    %v2129 = vunpack.c.l.b16 %v2113
    %v2130 = vunpack.c.l.b16 %v2114
    %v2131 = vpack.c.b16 %v2128, %v2127
    %v2132 = vpack.c.b16 %v2130, %v2129
    %v2136 = vsel %vm480, %v2109, 0
    %2138 = vmatprep.subr.bf16.mxu0 0
    %2139 = vmatpush1.bf16.msra.mxu0 %v2131
    %2140 = vmatprep.subr.bf16.mxu0 0
    %2141 = vmatpush1.bf16.msra.mxu0 %v2132
    %2142 = vmatprep.subr.bf16.mxu0 0
    %2143 = vmatpush1.bf16.msra.mxu0 0
    %2144 = vmatprep.subr.bf16.mxu0 0
    %2145 = vmatpush1.bf16.msra.mxu0 0
    %2146 = vmatprep.subr.bf16.mxu0 0
    %2147 = vmatpush1.bf16.msra.mxu0 0
    %2148 = vmatprep.subr.bf16.mxu0 0
    %2149 = vmatpush1.bf16.msra.mxu0 0
    %2150 = vmatprep.subr.bf16.mxu0 0
    %2151 = vmatpush1.bf16.msra.mxu0 0
    %2152 = vmatprep.subr.bf16.mxu0 0
    %2153 = vmatpush1.bf16.msra.mxu0 0
    %2154 = vmatprep.subr.bf16.mxu0 0
    %2155 = vmatpush1.bf16.msra.mxu0 0
    %2156 = vmatprep.subr.bf16.mxu0 0
    %2157 = vmatpush1.bf16.msra.mxu0 0
    %2158 = vmatprep.subr.bf16.mxu0 0
    %2159 = vmatpush1.bf16.msra.mxu0 0
    %2160 = vmatprep.subr.bf16.mxu0 0
    %2161 = vmatpush1.bf16.msra.mxu0 0
    %2162 = vmatprep.subr.bf16.mxu0 0
    %2163 = vmatpush1.bf16.msra.mxu0 0
    %2164 = vmatprep.subr.bf16.mxu0 0
    %2165 = vmatpush1.bf16.msra.mxu0 0
    %2166 = vmatprep.subr.bf16.mxu0 0
    %2167 = vmatpush1.bf16.msra.mxu0 0
    %2168 = vmatprep.subr.bf16.mxu0 0
    %2169 = vmatpush1.bf16.msra.mxu0 0
    %2170 = vmatprep.mubr.bf16.mxu0 0
    %2171 = vmatmul.mubr.bf16.gmra.mrb[0].mxu0 %v2136
    %v2172 = vpop.f32.mrb[0].mxu0
    %v2173 = vadd.f32 %v2121, %v2172
    %v2174 = vpop.f32.mrb[0].mxu0
    %v2175 = vpop.f32.mrb[0].mxu0
    %v2176 = vadd.f32 %v2121, %v2175
    %v2177 = vpop.f32.mrb[0].mxu0
    %2178 = vdwg.mxu0
    %2180 = vrot.lane.b32.xlu0 %v2173, 96
    %v2181 = vpop.permute.xlu0 %2180
    %v2182 = vsel %vm609, %v2173, 0
    %v2184 = vsel %vm609, %v2181, 0
    %2186 = vmatprep.subr.mxu0 0.0
    %2187 = vmatpush1.xpose.msra.mxu0 %v2184
    %2188 = vmatprep.subr.mxu0 0.0
    %2189 = vmatpush1.xpose.msra.mxu0 0.0
    %2190 = vmatprep.subr.mxu0 0.0
    %2191 = vmatpush1.xpose.msra.mxu0 0.0
    %2192 = vmatprep.subr.mxu0 0.0
    %2193 = vmatpush1.xpose.msra.mxu0 0.0
    %2194 = vmatprep.subr.mxu0 0.0
    %2195 = vmatpush1.xpose.msra.mxu0 0.0
    %2196 = vmatprep.subr.mxu0 0.0
    %2197 = vmatpush1.xpose.msra.mxu0 0.0
    %2198 = vmatprep.subr.mxu0 0.0
    %2199 = vmatpush1.xpose.msra.mxu0 0.0
    %2200 = vmatprep.subr.mxu0 0.0
    %2201 = vmatpush1.xpose.msra.mxu0 0.0
    %2202 = vmatprep.subr.mxu0 0.0
    %2203 = vmatpush1.xpose.msra.mxu0 0.0
    %2204 = vmatprep.subr.mxu0 0.0
    %2205 = vmatpush1.xpose.msra.mxu0 0.0
    %2206 = vmatprep.subr.mxu0 0.0
    %2207 = vmatpush1.xpose.msra.mxu0 0.0
    %2208 = vmatprep.subr.mxu0 0.0
    %2209 = vmatpush1.xpose.msra.mxu0 0.0
    %2210 = vmatprep.subr.mxu0 0.0
    %2211 = vmatpush1.xpose.msra.mxu0 0.0
    %2212 = vmatprep.subr.mxu0 0.0
    %2213 = vmatpush1.xpose.msra.mxu0 0.0
    %2214 = vmatprep.subr.mxu0 0.0
    %2215 = vmatpush1.xpose.msra.mxu0 0.0
    %2216 = vmatprep.subr.mxu0 0.0
    %2217 = vmatpush1.xpose.msra.mxu0 0.0
    %2218 = vmatprep.subr.mxu0 0.0
    %2219 = vmatpush1.xpose.msra.mxu0 0.0
    %2220 = vmatprep.subr.mxu0 0.0
    %2221 = vmatpush1.xpose.msra.mxu0 0.0
    %2222 = vmatprep.subr.mxu0 0.0
    %2223 = vmatpush1.xpose.msra.mxu0 0.0
    %2224 = vmatprep.subr.mxu0 0.0
    %2225 = vmatpush1.xpose.msra.mxu0 0.0
    %2226 = vmatprep.subr.mxu0 0.0
    %2227 = vmatpush1.xpose.msra.mxu0 0.0
    %2228 = vmatprep.subr.mxu0 0.0
    %2229 = vmatpush1.xpose.msra.mxu0 0.0
    %2230 = vmatprep.subr.mxu0 0.0
    %2231 = vmatpush1.xpose.msra.mxu0 0.0
    %2232 = vmatprep.subr.mxu0 0.0
    %2233 = vmatpush1.xpose.msra.mxu0 0.0
    %2234 = vmatprep.subr.mxu0 0.0
    %2235 = vmatpush1.xpose.msra.mxu0 0.0
    %2236 = vmatprep.subr.mxu0 0.0
    %2237 = vmatpush1.xpose.msra.mxu0 0.0
    %2238 = vmatprep.subr.mxu0 0.0
    %2239 = vmatpush1.xpose.msra.mxu0 0.0
    %2240 = vmatprep.subr.mxu0 0.0
    %2241 = vmatpush1.xpose.msra.mxu0 0.0
    %2242 = vmatprep.subr.mxu0 0.0
    %2243 = vmatpush1.xpose.msra.mxu0 0.0
    %2244 = vmatprep.subr.mxu0 0.0
    %2245 = vmatpush1.xpose.msra.mxu0 0.0
    %2246 = vmatprep.subr.mxu0 0.0
    %2247 = vmatpush1.xpose.msra.mxu0 0.0
    %2248 = vmatprep.subr.mxu0 0.0
    %2249 = vmatpush1.xpose.msra.mxu0 0.0
    %2250 = vmatprep.mubr.f32.mxu0 0.0
    %2251 = vmatmul.mubr.f32.gmra.mrb[0].mxu0 %v2182
    %v2252 = vpop.f32.mrb[0].mxu0
    %v2253 = vadd.f32 0.0, %v2252
    %v2254 = vpop.f32.mrb[0].mxu0
    %2255 = vdwg.mxu0
    %v2256 = vmul.f32 %v2253, 0.35355338
    %v2257 = vadd.f32 %v2256, %v413
    %v2258 = vsel %vm609, %v2257, -inf
    %2259 = vmax.xlane.f32.xlu0 %v2258
    %v2260 = vpop.xlane.xlu0 %2259
    %v2261 = vsub.f32 %v2257, %v2260
    %v2262 = vmul.f32 %v2261, 1.442695
    %v2263 = vpow.pop %v2262
    %v2264 = vsel %vm609, %v2263, 0.0
    %2265 = vadd.xlane.f32.xlu0 %v2264
    %v2266 = vpop.xlane.xlu0 %2265
    %v2267 = vrcp.pop %v2266
    %v2268 = vmul.f32 %v2263, %v2267
    %v2269 = vpack.c.bf16 %v2268, %v2268
    %v2270 = vpack.c.bf16 %v2173, %v2173
    %2272 = vrot.lane.b32.xlu0 %v2270, 64
    %v2273 = vpop.permute.xlu0 %2272
    %v2275 = vsel %vm609, %v2269, 0
    %v2278 = vsel %vm705, %v2273, 0
    %2280 = vmatprep.subr.bf16.mxu0 0
    %2281 = vmatpush1.bf16.msra.mxu0 %v2278
    %2282 = vmatprep.subr.bf16.mxu0 0
    %2283 = vmatpush1.bf16.msra.mxu0 0
    %2284 = vmatprep.subr.bf16.mxu0 0
    %2285 = vmatpush1.bf16.msra.mxu0 0
    %2286 = vmatprep.subr.bf16.mxu0 0
    %2287 = vmatpush1.bf16.msra.mxu0 0
    %2288 = vmatprep.subr.bf16.mxu0 0
    %2289 = vmatpush1.bf16.msra.mxu0 0
    %2290 = vmatprep.subr.bf16.mxu0 0
    %2291 = vmatpush1.bf16.msra.mxu0 0
    %2292 = vmatprep.subr.bf16.mxu0 0
    %2293 = vmatpush1.bf16.msra.mxu0 0
    %2294 = vmatprep.subr.bf16.mxu0 0
    %2295 = vmatpush1.bf16.msra.mxu0 0
    %2296 = vmatprep.subr.bf16.mxu0 0
    %2297 = vmatpush1.bf16.msra.mxu0 0
    %2298 = vmatprep.subr.bf16.mxu0 0
    %2299 = vmatpush1.bf16.msra.mxu0 0
    %2300 = vmatprep.subr.bf16.mxu0 0
    %2301 = vmatpush1.bf16.msra.mxu0 0
    %2302 = vmatprep.subr.bf16.mxu0 0
    %2303 = vmatpush1.bf16.msra.mxu0 0
    %2304 = vmatprep.subr.bf16.mxu0 0
    %2305 = vmatpush1.bf16.msra.mxu0 0
    %2306 = vmatprep.subr.bf16.mxu0 0
    %2307 = vmatpush1.bf16.msra.mxu0 0
    %2308 = vmatprep.subr.bf16.mxu0 0
    %2309 = vmatpush1.bf16.msra.mxu0 0
    %2310 = vmatprep.subr.bf16.mxu0 0
    %2311 = vmatpush1.bf16.msra.mxu0 0
    %2312 = vmatprep.mubr.bf16.mxu0 0
    %2313 = vmatmul.mubr.bf16.gmra.mrb[0].mxu0 %v2275
    %v2314 = vpop.f32.mrb[0].mxu0
    %v2315 = vadd.f32 0.0, %v2314
    %v2316 = vpop.f32.mrb[0].mxu0
    %v2317 = vpop.f32.mrb[0].mxu0
    %v2318 = vpop.f32.mrb[0].mxu0
    %2319 = vdwg.mxu0
    %2321 = vrot.lane.b32.xlu0 %v2176, 96
    %v2322 = vpop.permute.xlu0 %2321
    %v2323 = vsel %vm609, %v2176, 0
    %v2325 = vsel %vm609, %v2322, 0
    %2327 = vmatprep.subr.mxu0 0.0
    %2328 = vmatpush1.xpose.msra.mxu0 %v2325
    %2329 = vmatprep.subr.mxu0 0.0
    %2330 = vmatpush1.xpose.msra.mxu0 0.0
    %2331 = vmatprep.subr.mxu0 0.0
    %2332 = vmatpush1.xpose.msra.mxu0 0.0
    %2333 = vmatprep.subr.mxu0 0.0
    %2334 = vmatpush1.xpose.msra.mxu0 0.0
    %2335 = vmatprep.subr.mxu0 0.0
    %2336 = vmatpush1.xpose.msra.mxu0 0.0
    %2337 = vmatprep.subr.mxu0 0.0
    %2338 = vmatpush1.xpose.msra.mxu0 0.0
    %2339 = vmatprep.subr.mxu0 0.0
    %2340 = vmatpush1.xpose.msra.mxu0 0.0
    %2341 = vmatprep.subr.mxu0 0.0
    %2342 = vmatpush1.xpose.msra.mxu0 0.0
    %2343 = vmatprep.subr.mxu0 0.0
    %2344 = vmatpush1.xpose.msra.mxu0 0.0
    %2345 = vmatprep.subr.mxu0 0.0
    %2346 = vmatpush1.xpose.msra.mxu0 0.0
    %2347 = vmatprep.subr.mxu0 0.0
    %2348 = vmatpush1.xpose.msra.mxu0 0.0
    %2349 = vmatprep.subr.mxu0 0.0
    %2350 = vmatpush1.xpose.msra.mxu0 0.0
    %2351 = vmatprep.subr.mxu0 0.0
    %2352 = vmatpush1.xpose.msra.mxu0 0.0
    %2353 = vmatprep.subr.mxu0 0.0
    %2354 = vmatpush1.xpose.msra.mxu0 0.0
    %2355 = vmatprep.subr.mxu0 0.0
    %2356 = vmatpush1.xpose.msra.mxu0 0.0
    %2357 = vmatprep.subr.mxu0 0.0
    %2358 = vmatpush1.xpose.msra.mxu0 0.0
    %2359 = vmatprep.subr.mxu0 0.0
    %2360 = vmatpush1.xpose.msra.mxu0 0.0
    %2361 = vmatprep.subr.mxu0 0.0
    %2362 = vmatpush1.xpose.msra.mxu0 0.0
    %2363 = vmatprep.subr.mxu0 0.0
    %2364 = vmatpush1.xpose.msra.mxu0 0.0
    %2365 = vmatprep.subr.mxu0 0.0
    %2366 = vmatpush1.xpose.msra.mxu0 0.0
    %2367 = vmatprep.subr.mxu0 0.0
    %2368 = vmatpush1.xpose.msra.mxu0 0.0
    %2369 = vmatprep.subr.mxu0 0.0
    %2370 = vmatpush1.xpose.msra.mxu0 0.0
    %2371 = vmatprep.subr.mxu0 0.0
    %2372 = vmatpush1.xpose.msra.mxu0 0.0
    %2373 = vmatprep.subr.mxu0 0.0
    %2374 = vmatpush1.xpose.msra.mxu0 0.0
    %2375 = vmatprep.subr.mxu0 0.0
    %2376 = vmatpush1.xpose.msra.mxu0 0.0
    %2377 = vmatprep.subr.mxu0 0.0
    %2378 = vmatpush1.xpose.msra.mxu0 0.0
    %2379 = vmatprep.subr.mxu0 0.0
    %2380 = vmatpush1.xpose.msra.mxu0 0.0
    %2381 = vmatprep.subr.mxu0 0.0
    %2382 = vmatpush1.xpose.msra.mxu0 0.0
    %2383 = vmatprep.subr.mxu0 0.0
    %2384 = vmatpush1.xpose.msra.mxu0 0.0
    %2385 = vmatprep.subr.mxu0 0.0
    %2386 = vmatpush1.xpose.msra.mxu0 0.0
    %2387 = vmatprep.subr.mxu0 0.0
    %2388 = vmatpush1.xpose.msra.mxu0 0.0
    %2389 = vmatprep.subr.mxu0 0.0
    %2390 = vmatpush1.xpose.msra.mxu0 0.0
    %2391 = vmatprep.mubr.f32.mxu0 0.0
    %2392 = vmatmul.mubr.f32.gmra.mrb[0].mxu0 %v2323
    %v2393 = vpop.f32.mrb[0].mxu0
    %v2394 = vadd.f32 0.0, %v2393
    %v2395 = vpop.f32.mrb[0].mxu0
    %2396 = vdwg.mxu0
    %v2397 = vmul.f32 %v2394, 0.35355338
    %v2398 = vadd.f32 %v2397, %v477
    %v2399 = vsel %vm609, %v2398, -inf
    %2400 = vmax.xlane.f32.xlu0 %v2399
    %v2401 = vpop.xlane.xlu0 %2400
    %v2402 = vsub.f32 %v2398, %v2401
    %v2403 = vmul.f32 %v2402, 1.442695
    %v2404 = vpow.pop %v2403
    %v2405 = vsel %vm609, %v2404, 0.0
    %2406 = vadd.xlane.f32.xlu0 %v2405
    %v2407 = vpop.xlane.xlu0 %2406
    %v2408 = vrcp.pop %v2407
    %v2409 = vmul.f32 %v2404, %v2408
    %v2410 = vpack.c.bf16 %v2409, %v2409
    %v2411 = vpack.c.bf16 %v2176, %v2176
    %2413 = vrot.lane.b32.xlu0 %v2411, 64
    %v2414 = vpop.permute.xlu0 %2413
    %v2416 = vsel %vm609, %v2410, 0
    %v2419 = vsel %vm705, %v2414, 0
    %2421 = vmatprep.subr.bf16.mxu0 0
    %2422 = vmatpush1.bf16.msra.mxu0 %v2419
    %2423 = vmatprep.subr.bf16.mxu0 0
    %2424 = vmatpush1.bf16.msra.mxu0 0
    %2425 = vmatprep.subr.bf16.mxu0 0
    %2426 = vmatpush1.bf16.msra.mxu0 0
    %2427 = vmatprep.subr.bf16.mxu0 0
    %2428 = vmatpush1.bf16.msra.mxu0 0
    %2429 = vmatprep.subr.bf16.mxu0 0
    %2430 = vmatpush1.bf16.msra.mxu0 0
    %2431 = vmatprep.subr.bf16.mxu0 0
    %2432 = vmatpush1.bf16.msra.mxu0 0
    %2433 = vmatprep.subr.bf16.mxu0 0
    %2434 = vmatpush1.bf16.msra.mxu0 0
    %2435 = vmatprep.subr.bf16.mxu0 0
    %2436 = vmatpush1.bf16.msra.mxu0 0
    %2437 = vmatprep.subr.bf16.mxu0 0
    %2438 = vmatpush1.bf16.msra.mxu0 0
    %2439 = vmatprep.subr.bf16.mxu0 0
    %2440 = vmatpush1.bf16.msra.mxu0 0
    %2441 = vmatprep.subr.bf16.mxu0 0
    %2442 = vmatpush1.bf16.msra.mxu0 0
    %2443 = vmatprep.subr.bf16.mxu0 0
    %2444 = vmatpush1.bf16.msra.mxu0 0
    %2445 = vmatprep.subr.bf16.mxu0 0
    %2446 = vmatpush1.bf16.msra.mxu0 0
    %2447 = vmatprep.subr.bf16.mxu0 0
    %2448 = vmatpush1.bf16.msra.mxu0 0
    %2449 = vmatprep.subr.bf16.mxu0 0
    %2450 = vmatpush1.bf16.msra.mxu0 0
    %2451 = vmatprep.subr.bf16.mxu0 0
    %2452 = vmatpush1.bf16.msra.mxu0 0
    %2453 = vmatprep.mubr.bf16.mxu0 0
    %2454 = vmatmul.mubr.bf16.gmra.mrb[0].mxu0 %v2416
    %v2455 = vpop.f32.mrb[0].mxu0
    %v2456 = vadd.f32 0.0, %v2455
    %v2457 = vpop.f32.mrb[0].mxu0
    %v2458 = vpop.f32.mrb[0].mxu0
    %v2459 = vpop.f32.mrb[0].mxu0
    %2460 = vdwg.mxu0
    %2461 = vrot.lane.b32.xlu0 %v2173, 120
    %v2462 = vpop.permute.xlu0 %2461
    %2463 = vrot.lane.b32.xlu0 %v2173, 88
    %v2464 = vpop.permute.xlu0 %2463
    %v2465 = vsel %vm609, %v2462, 0
    %v2467 = vsel %vm609, %v2464, 0
    %2469 = vmatprep.subr.mxu0 0.0
    %2470 = vmatpush1.xpose.msra.mxu0 %v2467
    %2471 = vmatprep.subr.mxu0 0.0
    %2472 = vmatpush1.xpose.msra.mxu0 0.0
    %2473 = vmatprep.subr.mxu0 0.0
    %2474 = vmatpush1.xpose.msra.mxu0 0.0
    %2475 = vmatprep.subr.mxu0 0.0
    %2476 = vmatpush1.xpose.msra.mxu0 0.0
    %2477 = vmatprep.subr.mxu0 0.0
    %2478 = vmatpush1.xpose.msra.mxu0 0.0
    %2479 = vmatprep.subr.mxu0 0.0
    %2480 = vmatpush1.xpose.msra.mxu0 0.0
    %2481 = vmatprep.subr.mxu0 0.0
    %2482 = vmatpush1.xpose.msra.mxu0 0.0
    %2483 = vmatprep.subr.mxu0 0.0
    %2484 = vmatpush1.xpose.msra.mxu0 0.0
    %2485 = vmatprep.subr.mxu0 0.0
    %2486 = vmatpush1.xpose.msra.mxu0 0.0
    %2487 = vmatprep.subr.mxu0 0.0
    %2488 = vmatpush1.xpose.msra.mxu0 0.0
    %2489 = vmatprep.subr.mxu0 0.0
    %2490 = vmatpush1.xpose.msra.mxu0 0.0
    %2491 = vmatprep.subr.mxu0 0.0
    %2492 = vmatpush1.xpose.msra.mxu0 0.0
    %2493 = vmatprep.subr.mxu0 0.0
    %2494 = vmatpush1.xpose.msra.mxu0 0.0
    %2495 = vmatprep.subr.mxu0 0.0
    %2496 = vmatpush1.xpose.msra.mxu0 0.0
    %2497 = vmatprep.subr.mxu0 0.0
    %2498 = vmatpush1.xpose.msra.mxu0 0.0
    %2499 = vmatprep.subr.mxu0 0.0
    %2500 = vmatpush1.xpose.msra.mxu0 0.0
    %2501 = vmatprep.subr.mxu0 0.0
    %2502 = vmatpush1.xpose.msra.mxu0 0.0
    %2503 = vmatprep.subr.mxu0 0.0
    %2504 = vmatpush1.xpose.msra.mxu0 0.0
    %2505 = vmatprep.subr.mxu0 0.0
    %2506 = vmatpush1.xpose.msra.mxu0 0.0
    %2507 = vmatprep.subr.mxu0 0.0
    %2508 = vmatpush1.xpose.msra.mxu0 0.0
    %2509 = vmatprep.subr.mxu0 0.0
    %2510 = vmatpush1.xpose.msra.mxu0 0.0
    %2511 = vmatprep.subr.mxu0 0.0
    %2512 = vmatpush1.xpose.msra.mxu0 0.0
    %2513 = vmatprep.subr.mxu0 0.0
    %2514 = vmatpush1.xpose.msra.mxu0 0.0
    %2515 = vmatprep.subr.mxu0 0.0
    %2516 = vmatpush1.xpose.msra.mxu0 0.0
    %2517 = vmatprep.subr.mxu0 0.0
    %2518 = vmatpush1.xpose.msra.mxu0 0.0
    %2519 = vmatprep.subr.mxu0 0.0
    %2520 = vmatpush1.xpose.msra.mxu0 0.0
    %2521 = vmatprep.subr.mxu0 0.0
    %2522 = vmatpush1.xpose.msra.mxu0 0.0
    %2523 = vmatprep.subr.mxu0 0.0
    %2524 = vmatpush1.xpose.msra.mxu0 0.0
    %2525 = vmatprep.subr.mxu0 0.0
    %2526 = vmatpush1.xpose.msra.mxu0 0.0
    %2527 = vmatprep.subr.mxu0 0.0
    %2528 = vmatpush1.xpose.msra.mxu0 0.0
    %2529 = vmatprep.subr.mxu0 0.0
    %2530 = vmatpush1.xpose.msra.mxu0 0.0
    %2531 = vmatprep.subr.mxu0 0.0
    %2532 = vmatpush1.xpose.msra.mxu0 0.0
    %2533 = vmatprep.mubr.f32.mxu0 0.0
    %2534 = vmatmul.mubr.f32.gmra.mrb[0].mxu0 %v2465
    %v2535 = vpop.f32.mrb[0].mxu0
    %v2536 = vadd.f32 0.0, %v2535
    %v2537 = vpop.f32.mrb[0].mxu0
    %2538 = vdwg.mxu0
    %v2539 = vmul.f32 %v2536, 0.35355338
    %v2540 = vadd.f32 %v2539, %v413
    %v2541 = vsel %vm609, %v2540, -inf
    %2542 = vmax.xlane.f32.xlu0 %v2541
    %v2543 = vpop.xlane.xlu0 %2542
    %v2544 = vsub.f32 %v2540, %v2543
    %v2545 = vmul.f32 %v2544, 1.442695
    %v2546 = vpow.pop %v2545
    %v2547 = vsel %vm609, %v2546, 0.0
    %2548 = vadd.xlane.f32.xlu0 %v2547
    %v2549 = vpop.xlane.xlu0 %2548
    %v2550 = vrcp.pop %v2549
    %v2551 = vmul.f32 %v2546, %v2550
    %v2552 = vpack.c.bf16 %v2551, %v2551
    %2553 = vrot.lane.b32.xlu0 %v2270, 56
    %v2554 = vpop.permute.xlu0 %2553
    %v2556 = vsel %vm609, %v2552, 0
    %v2559 = vsel %vm705, %v2554, 0
    %2561 = vmatprep.subr.bf16.mxu0 0
    %2562 = vmatpush1.bf16.msra.mxu0 %v2559
    %2563 = vmatprep.subr.bf16.mxu0 0
    %2564 = vmatpush1.bf16.msra.mxu0 0
    %2565 = vmatprep.subr.bf16.mxu0 0
    %2566 = vmatpush1.bf16.msra.mxu0 0
    %2567 = vmatprep.subr.bf16.mxu0 0
    %2568 = vmatpush1.bf16.msra.mxu0 0
    %2569 = vmatprep.subr.bf16.mxu0 0
    %2570 = vmatpush1.bf16.msra.mxu0 0
    %2571 = vmatprep.subr.bf16.mxu0 0
    %2572 = vmatpush1.bf16.msra.mxu0 0
    %2573 = vmatprep.subr.bf16.mxu0 0
    %2574 = vmatpush1.bf16.msra.mxu0 0
    %2575 = vmatprep.subr.bf16.mxu0 0
    %2576 = vmatpush1.bf16.msra.mxu0 0
    %2577 = vmatprep.subr.bf16.mxu0 0
    %2578 = vmatpush1.bf16.msra.mxu0 0
    %2579 = vmatprep.subr.bf16.mxu0 0
    %2580 = vmatpush1.bf16.msra.mxu0 0
    %2581 = vmatprep.subr.bf16.mxu0 0
    %2582 = vmatpush1.bf16.msra.mxu0 0
    %2583 = vmatprep.subr.bf16.mxu0 0
    %2584 = vmatpush1.bf16.msra.mxu0 0
    %2585 = vmatprep.subr.bf16.mxu0 0
    %2586 = vmatpush1.bf16.msra.mxu0 0
    %2587 = vmatprep.subr.bf16.mxu0 0
    %2588 = vmatpush1.bf16.msra.mxu0 0
    %2589 = vmatprep.subr.bf16.mxu0 0
    %2590 = vmatpush1.bf16.msra.mxu0 0
    %2591 = vmatprep.subr.bf16.mxu0 0
    %2592 = vmatpush1.bf16.msra.mxu0 0
    %2593 = vmatprep.mubr.bf16.mxu0 0
    %2594 = vmatmul.mubr.bf16.gmra.mrb[0].mxu0 %v2556
    %v2595 = vpop.f32.mrb[0].mxu0
    %v2596 = vadd.f32 0.0, %v2595
    %v2597 = vpop.f32.mrb[0].mxu0
    %v2598 = vpop.f32.mrb[0].mxu0
    %v2599 = vpop.f32.mrb[0].mxu0
    %2600 = vdwg.mxu0
    %2601 = vrot.lane.b32.xlu0 %v2176, 120
    %v2602 = vpop.permute.xlu0 %2601
    %2603 = vrot.lane.b32.xlu0 %v2176, 88
    %v2604 = vpop.permute.xlu0 %2603
    %v2605 = vsel %vm609, %v2602, 0
    %v2607 = vsel %vm609, %v2604, 0
    %2609 = vmatprep.subr.mxu0 0.0
    %2610 = vmatpush1.xpose.msra.mxu0 %v2607
    %2611 = vmatprep.subr.mxu0 0.0
    %2612 = vmatpush1.xpose.msra.mxu0 0.0
    %2613 = vmatprep.subr.mxu0 0.0
    %2614 = vmatpush1.xpose.msra.mxu0 0.0
    %2615 = vmatprep.subr.mxu0 0.0
    %2616 = vmatpush1.xpose.msra.mxu0 0.0
    %2617 = vmatprep.subr.mxu0 0.0
    %2618 = vmatpush1.xpose.msra.mxu0 0.0
    %2619 = vmatprep.subr.mxu0 0.0
    %2620 = vmatpush1.xpose.msra.mxu0 0.0
    %2621 = vmatprep.subr.mxu0 0.0
    %2622 = vmatpush1.xpose.msra.mxu0 0.0
    %2623 = vmatprep.subr.mxu0 0.0
    %2624 = vmatpush1.xpose.msra.mxu0 0.0
    %2625 = vmatprep.subr.mxu0 0.0
    %2626 = vmatpush1.xpose.msra.mxu0 0.0
    %2627 = vmatprep.subr.mxu0 0.0
    %2628 = vmatpush1.xpose.msra.mxu0 0.0
    %2629 = vmatprep.subr.mxu0 0.0
    %2630 = vmatpush1.xpose.msra.mxu0 0.0
    %2631 = vmatprep.subr.mxu0 0.0
    %2632 = vmatpush1.xpose.msra.mxu0 0.0
    %2633 = vmatprep.subr.mxu0 0.0
    %2634 = vmatpush1.xpose.msra.mxu0 0.0
    %2635 = vmatprep.subr.mxu0 0.0
    %2636 = vmatpush1.xpose.msra.mxu0 0.0
    %2637 = vmatprep.subr.mxu0 0.0
    %2638 = vmatpush1.xpose.msra.mxu0 0.0
    %2639 = vmatprep.subr.mxu0 0.0
    %2640 = vmatpush1.xpose.msra.mxu0 0.0
    %2641 = vmatprep.subr.mxu0 0.0
    %2642 = vmatpush1.xpose.msra.mxu0 0.0
    %2643 = vmatprep.subr.mxu0 0.0
    %2644 = vmatpush1.xpose.msra.mxu0 0.0
    %2645 = vmatprep.subr.mxu0 0.0
    %2646 = vmatpush1.xpose.msra.mxu0 0.0
    %2647 = vmatprep.subr.mxu0 0.0
    %2648 = vmatpush1.xpose.msra.mxu0 0.0
    %2649 = vmatprep.subr.mxu0 0.0
    %2650 = vmatpush1.xpose.msra.mxu0 0.0
    %2651 = vmatprep.subr.mxu0 0.0
    %2652 = vmatpush1.xpose.msra.mxu0 0.0
    %2653 = vmatprep.subr.mxu0 0.0
    %2654 = vmatpush1.xpose.msra.mxu0 0.0
    %2655 = vmatprep.subr.mxu0 0.0
    %2656 = vmatpush1.xpose.msra.mxu0 0.0
    %2657 = vmatprep.subr.mxu0 0.0
    %2658 = vmatpush1.xpose.msra.mxu0 0.0
    %2659 = vmatprep.subr.mxu0 0.0
    %2660 = vmatpush1.xpose.msra.mxu0 0.0
    %2661 = vmatprep.subr.mxu0 0.0
    %2662 = vmatpush1.xpose.msra.mxu0 0.0
    %2663 = vmatprep.subr.mxu0 0.0
    %2664 = vmatpush1.xpose.msra.mxu0 0.0
    %2665 = vmatprep.subr.mxu0 0.0
    %2666 = vmatpush1.xpose.msra.mxu0 0.0
    %2667 = vmatprep.subr.mxu0 0.0
    %2668 = vmatpush1.xpose.msra.mxu0 0.0
    %2669 = vmatprep.subr.mxu0 0.0
    %2670 = vmatpush1.xpose.msra.mxu0 0.0
    %2671 = vmatprep.subr.mxu0 0.0
    %2672 = vmatpush1.xpose.msra.mxu0 0.0
    %2673 = vmatprep.mubr.f32.mxu0 0.0
    %2674 = vmatmul.mubr.f32.gmra.mrb[0].mxu0 %v2605
    %v2675 = vpop.f32.mrb[0].mxu0
    %v2676 = vadd.f32 0.0, %v2675
    %v2677 = vpop.f32.mrb[0].mxu0
    %2678 = vdwg.mxu0
    %v2679 = vmul.f32 %v2676, 0.35355338
    %v2680 = vadd.f32 %v2679, %v477
    %v2681 = vsel %vm609, %v2680, -inf
    %2682 = vmax.xlane.f32.xlu0 %v2681
    %v2683 = vpop.xlane.xlu0 %2682
    %v2684 = vsub.f32 %v2680, %v2683
    %v2685 = vmul.f32 %v2684, 1.442695
    %v2686 = vpow.pop %v2685
    %v2687 = vsel %vm609, %v2686, 0.0
    %2688 = vadd.xlane.f32.xlu0 %v2687
    %v2689 = vpop.xlane.xlu0 %2688
    %v2690 = vrcp.pop %v2689
    %v2691 = vmul.f32 %v2686, %v2690
    %v2692 = vpack.c.bf16 %v2691, %v2691
    %2693 = vrot.lane.b32.xlu0 %v2411, 56
    %v2694 = vpop.permute.xlu0 %2693
    %v2696 = vsel %vm609, %v2692, 0
    %v2699 = vsel %vm705, %v2694, 0
    %2701 = vmatprep.subr.bf16.mxu0 0
    %2702 = vmatpush1.bf16.msra.mxu0 %v2699
    %2703 = vmatprep.subr.bf16.mxu0 0
    %2704 = vmatpush1.bf16.msra.mxu0 0
    %2705 = vmatprep.subr.bf16.mxu0 0
    %2706 = vmatpush1.bf16.msra.mxu0 0
    %2707 = vmatprep.subr.bf16.mxu0 0
    %2708 = vmatpush1.bf16.msra.mxu0 0
    %2709 = vmatprep.subr.bf16.mxu0 0
    %2710 = vmatpush1.bf16.msra.mxu0 0
    %2711 = vmatprep.subr.bf16.mxu0 0
    %2712 = vmatpush1.bf16.msra.mxu0 0
    %2713 = vmatprep.subr.bf16.mxu0 0
    %2714 = vmatpush1.bf16.msra.mxu0 0
    %2715 = vmatprep.subr.bf16.mxu0 0
    %2716 = vmatpush1.bf16.msra.mxu0 0
    %2717 = vmatprep.subr.bf16.mxu0 0
    %2718 = vmatpush1.bf16.msra.mxu0 0
    %2719 = vmatprep.subr.bf16.mxu0 0
    %2720 = vmatpush1.bf16.msra.mxu0 0
    %2721 = vmatprep.subr.bf16.mxu0 0
    %2722 = vmatpush1.bf16.msra.mxu0 0
    %2723 = vmatprep.subr.bf16.mxu0 0
    %2724 = vmatpush1.bf16.msra.mxu0 0
    %2725 = vmatprep.subr.bf16.mxu0 0
    %2726 = vmatpush1.bf16.msra.mxu0 0
    %2727 = vmatprep.subr.bf16.mxu0 0
    %2728 = vmatpush1.bf16.msra.mxu0 0
    %2729 = vmatprep.subr.bf16.mxu0 0
    %2730 = vmatpush1.bf16.msra.mxu0 0
    %2731 = vmatprep.subr.bf16.mxu0 0
    %2732 = vmatpush1.bf16.msra.mxu0 0
    %2733 = vmatprep.mubr.bf16.mxu0 0
    %2734 = vmatmul.mubr.bf16.gmra.mrb[0].mxu0 %v2696
    %v2735 = vpop.f32.mrb[0].mxu0
    %v2736 = vadd.f32 0.0, %v2735
    %v2737 = vpop.f32.mrb[0].mxu0
    %v2738 = vpop.f32.mrb[0].mxu0
    %v2739 = vpop.f32.mrb[0].mxu0
    %2740 = vdwg.mxu0
    %2741 = vrot.lane.b32.xlu0 %v2173, 112
    %v2742 = vpop.permute.xlu0 %2741
    %2743 = vrot.lane.b32.xlu0 %v2173, 80
    %v2744 = vpop.permute.xlu0 %2743
    %v2745 = vsel %vm609, %v2742, 0
    %v2747 = vsel %vm609, %v2744, 0
    %2749 = vmatprep.subr.mxu0 0.0
    %2750 = vmatpush1.xpose.msra.mxu0 %v2747
    %2751 = vmatprep.subr.mxu0 0.0
    %2752 = vmatpush1.xpose.msra.mxu0 0.0
    %2753 = vmatprep.subr.mxu0 0.0
    %2754 = vmatpush1.xpose.msra.mxu0 0.0
    %2755 = vmatprep.subr.mxu0 0.0
    %2756 = vmatpush1.xpose.msra.mxu0 0.0
    %2757 = vmatprep.subr.mxu0 0.0
    %2758 = vmatpush1.xpose.msra.mxu0 0.0
    %2759 = vmatprep.subr.mxu0 0.0
    %2760 = vmatpush1.xpose.msra.mxu0 0.0
    %2761 = vmatprep.subr.mxu0 0.0
    %2762 = vmatpush1.xpose.msra.mxu0 0.0
    %2763 = vmatprep.subr.mxu0 0.0
    %2764 = vmatpush1.xpose.msra.mxu0 0.0
    %2765 = vmatprep.subr.mxu0 0.0
    %2766 = vmatpush1.xpose.msra.mxu0 0.0
    %2767 = vmatprep.subr.mxu0 0.0
    %2768 = vmatpush1.xpose.msra.mxu0 0.0
    %2769 = vmatprep.subr.mxu0 0.0
    %2770 = vmatpush1.xpose.msra.mxu0 0.0
    %2771 = vmatprep.subr.mxu0 0.0
    %2772 = vmatpush1.xpose.msra.mxu0 0.0
    %2773 = vmatprep.subr.mxu0 0.0
    %2774 = vmatpush1.xpose.msra.mxu0 0.0
    %2775 = vmatprep.subr.mxu0 0.0
    %2776 = vmatpush1.xpose.msra.mxu0 0.0
    %2777 = vmatprep.subr.mxu0 0.0
    %2778 = vmatpush1.xpose.msra.mxu0 0.0
    %2779 = vmatprep.subr.mxu0 0.0
    %2780 = vmatpush1.xpose.msra.mxu0 0.0
    %2781 = vmatprep.subr.mxu0 0.0
    %2782 = vmatpush1.xpose.msra.mxu0 0.0
    %2783 = vmatprep.subr.mxu0 0.0
    %2784 = vmatpush1.xpose.msra.mxu0 0.0
    %2785 = vmatprep.subr.mxu0 0.0
    %2786 = vmatpush1.xpose.msra.mxu0 0.0
    %2787 = vmatprep.subr.mxu0 0.0
    %2788 = vmatpush1.xpose.msra.mxu0 0.0
    %2789 = vmatprep.subr.mxu0 0.0
    %2790 = vmatpush1.xpose.msra.mxu0 0.0
    %2791 = vmatprep.subr.mxu0 0.0
    %2792 = vmatpush1.xpose.msra.mxu0 0.0
    %2793 = vmatprep.subr.mxu0 0.0
    %2794 = vmatpush1.xpose.msra.mxu0 0.0
    %2795 = vmatprep.subr.mxu0 0.0
    %2796 = vmatpush1.xpose.msra.mxu0 0.0
    %2797 = vmatprep.subr.mxu0 0.0
    %2798 = vmatpush1.xpose.msra.mxu0 0.0
    %2799 = vmatprep.subr.mxu0 0.0
    %2800 = vmatpush1.xpose.msra.mxu0 0.0
    %2801 = vmatprep.subr.mxu0 0.0
    %2802 = vmatpush1.xpose.msra.mxu0 0.0
    %2803 = vmatprep.subr.mxu0 0.0
    %2804 = vmatpush1.xpose.msra.mxu0 0.0
    %2805 = vmatprep.subr.mxu0 0.0
    %2806 = vmatpush1.xpose.msra.mxu0 0.0
    %2807 = vmatprep.subr.mxu0 0.0
    %2808 = vmatpush1.xpose.msra.mxu0 0.0
    %2809 = vmatprep.subr.mxu0 0.0
    %2810 = vmatpush1.xpose.msra.mxu0 0.0
    %2811 = vmatprep.subr.mxu0 0.0
    %2812 = vmatpush1.xpose.msra.mxu0 0.0
    %2813 = vmatprep.mubr.f32.mxu0 0.0
    %2814 = vmatmul.mubr.f32.gmra.mrb[0].mxu0 %v2745
    %v2815 = vpop.f32.mrb[0].mxu0
    %v2816 = vadd.f32 0.0, %v2815
    %v2817 = vpop.f32.mrb[0].mxu0
    %2818 = vdwg.mxu0
    %v2819 = vmul.f32 %v2816, 0.35355338
    %v2820 = vadd.f32 %v2819, %v413
    %v2821 = vsel %vm609, %v2820, -inf
    %2822 = vmax.xlane.f32.xlu0 %v2821
    %v2823 = vpop.xlane.xlu0 %2822
    %v2824 = vsub.f32 %v2820, %v2823
    %v2825 = vmul.f32 %v2824, 1.442695
    %v2826 = vpow.pop %v2825
    %v2827 = vsel %vm609, %v2826, 0.0
    %2828 = vadd.xlane.f32.xlu0 %v2827
    %v2829 = vpop.xlane.xlu0 %2828
    %v2830 = vrcp.pop %v2829
    %v2831 = vmul.f32 %v2826, %v2830
    %v2832 = vpack.c.bf16 %v2831, %v2831
    %2833 = vrot.lane.b32.xlu0 %v2270, 48
    %v2834 = vpop.permute.xlu0 %2833
    %v2836 = vsel %vm609, %v2832, 0
    %v2839 = vsel %vm705, %v2834, 0
    %2841 = vmatprep.subr.bf16.mxu0 0
    %2842 = vmatpush1.bf16.msra.mxu0 %v2839
    %2843 = vmatprep.subr.bf16.mxu0 0
    %2844 = vmatpush1.bf16.msra.mxu0 0
    %2845 = vmatprep.subr.bf16.mxu0 0
    %2846 = vmatpush1.bf16.msra.mxu0 0
    %2847 = vmatprep.subr.bf16.mxu0 0
    %2848 = vmatpush1.bf16.msra.mxu0 0
    %2849 = vmatprep.subr.bf16.mxu0 0
    %2850 = vmatpush1.bf16.msra.mxu0 0
    %2851 = vmatprep.subr.bf16.mxu0 0
    %2852 = vmatpush1.bf16.msra.mxu0 0
    %2853 = vmatprep.subr.bf16.mxu0 0
    %2854 = vmatpush1.bf16.msra.mxu0 0
    %2855 = vmatprep.subr.bf16.mxu0 0
    %2856 = vmatpush1.bf16.msra.mxu0 0
    %2857 = vmatprep.subr.bf16.mxu0 0
    %2858 = vmatpush1.bf16.msra.mxu0 0
    %2859 = vmatprep.subr.bf16.mxu0 0
    %2860 = vmatpush1.bf16.msra.mxu0 0
    %2861 = vmatprep.subr.bf16.mxu0 0
    %2862 = vmatpush1.bf16.msra.mxu0 0
    %2863 = vmatprep.subr.bf16.mxu0 0
    %2864 = vmatpush1.bf16.msra.mxu0 0
    %2865 = vmatprep.subr.bf16.mxu0 0
    %2866 = vmatpush1.bf16.msra.mxu0 0
    %2867 = vmatprep.subr.bf16.mxu0 0
    %2868 = vmatpush1.bf16.msra.mxu0 0
    %2869 = vmatprep.subr.bf16.mxu0 0
    %2870 = vmatpush1.bf16.msra.mxu0 0
    %2871 = vmatprep.subr.bf16.mxu0 0
    %2872 = vmatpush1.bf16.msra.mxu0 0
    %2873 = vmatprep.mubr.bf16.mxu0 0
    %2874 = vmatmul.mubr.bf16.gmra.mrb[0].mxu0 %v2836
    %v2875 = vpop.f32.mrb[0].mxu0
    %v2876 = vadd.f32 0.0, %v2875
    %v2877 = vpop.f32.mrb[0].mxu0
    %v2878 = vpop.f32.mrb[0].mxu0
    %v2879 = vpop.f32.mrb[0].mxu0
    %2880 = vdwg.mxu0
    %2881 = vrot.lane.b32.xlu0 %v2176, 112
    %v2882 = vpop.permute.xlu0 %2881
    %2883 = vrot.lane.b32.xlu0 %v2176, 80
    %v2884 = vpop.permute.xlu0 %2883
    %v2885 = vsel %vm609, %v2882, 0
    %v2887 = vsel %vm609, %v2884, 0
    %2889 = vmatprep.subr.mxu0 0.0
    %2890 = vmatpush1.xpose.msra.mxu0 %v2887
    %2891 = vmatprep.subr.mxu0 0.0
    %2892 = vmatpush1.xpose.msra.mxu0 0.0
    %2893 = vmatprep.subr.mxu0 0.0
    %2894 = vmatpush1.xpose.msra.mxu0 0.0
    %2895 = vmatprep.subr.mxu0 0.0
    %2896 = vmatpush1.xpose.msra.mxu0 0.0
    %2897 = vmatprep.subr.mxu0 0.0
    %2898 = vmatpush1.xpose.msra.mxu0 0.0
    %2899 = vmatprep.subr.mxu0 0.0
    %2900 = vmatpush1.xpose.msra.mxu0 0.0
    %2901 = vmatprep.subr.mxu0 0.0
    %2902 = vmatpush1.xpose.msra.mxu0 0.0
    %2903 = vmatprep.subr.mxu0 0.0
    %2904 = vmatpush1.xpose.msra.mxu0 0.0
    %2905 = vmatprep.subr.mxu0 0.0
    %2906 = vmatpush1.xpose.msra.mxu0 0.0
    %2907 = vmatprep.subr.mxu0 0.0
    %2908 = vmatpush1.xpose.msra.mxu0 0.0
    %2909 = vmatprep.subr.mxu0 0.0
    %2910 = vmatpush1.xpose.msra.mxu0 0.0
    %2911 = vmatprep.subr.mxu0 0.0
    %2912 = vmatpush1.xpose.msra.mxu0 0.0
    %2913 = vmatprep.subr.mxu0 0.0
    %2914 = vmatpush1.xpose.msra.mxu0 0.0
    %2915 = vmatprep.subr.mxu0 0.0
    %2916 = vmatpush1.xpose.msra.mxu0 0.0
    %2917 = vmatprep.subr.mxu0 0.0
    %2918 = vmatpush1.xpose.msra.mxu0 0.0
    %2919 = vmatprep.subr.mxu0 0.0
    %2920 = vmatpush1.xpose.msra.mxu0 0.0
    %2921 = vmatprep.subr.mxu0 0.0
    %2922 = vmatpush1.xpose.msra.mxu0 0.0
    %2923 = vmatprep.subr.mxu0 0.0
    %2924 = vmatpush1.xpose.msra.mxu0 0.0
    %2925 = vmatprep.subr.mxu0 0.0
    %2926 = vmatpush1.xpose.msra.mxu0 0.0
    %2927 = vmatprep.subr.mxu0 0.0
    %2928 = vmatpush1.xpose.msra.mxu0 0.0
    %2929 = vmatprep.subr.mxu0 0.0
    %2930 = vmatpush1.xpose.msra.mxu0 0.0
    %2931 = vmatprep.subr.mxu0 0.0
    %2932 = vmatpush1.xpose.msra.mxu0 0.0
    %2933 = vmatprep.subr.mxu0 0.0
    %2934 = vmatpush1.xpose.msra.mxu0 0.0
    %2935 = vmatprep.subr.mxu0 0.0
    %2936 = vmatpush1.xpose.msra.mxu0 0.0
    %2937 = vmatprep.subr.mxu0 0.0
    %2938 = vmatpush1.xpose.msra.mxu0 0.0
    %2939 = vmatprep.subr.mxu0 0.0
    %2940 = vmatpush1.xpose.msra.mxu0 0.0
    %2941 = vmatprep.subr.mxu0 0.0
    %2942 = vmatpush1.xpose.msra.mxu0 0.0
    %2943 = vmatprep.subr.mxu0 0.0
    %2944 = vmatpush1.xpose.msra.mxu0 0.0
    %2945 = vmatprep.subr.mxu0 0.0
    %2946 = vmatpush1.xpose.msra.mxu0 0.0
    %2947 = vmatprep.subr.mxu0 0.0
    %2948 = vmatpush1.xpose.msra.mxu0 0.0
    %2949 = vmatprep.subr.mxu0 0.0
    %2950 = vmatpush1.xpose.msra.mxu0 0.0
    %2951 = vmatprep.subr.mxu0 0.0
    %2952 = vmatpush1.xpose.msra.mxu0 0.0
    %2953 = vmatprep.mubr.f32.mxu0 0.0
    %2954 = vmatmul.mubr.f32.gmra.mrb[0].mxu0 %v2885
    %v2955 = vpop.f32.mrb[0].mxu0
    %v2956 = vadd.f32 0.0, %v2955
    %v2957 = vpop.f32.mrb[0].mxu0
    %2958 = vdwg.mxu0
    %v2959 = vmul.f32 %v2956, 0.35355338
    %v2960 = vadd.f32 %v2959, %v477
    %v2961 = vsel %vm609, %v2960, -inf
    %2962 = vmax.xlane.f32.xlu0 %v2961
    %v2963 = vpop.xlane.xlu0 %2962
    %v2964 = vsub.f32 %v2960, %v2963
    %v2965 = vmul.f32 %v2964, 1.442695
    %v2966 = vpow.pop %v2965
    %v2967 = vsel %vm609, %v2966, 0.0
    %2968 = vadd.xlane.f32.xlu0 %v2967
    %v2969 = vpop.xlane.xlu0 %2968
    %v2970 = vrcp.pop %v2969
    %v2971 = vmul.f32 %v2966, %v2970
    %v2972 = vpack.c.bf16 %v2971, %v2971
    %2973 = vrot.lane.b32.xlu0 %v2411, 48
    %v2974 = vpop.permute.xlu0 %2973
    %v2976 = vsel %vm609, %v2972, 0
    %v2979 = vsel %vm705, %v2974, 0
    %2981 = vmatprep.subr.bf16.mxu0 0
    %2982 = vmatpush1.bf16.msra.mxu0 %v2979
    %2983 = vmatprep.subr.bf16.mxu0 0
    %2984 = vmatpush1.bf16.msra.mxu0 0
    %2985 = vmatprep.subr.bf16.mxu0 0
    %2986 = vmatpush1.bf16.msra.mxu0 0
    %2987 = vmatprep.subr.bf16.mxu0 0
    %2988 = vmatpush1.bf16.msra.mxu0 0
    %2989 = vmatprep.subr.bf16.mxu0 0
    %2990 = vmatpush1.bf16.msra.mxu0 0
    %2991 = vmatprep.subr.bf16.mxu0 0
    %2992 = vmatpush1.bf16.msra.mxu0 0
    %2993 = vmatprep.subr.bf16.mxu0 0
    %2994 = vmatpush1.bf16.msra.mxu0 0
    %2995 = vmatprep.subr.bf16.mxu0 0
    %2996 = vmatpush1.bf16.msra.mxu0 0
    %2997 = vmatprep.subr.bf16.mxu0 0
    %2998 = vmatpush1.bf16.msra.mxu0 0
    %2999 = vmatprep.subr.bf16.mxu0 0
    %3000 = vmatpush1.bf16.msra.mxu0 0
    %3001 = vmatprep.subr.bf16.mxu0 0
    %3002 = vmatpush1.bf16.msra.mxu0 0
    %3003 = vmatprep.subr.bf16.mxu0 0
    %3004 = vmatpush1.bf16.msra.mxu0 0
    %3005 = vmatprep.subr.bf16.mxu0 0
    %3006 = vmatpush1.bf16.msra.mxu0 0
    %3007 = vmatprep.subr.bf16.mxu0 0
    %3008 = vmatpush1.bf16.msra.mxu0 0
    %3009 = vmatprep.subr.bf16.mxu0 0
    %3010 = vmatpush1.bf16.msra.mxu0 0
    %3011 = vmatprep.subr.bf16.mxu0 0
    %3012 = vmatpush1.bf16.msra.mxu0 0
    %3013 = vmatprep.mubr.bf16.mxu0 0
    %3014 = vmatmul.mubr.bf16.gmra.mrb[0].mxu0 %v2976
    %v3015 = vpop.f32.mrb[0].mxu0
    %v3016 = vadd.f32 0.0, %v3015
    %v3017 = vpop.f32.mrb[0].mxu0
    %v3018 = vpop.f32.mrb[0].mxu0
    %v3019 = vpop.f32.mrb[0].mxu0
    %3020 = vdwg.mxu0
    %3021 = vrot.lane.b32.xlu0 %v2173, 104
    %v3022 = vpop.permute.xlu0 %3021
    %3023 = vrot.lane.b32.xlu0 %v2173, 72
    %v3024 = vpop.permute.xlu0 %3023
    %v3025 = vsel %vm609, %v3022, 0
    %v3027 = vsel %vm609, %v3024, 0
    %3029 = vmatprep.subr.mxu0 0.0
    %3030 = vmatpush1.xpose.msra.mxu0 %v3027
    %3031 = vmatprep.subr.mxu0 0.0
    %3032 = vmatpush1.xpose.msra.mxu0 0.0
    %3033 = vmatprep.subr.mxu0 0.0
    %3034 = vmatpush1.xpose.msra.mxu0 0.0
    %3035 = vmatprep.subr.mxu0 0.0
    %3036 = vmatpush1.xpose.msra.mxu0 0.0
    %3037 = vmatprep.subr.mxu0 0.0
    %3038 = vmatpush1.xpose.msra.mxu0 0.0
    %3039 = vmatprep.subr.mxu0 0.0
    %3040 = vmatpush1.xpose.msra.mxu0 0.0
    %3041 = vmatprep.subr.mxu0 0.0
    %3042 = vmatpush1.xpose.msra.mxu0 0.0
    %3043 = vmatprep.subr.mxu0 0.0
    %3044 = vmatpush1.xpose.msra.mxu0 0.0
    %3045 = vmatprep.subr.mxu0 0.0
    %3046 = vmatpush1.xpose.msra.mxu0 0.0
    %3047 = vmatprep.subr.mxu0 0.0
    %3048 = vmatpush1.xpose.msra.mxu0 0.0
    %3049 = vmatprep.subr.mxu0 0.0
    %3050 = vmatpush1.xpose.msra.mxu0 0.0
    %3051 = vmatprep.subr.mxu0 0.0
    %3052 = vmatpush1.xpose.msra.mxu0 0.0
    %3053 = vmatprep.subr.mxu0 0.0
    %3054 = vmatpush1.xpose.msra.mxu0 0.0
    %3055 = vmatprep.subr.mxu0 0.0
    %3056 = vmatpush1.xpose.msra.mxu0 0.0
    %3057 = vmatprep.subr.mxu0 0.0
    %3058 = vmatpush1.xpose.msra.mxu0 0.0
    %3059 = vmatprep.subr.mxu0 0.0
    %3060 = vmatpush1.xpose.msra.mxu0 0.0
    %3061 = vmatprep.subr.mxu0 0.0
    %3062 = vmatpush1.xpose.msra.mxu0 0.0
    %3063 = vmatprep.subr.mxu0 0.0
    %3064 = vmatpush1.xpose.msra.mxu0 0.0
    %3065 = vmatprep.subr.mxu0 0.0
    %3066 = vmatpush1.xpose.msra.mxu0 0.0
    %3067 = vmatprep.subr.mxu0 0.0
    %3068 = vmatpush1.xpose.msra.mxu0 0.0
    %3069 = vmatprep.subr.mxu0 0.0
    %3070 = vmatpush1.xpose.msra.mxu0 0.0
    %3071 = vmatprep.subr.mxu0 0.0
    %3072 = vmatpush1.xpose.msra.mxu0 0.0
    %3073 = vmatprep.subr.mxu0 0.0
    %3074 = vmatpush1.xpose.msra.mxu0 0.0
    %3075 = vmatprep.subr.mxu0 0.0
    %3076 = vmatpush1.xpose.msra.mxu0 0.0
    %3077 = vmatprep.subr.mxu0 0.0
    %3078 = vmatpush1.xpose.msra.mxu0 0.0
    %3079 = vmatprep.subr.mxu0 0.0
    %3080 = vmatpush1.xpose.msra.mxu0 0.0
    %3081 = vmatprep.subr.mxu0 0.0
    %3082 = vmatpush1.xpose.msra.mxu0 0.0
    %3083 = vmatprep.subr.mxu0 0.0
    %3084 = vmatpush1.xpose.msra.mxu0 0.0
    %3085 = vmatprep.subr.mxu0 0.0
    %3086 = vmatpush1.xpose.msra.mxu0 0.0
    %3087 = vmatprep.subr.mxu0 0.0
    %3088 = vmatpush1.xpose.msra.mxu0 0.0
    %3089 = vmatprep.subr.mxu0 0.0
    %3090 = vmatpush1.xpose.msra.mxu0 0.0
    %3091 = vmatprep.subr.mxu0 0.0
    %3092 = vmatpush1.xpose.msra.mxu0 0.0
    %3093 = vmatprep.mubr.f32.mxu0 0.0
    %3094 = vmatmul.mubr.f32.gmra.mrb[0].mxu0 %v3025
    %v3095 = vpop.f32.mrb[0].mxu0
    %v3096 = vadd.f32 0.0, %v3095
    %v3097 = vpop.f32.mrb[0].mxu0
    %3098 = vdwg.mxu0
    %v3099 = vmul.f32 %v3096, 0.35355338
    %v3100 = vadd.f32 %v3099, %v413
    %v3101 = vsel %vm609, %v3100, -inf
    %3102 = vmax.xlane.f32.xlu0 %v3101
    %v3103 = vpop.xlane.xlu0 %3102
    %v3104 = vsub.f32 %v3100, %v3103
    %v3105 = vmul.f32 %v3104, 1.442695
    %v3106 = vpow.pop %v3105
    %v3107 = vsel %vm609, %v3106, 0.0
    %3108 = vadd.xlane.f32.xlu0 %v3107
    %v3109 = vpop.xlane.xlu0 %3108
    %v3110 = vrcp.pop %v3109
    %v3111 = vmul.f32 %v3106, %v3110
    %v3112 = vpack.c.bf16 %v3111, %v3111
    %3113 = vrot.lane.b32.xlu0 %v2270, 40
    %v3114 = vpop.permute.xlu0 %3113
    %v3116 = vsel %vm609, %v3112, 0
    %v3119 = vsel %vm705, %v3114, 0
    %3121 = vmatprep.subr.bf16.mxu0 0
    %3122 = vmatpush1.bf16.msra.mxu0 %v3119
    %3123 = vmatprep.subr.bf16.mxu0 0
    %3124 = vmatpush1.bf16.msra.mxu0 0
    %3125 = vmatprep.subr.bf16.mxu0 0
    %3126 = vmatpush1.bf16.msra.mxu0 0
    %3127 = vmatprep.subr.bf16.mxu0 0
    %3128 = vmatpush1.bf16.msra.mxu0 0
    %3129 = vmatprep.subr.bf16.mxu0 0
    %3130 = vmatpush1.bf16.msra.mxu0 0
    %3131 = vmatprep.subr.bf16.mxu0 0
    %3132 = vmatpush1.bf16.msra.mxu0 0
    %3133 = vmatprep.subr.bf16.mxu0 0
    %3134 = vmatpush1.bf16.msra.mxu0 0
    %3135 = vmatprep.subr.bf16.mxu0 0
    %3136 = vmatpush1.bf16.msra.mxu0 0
    %3137 = vmatprep.subr.bf16.mxu0 0
    %3138 = vmatpush1.bf16.msra.mxu0 0
    %3139 = vmatprep.subr.bf16.mxu0 0
    %3140 = vmatpush1.bf16.msra.mxu0 0
    %3141 = vmatprep.subr.bf16.mxu0 0
    %3142 = vmatpush1.bf16.msra.mxu0 0
    %3143 = vmatprep.subr.bf16.mxu0 0
    %3144 = vmatpush1.bf16.msra.mxu0 0
    %3145 = vmatprep.subr.bf16.mxu0 0
    %3146 = vmatpush1.bf16.msra.mxu0 0
    %3147 = vmatprep.subr.bf16.mxu0 0
    %3148 = vmatpush1.bf16.msra.mxu0 0
    %3149 = vmatprep.subr.bf16.mxu0 0
    %3150 = vmatpush1.bf16.msra.mxu0 0
    %3151 = vmatprep.subr.bf16.mxu0 0
    %3152 = vmatpush1.bf16.msra.mxu0 0
    %3153 = vmatprep.mubr.bf16.mxu0 0
    %3154 = vmatmul.mubr.bf16.gmra.mrb[0].mxu0 %v3116
    %v3155 = vpop.f32.mrb[0].mxu0
    %v3156 = vadd.f32 0.0, %v3155
    %v3157 = vpop.f32.mrb[0].mxu0
    %v3158 = vpop.f32.mrb[0].mxu0
    %v3159 = vpop.f32.mrb[0].mxu0
    %3160 = vdwg.mxu0
    %3161 = vrot.lane.b32.xlu0 %v2176, 104
    %v3162 = vpop.permute.xlu0 %3161
    %3163 = vrot.lane.b32.xlu0 %v2176, 72
    %v3164 = vpop.permute.xlu0 %3163
    %v3165 = vsel %vm609, %v3162, 0
    %v3167 = vsel %vm609, %v3164, 0
    %3169 = vmatprep.subr.mxu0 0.0
    %3170 = vmatpush1.xpose.msra.mxu0 %v3167
    %3171 = vmatprep.subr.mxu0 0.0
    %3172 = vmatpush1.xpose.msra.mxu0 0.0
    %3173 = vmatprep.subr.mxu0 0.0
    %3174 = vmatpush1.xpose.msra.mxu0 0.0
    %3175 = vmatprep.subr.mxu0 0.0
    %3176 = vmatpush1.xpose.msra.mxu0 0.0
    %3177 = vmatprep.subr.mxu0 0.0
    %3178 = vmatpush1.xpose.msra.mxu0 0.0
    %3179 = vmatprep.subr.mxu0 0.0
    %3180 = vmatpush1.xpose.msra.mxu0 0.0
    %3181 = vmatprep.subr.mxu0 0.0
    %3182 = vmatpush1.xpose.msra.mxu0 0.0
    %3183 = vmatprep.subr.mxu0 0.0
    %3184 = vmatpush1.xpose.msra.mxu0 0.0
    %3185 = vmatprep.subr.mxu0 0.0
    %3186 = vmatpush1.xpose.msra.mxu0 0.0
    %3187 = vmatprep.subr.mxu0 0.0
    %3188 = vmatpush1.xpose.msra.mxu0 0.0
    %3189 = vmatprep.subr.mxu0 0.0
    %3190 = vmatpush1.xpose.msra.mxu0 0.0
    %3191 = vmatprep.subr.mxu0 0.0
    %3192 = vmatpush1.xpose.msra.mxu0 0.0
    %3193 = vmatprep.subr.mxu0 0.0
    %3194 = vmatpush1.xpose.msra.mxu0 0.0
    %3195 = vmatprep.subr.mxu0 0.0
    %3196 = vmatpush1.xpose.msra.mxu0 0.0
    %3197 = vmatprep.subr.mxu0 0.0
    %3198 = vmatpush1.xpose.msra.mxu0 0.0
    %3199 = vmatprep.subr.mxu0 0.0
    %3200 = vmatpush1.xpose.msra.mxu0 0.0
    %3201 = vmatprep.subr.mxu0 0.0
    %3202 = vmatpush1.xpose.msra.mxu0 0.0
    %3203 = vmatprep.subr.mxu0 0.0
    %3204 = vmatpush1.xpose.msra.mxu0 0.0
    %3205 = vmatprep.subr.mxu0 0.0
    %3206 = vmatpush1.xpose.msra.mxu0 0.0
    %3207 = vmatprep.subr.mxu0 0.0
    %3208 = vmatpush1.xpose.msra.mxu0 0.0
    %3209 = vmatprep.subr.mxu0 0.0
    %3210 = vmatpush1.xpose.msra.mxu0 0.0
    %3211 = vmatprep.subr.mxu0 0.0
    %3212 = vmatpush1.xpose.msra.mxu0 0.0
    %3213 = vmatprep.subr.mxu0 0.0
    %3214 = vmatpush1.xpose.msra.mxu0 0.0
    %3215 = vmatprep.subr.mxu0 0.0
    %3216 = vmatpush1.xpose.msra.mxu0 0.0
    %3217 = vmatprep.subr.mxu0 0.0
    %3218 = vmatpush1.xpose.msra.mxu0 0.0
    %3219 = vmatprep.subr.mxu0 0.0
    %3220 = vmatpush1.xpose.msra.mxu0 0.0
    %3221 = vmatprep.subr.mxu0 0.0
    %3222 = vmatpush1.xpose.msra.mxu0 0.0
    %3223 = vmatprep.subr.mxu0 0.0
    %3224 = vmatpush1.xpose.msra.mxu0 0.0
    %3225 = vmatprep.subr.mxu0 0.0
    %3226 = vmatpush1.xpose.msra.mxu0 0.0
    %3227 = vmatprep.subr.mxu0 0.0
    %3228 = vmatpush1.xpose.msra.mxu0 0.0
    %3229 = vmatprep.subr.mxu0 0.0
    %3230 = vmatpush1.xpose.msra.mxu0 0.0
    %3231 = vmatprep.subr.mxu0 0.0
    %3232 = vmatpush1.xpose.msra.mxu0 0.0
    %3233 = vmatprep.mubr.f32.mxu0 0.0
    %3234 = vmatmul.mubr.f32.gmra.mrb[0].mxu0 %v3165
    %v3235 = vpop.f32.mrb[0].mxu0
    %v3236 = vadd.f32 0.0, %v3235
    %v3237 = vpop.f32.mrb[0].mxu0
    %3238 = vdwg.mxu0
    %v3239 = vmul.f32 %v3236, 0.35355338
    %v3240 = vadd.f32 %v3239, %v477
    %v3241 = vsel %vm609, %v3240, -inf
    %3242 = vmax.xlane.f32.xlu0 %v3241
    %v3243 = vpop.xlane.xlu0 %3242
    %v3244 = vsub.f32 %v3240, %v3243
    %v3245 = vmul.f32 %v3244, 1.442695
    %v3246 = vpow.pop %v3245
    %v3247 = vsel %vm609, %v3246, 0.0
    %3248 = vadd.xlane.f32.xlu0 %v3247
    %v3249 = vpop.xlane.xlu0 %3248
    %v3250 = vrcp.pop %v3249
    %v3251 = vmul.f32 %v3246, %v3250
    %v3252 = vpack.c.bf16 %v3251, %v3251
    %3253 = vrot.lane.b32.xlu0 %v2411, 40
    %v3254 = vpop.permute.xlu0 %3253
    %v3256 = vsel %vm609, %v3252, 0
    %v3259 = vsel %vm705, %v3254, 0
    %3261 = vmatprep.subr.bf16.mxu0 0
    %3262 = vmatpush1.bf16.msra.mxu0 %v3259
    %3263 = vmatprep.subr.bf16.mxu0 0
    %3264 = vmatpush1.bf16.msra.mxu0 0
    %3265 = vmatprep.subr.bf16.mxu0 0
    %3266 = vmatpush1.bf16.msra.mxu0 0
    %3267 = vmatprep.subr.bf16.mxu0 0
    %3268 = vmatpush1.bf16.msra.mxu0 0
    %3269 = vmatprep.subr.bf16.mxu0 0
    %3270 = vmatpush1.bf16.msra.mxu0 0
    %3271 = vmatprep.subr.bf16.mxu0 0
    %3272 = vmatpush1.bf16.msra.mxu0 0
    %3273 = vmatprep.subr.bf16.mxu0 0
    %3274 = vmatpush1.bf16.msra.mxu0 0
    %3275 = vmatprep.subr.bf16.mxu0 0
    %3276 = vmatpush1.bf16.msra.mxu0 0
    %3277 = vmatprep.subr.bf16.mxu0 0
    %3278 = vmatpush1.bf16.msra.mxu0 0
    %3279 = vmatprep.subr.bf16.mxu0 0
    %3280 = vmatpush1.bf16.msra.mxu0 0
    %3281 = vmatprep.subr.bf16.mxu0 0
    %3282 = vmatpush1.bf16.msra.mxu0 0
    %3283 = vmatprep.subr.bf16.mxu0 0
    %3284 = vmatpush1.bf16.msra.mxu0 0
    %3285 = vmatprep.subr.bf16.mxu0 0
    %3286 = vmatpush1.bf16.msra.mxu0 0
    %3287 = vmatprep.subr.bf16.mxu0 0
    %3288 = vmatpush1.bf16.msra.mxu0 0
    %3289 = vmatprep.subr.bf16.mxu0 0
    %3290 = vmatpush1.bf16.msra.mxu0 0
    %3291 = vmatprep.subr.bf16.mxu0 0
    %3292 = vmatpush1.bf16.msra.mxu0 0
    %3293 = vmatprep.mubr.bf16.mxu0 0
    %3294 = vmatmul.mubr.bf16.gmra.mrb[0].mxu0 %v3256
    %v3295 = vpop.f32.mrb[0].mxu0
    %v3296 = vadd.f32 0.0, %v3295
    %v3297 = vpop.f32.mrb[0].mxu0
    %v3298 = vpop.f32.mrb[0].mxu0
    %v3299 = vpop.f32.mrb[0].mxu0
    %3300 = vdwg.mxu0
    %3303 = vrot.lane.b32.xlu0 %v2596, 8
    %v3304 = vpop.permute.xlu0 %3303
    %3305 = vrot.lane.b32.xlu0 %v2736, 8
    %v3306 = vpop.permute.xlu0 %3305
    %3311 = vrot.lane.b32.xlu0 %v2876, 16
    %v3312 = vpop.permute.xlu0 %3311
    %3313 = vrot.lane.b32.xlu0 %v3016, 16
    %v3314 = vpop.permute.xlu0 %3313
    %3319 = vrot.lane.b32.xlu0 %v3156, 24
    %v3320 = vpop.permute.xlu0 %3319
    %3321 = vrot.lane.b32.xlu0 %v3296, 24
    %v3322 = vpop.permute.xlu0 %3321
    %v3325 = vsel %vm609, %v2315, %v3304
    %v3326 = vsel %vm609, %v2456, %v3306
    %v3327 = vsel %vm1756, %v3325, %v3312
    %v3328 = vsel %vm1756, %v3326, %v3314
    %v3329 = vsel %vm1759, %v3327, %v3320
    %v3330 = vsel %vm1759, %v3328, %v3322
    %v3331 = vpack.c.bf16 %v3330, %v3329
    %s3332 = scalar_lea.vmem %s6, 16
    %v3333 = vld [vmem:[%s3332] sm:$0xf]
    %v3334 = vld [vmem:[%s3332 + $0x4] sm:$0xf]
    %v3335 = vld [vmem:[%s3332 + $0x8] sm:$0xf]
    %v3336 = vld [vmem:[%s3332 + $0xc] sm:$0xf]
    %s3337 = scalar_lea.vmem %s7, 1
    %v3338 = vld [vmem:[%s3337] sm:$0x1]
    %v3340 = vlaneseq
    %v3341 = vshrl.u32 %v3340, 7
    %v3342 = vsub.s32 0, %v3341
    %v3343 = vrot.slane %v3338, %v3342
    %v3349 = vunpack.c.l.b16 %v3333
    %v3350 = vunpack.c.l.b16 %v3334
    %v3351 = vunpack.c.l.b16 %v3335
    %v3352 = vunpack.c.l.b16 %v3336
    %v3353 = vpack.c.b16 %v3350, %v3349
    %v3354 = vpack.c.b16 %v3352, %v3351
    %v3358 = vsel %vm480, %v3331, 0
    %3360 = vmatprep.subr.bf16.mxu0 0
    %3361 = vmatpush1.bf16.msra.mxu0 %v3353
    %3362 = vmatprep.subr.bf16.mxu0 0
    %3363 = vmatpush1.bf16.msra.mxu0 %v3354
    %3364 = vmatprep.subr.bf16.mxu0 0
    %3365 = vmatpush1.bf16.msra.mxu0 0
    %3366 = vmatprep.subr.bf16.mxu0 0
    %3367 = vmatpush1.bf16.msra.mxu0 0
    %3368 = vmatprep.subr.bf16.mxu0 0
    %3369 = vmatpush1.bf16.msra.mxu0 0
    %3370 = vmatprep.subr.bf16.mxu0 0
    %3371 = vmatpush1.bf16.msra.mxu0 0
    %3372 = vmatprep.subr.bf16.mxu0 0
    %3373 = vmatpush1.bf16.msra.mxu0 0
    %3374 = vmatprep.subr.bf16.mxu0 0
    %3375 = vmatpush1.bf16.msra.mxu0 0
    %3376 = vmatprep.subr.bf16.mxu0 0
    %3377 = vmatpush1.bf16.msra.mxu0 0
    %3378 = vmatprep.subr.bf16.mxu0 0
    %3379 = vmatpush1.bf16.msra.mxu0 0
    %3380 = vmatprep.subr.bf16.mxu0 0
    %3381 = vmatpush1.bf16.msra.mxu0 0
    %3382 = vmatprep.subr.bf16.mxu0 0
    %3383 = vmatpush1.bf16.msra.mxu0 0
    %3384 = vmatprep.subr.bf16.mxu0 0
    %3385 = vmatpush1.bf16.msra.mxu0 0
    %3386 = vmatprep.subr.bf16.mxu0 0
    %3387 = vmatpush1.bf16.msra.mxu0 0
    %3388 = vmatprep.subr.bf16.mxu0 0
    %3389 = vmatpush1.bf16.msra.mxu0 0
    %3390 = vmatprep.subr.bf16.mxu0 0
    %3391 = vmatpush1.bf16.msra.mxu0 0
    %3392 = vmatprep.mubr.bf16.mxu0 0
    %3393 = vmatmul.mubr.bf16.gmra.mrb[0].mxu0 %v3358
    %v3394 = vpop.f32.mrb[0].mxu0
    %v3395 = vadd.f32 %v3343, %v3394
    %v3396 = vpop.f32.mrb[0].mxu0
    %v3397 = vpop.f32.mrb[0].mxu0
    %v3398 = vadd.f32 %v3343, %v3397
    %v3399 = vpop.f32.mrb[0].mxu0
    %3400 = vdwg.mxu0
    %v3401 = vadd.f32 %v2047, %v3395
    %v3402 = vadd.f32 %v2048, %v3398
    %s3403 = scalar_lea.vmem %s14, 1
    %v3404 = vld [vmem:[%s3403] sm:$0x1]
    %s3405 = scalar_lea.vmem %s15, 1
    %v3406 = vld [vmem:[%s3405] sm:$0x1]
    %v3407 = vsel %vm480, %v3401, 0.0
    %3408 = vadd.xlane.f32.xlu0 %v3407
    %v3409 = vpop.xlane.xlu0 %3408
    %v3410 = vsel %vm480, %v3402, 0.0
    %3411 = vadd.xlane.f32.xlu0 %v3410
    %v3412 = vpop.xlane.xlu0 %3411
    %v3413 = vmul.f32 %v3409, %v487
    %v3414 = vmul.f32 %v3412, %v487
    %v3415 = vsub.f32 %v3401, %v3413
    %v3416 = vsub.f32 %v3402, %v3414
    %v3417 = vmul.f32 %v3415, %v3415
    %v3418 = vmul.f32 %v3416, %v3416
    %v3419 = vsel %vm480, %v3417, 0.0
    %3420 = vadd.xlane.f32.xlu0 %v3419
    %v3421 = vpop.xlane.xlu0 %3420
    %v3422 = vsel %vm480, %v3418, 0.0
    %3423 = vadd.xlane.f32.xlu0 %v3422
    %v3424 = vpop.xlane.xlu0 %3423
    %v3425 = vmul.f32 %v3421, 0.032258064
    %v3426 = vmul.f32 %v3424, 0.032258064
    %v3427 = vrsqrt.pop %v3425
    %v3428 = vmul.f32 %v3425, %v3427
    %vm3429 = vcmp.eq.f32.partialorder %v3425, inf
    %v3430 = vsel %vm3429, %v3425, %v3428
    %vm3431 = vcmp.eq.f32.partialorder %v3425, 0.0
    %v3432 = vand.u32 %v3425, 2147483648
    %v3433 = vsel %vm3431, %v3432, %v3430
    %v3434 = vrsqrt.pop %v3426
    %v3435 = vmul.f32 %v3426, %v3434
    %vm3436 = vcmp.eq.f32.partialorder %v3426, inf
    %v3437 = vsel %vm3436, %v3426, %v3435
    %vm3438 = vcmp.eq.f32.partialorder %v3426, 0.0
    %v3439 = vand.u32 %v3426, 2147483648
    %v3440 = vsel %vm3438, %v3439, %v3437
    %v3441 = vadd.f32 %v3433, 1e-06
    %v3442 = vadd.f32 %v3440, 1e-06
    %v3443 = vrcp.pop %v3441
    %v3444 = vrcp.pop %v3442
    %v3446 = vlaneseq
    %v3447 = vshrl.u32 %v3446, 7
    %v3448 = vsub.s32 0, %v3447
    %v3449 = vrot.slane %v3404, %v3448
    %v3451 = vmul.f32 %v3449, %v3415
    %v3452 = vmul.f32 %v3449, %v3416
    %v3453 = vmul.f32 %v3451, %v3443
    %v3454 = vmul.f32 %v3452, %v3444
    %v3456 = vlaneseq
    %v3457 = vshrl.u32 %v3456, 7
    %v3458 = vsub.s32 0, %v3457
    %v3459 = vrot.slane %v3406, %v3458
    %v3461 = vadd.f32 %v3453, %v3459
    %v3462 = vadd.f32 %v3454, %v3459
    %v3463 = vpack.c.bf16 %v3462, %v3461
    %s3464 = scalar_lea.vmem %s10, 16
    %v3465 = vld [vmem:[%s3464] sm:$0xf]
    %v3466 = vld [vmem:[%s3464 + $0x4] sm:$0xf]
    %v3467 = vld [vmem:[%s3464 + $0x8] sm:$0xf]
    %v3468 = vld [vmem:[%s3464 + $0xc] sm:$0xf]
    %s3469 = scalar_lea.vmem %s11, 1
    %v3470 = vld [vmem:[%s3469] sm:$0x1]
    %v3472 = vlaneseq
    %v3473 = vshrl.u32 %v3472, 7
    %v3474 = vsub.s32 0, %v3473
    %v3475 = vrot.slane %v3470, %v3474
    %v3481 = vunpack.c.l.b16 %v3465
    %v3482 = vunpack.c.l.b16 %v3466
    %v3483 = vunpack.c.l.b16 %v3467
    %v3484 = vunpack.c.l.b16 %v3468
    %v3485 = vpack.c.b16 %v3482, %v3481
    %v3486 = vpack.c.b16 %v3484, %v3483
    %v3490 = vsel %vm480, %v3463, 0
    %3492 = vmatprep.subr.bf16.mxu0 0
    %3493 = vmatpush1.bf16.msra.mxu0 %v3485
    %3494 = vmatprep.subr.bf16.mxu0 0
    %3495 = vmatpush1.bf16.msra.mxu0 %v3486
    %3496 = vmatprep.subr.bf16.mxu0 0
    %3497 = vmatpush1.bf16.msra.mxu0 0
    %3498 = vmatprep.subr.bf16.mxu0 0
    %3499 = vmatpush1.bf16.msra.mxu0 0
    %3500 = vmatprep.subr.bf16.mxu0 0
    %3501 = vmatpush1.bf16.msra.mxu0 0
    %3502 = vmatprep.subr.bf16.mxu0 0
    %3503 = vmatpush1.bf16.msra.mxu0 0
    %3504 = vmatprep.subr.bf16.mxu0 0
    %3505 = vmatpush1.bf16.msra.mxu0 0
    %3506 = vmatprep.subr.bf16.mxu0 0
    %3507 = vmatpush1.bf16.msra.mxu0 0
    %3508 = vmatprep.subr.bf16.mxu0 0
    %3509 = vmatpush1.bf16.msra.mxu0 0
    %3510 = vmatprep.subr.bf16.mxu0 0
    %3511 = vmatpush1.bf16.msra.mxu0 0
    %3512 = vmatprep.subr.bf16.mxu0 0
    %3513 = vmatpush1.bf16.msra.mxu0 0
    %3514 = vmatprep.subr.bf16.mxu0 0
    %3515 = vmatpush1.bf16.msra.mxu0 0
    %3516 = vmatprep.subr.bf16.mxu0 0
    %3517 = vmatpush1.bf16.msra.mxu0 0
    %3518 = vmatprep.subr.bf16.mxu0 0
    %3519 = vmatpush1.bf16.msra.mxu0 0
    %3520 = vmatprep.subr.bf16.mxu0 0
    %3521 = vmatpush1.bf16.msra.mxu0 0
    %3522 = vmatprep.subr.bf16.mxu0 0
    %3523 = vmatpush1.bf16.msra.mxu0 0
    %3524 = vmatprep.mubr.bf16.mxu0 0
    %3525 = vmatmul.mubr.bf16.gmra.mrb[0].mxu0 %v3490
    %v3526 = vpop.f32.mrb[0].mxu0
    %v3527 = vadd.f32 %v3475, %v3526
    %v3528 = vpop.f32.mrb[0].mxu0
    %v3529 = vpop.f32.mrb[0].mxu0
    %v3530 = vadd.f32 %v3475, %v3529
    %v3531 = vpop.f32.mrb[0].mxu0
    %3532 = vdwg.mxu0
    %v3533 = vmax.f32 %v3527, 0.0
    %v3534 = vmax.f32 %v3530, 0.0
    %v3535 = vpack.c.bf16 %v3534, %v3533
    %s3536 = scalar_lea.vmem %s12, 32
    %v3537 = vld [vmem:[%s3536] sm:$0xf]
    %v3538 = vld [vmem:[%s3536 + $0x4] sm:$0xf]
    %v3539 = vld [vmem:[%s3536 + $0x8] sm:$0xf]
    %v3540 = vld [vmem:[%s3536 + $0xc] sm:$0xf]
    %v3541 = vld [vmem:[%s3536 + $0x10] sm:$0xf]
    %v3542 = vld [vmem:[%s3536 + $0x14] sm:$0xf]
    %v3543 = vld [vmem:[%s3536 + $0x18] sm:$0xf]
    %v3544 = vld [vmem:[%s3536 + $0x1c] sm:$0xf]
    %v3553 = vunpack.c.l.b16 %v3537
    %v3554 = vunpack.c.l.b16 %v3538
    %v3555 = vunpack.c.l.b16 %v3539
    %v3556 = vunpack.c.l.b16 %v3540
    %v3557 = vunpack.c.l.b16 %v3541
    %v3558 = vunpack.c.l.b16 %v3542
    %v3559 = vunpack.c.l.b16 %v3543
    %v3560 = vunpack.c.l.b16 %v3544
    %v3561 = vpack.c.b16 %v3554, %v3553
    %v3562 = vpack.c.b16 %v3556, %v3555
    %v3563 = vpack.c.b16 %v3558, %v3557
    %v3564 = vpack.c.b16 %v3560, %v3559
    %v3570 = vsel %vm1993, %v3535, 0
    %3572 = vmatprep.subr.bf16.mxu0 0
    %3573 = vmatpush1.bf16.msra.mxu0 %v3561
    %3574 = vmatprep.subr.bf16.mxu0 0
    %3575 = vmatpush1.bf16.msra.mxu0 %v3562
    %3576 = vmatprep.subr.bf16.mxu0 0
    %3577 = vmatpush1.bf16.msra.mxu0 %v3563
    %3578 = vmatprep.subr.bf16.mxu0 0
    %3579 = vmatpush1.bf16.msra.mxu0 %v3564
    %3580 = vmatprep.subr.bf16.mxu0 0
    %3581 = vmatpush1.bf16.msra.mxu0 0
    %3582 = vmatprep.subr.bf16.mxu0 0
    %3583 = vmatpush1.bf16.msra.mxu0 0
    %3584 = vmatprep.subr.bf16.mxu0 0
    %3585 = vmatpush1.bf16.msra.mxu0 0
    %3586 = vmatprep.subr.bf16.mxu0 0
    %3587 = vmatpush1.bf16.msra.mxu0 0
    %3588 = vmatprep.subr.bf16.mxu0 0
    %3589 = vmatpush1.bf16.msra.mxu0 0
    %3590 = vmatprep.subr.bf16.mxu0 0
    %3591 = vmatpush1.bf16.msra.mxu0 0
    %3592 = vmatprep.subr.bf16.mxu0 0
    %3593 = vmatpush1.bf16.msra.mxu0 0
    %3594 = vmatprep.subr.bf16.mxu0 0
    %3595 = vmatpush1.bf16.msra.mxu0 0
    %3596 = vmatprep.subr.bf16.mxu0 0
    %3597 = vmatpush1.bf16.msra.mxu0 0
    %3598 = vmatprep.subr.bf16.mxu0 0
    %3599 = vmatpush1.bf16.msra.mxu0 0
    %3600 = vmatprep.subr.bf16.mxu0 0
    %3601 = vmatpush1.bf16.msra.mxu0 0
    %3602 = vmatprep.subr.bf16.mxu0 0
    %3603 = vmatpush1.bf16.msra.mxu0 0
    %3604 = vmatprep.mubr.bf16.mxu0 0
    %3605 = vmatmul.mubr.bf16.gmra.mrb[0].mxu0 %v3570
    %v3606 = vpop.f32.mrb[0].mxu0
    %v3607 = vadd.f32 0.0, %v3606
    %v3608 = vpop.f32.mrb[0].mxu0
    %v3609 = vpop.f32.mrb[0].mxu0
    %v3610 = vadd.f32 0.0, %v3609
    %v3611 = vpop.f32.mrb[0].mxu0
    %3612 = vdwg.mxu0
    %v3613 = vadd.f32 %v3401, %v3607
    %v3614 = vadd.f32 %v3402, %v3610
    %s3615 = scalar_lea.vmem %s13, 1
    %v3616 = vld [vmem:[%s3615] sm:$0x1]
    %v3618 = vlaneseq
    %v3619 = vshrl.u32 %v3618, 7
    %v3620 = vsub.s32 0, %v3619
    %v3621 = vrot.slane %v3616, %v3620
    %v3623 = vadd.f32 %v3613, %v3621
    %v3624 = vadd.f32 %v3614, %v3621
    %v3625 = vld [vmem:[%s16] sm:$0x1]
    %v3626 = vld [vmem:[%s17] sm:$0x1]
    %v3627 = vsel %vm480, %v3623, 0.0
    %3628 = vadd.xlane.f32.xlu0 %v3627
    %v3629 = vpop.xlane.xlu0 %3628
    %v3630 = vsel %vm480, %v3624, 0.0
    %3631 = vadd.xlane.f32.xlu0 %v3630
    %v3632 = vpop.xlane.xlu0 %3631
    %v3633 = vmul.f32 %v3629, %v487
    %v3634 = vmul.f32 %v3632, %v487
    %v3635 = vsub.f32 %v3623, %v3633
    %v3636 = vsub.f32 %v3624, %v3634
    %v3637 = vmul.f32 %v3635, %v3635
    %v3638 = vmul.f32 %v3636, %v3636
    %v3639 = vsel %vm480, %v3637, 0.0
    %3640 = vadd.xlane.f32.xlu0 %v3639
    %v3641 = vpop.xlane.xlu0 %3640
    %v3642 = vsel %vm480, %v3638, 0.0
    %3643 = vadd.xlane.f32.xlu0 %v3642
    %v3644 = vpop.xlane.xlu0 %3643
    %v3645 = vmul.f32 %v3641, 0.032258064
    %v3646 = vmul.f32 %v3644, 0.032258064
    %v3647 = vrsqrt.pop %v3645
    %v3648 = vmul.f32 %v3645, %v3647
    %vm3649 = vcmp.eq.f32.partialorder %v3645, inf
    %v3650 = vsel %vm3649, %v3645, %v3648
    %vm3651 = vcmp.eq.f32.partialorder %v3645, 0.0
    %v3652 = vand.u32 %v3645, 2147483648
    %v3653 = vsel %vm3651, %v3652, %v3650
    %v3654 = vrsqrt.pop %v3646
    %v3655 = vmul.f32 %v3646, %v3654
    %vm3656 = vcmp.eq.f32.partialorder %v3646, inf
    %v3657 = vsel %vm3656, %v3646, %v3655
    %vm3658 = vcmp.eq.f32.partialorder %v3646, 0.0
    %v3659 = vand.u32 %v3646, 2147483648
    %v3660 = vsel %vm3658, %v3659, %v3657
    %v3661 = vadd.f32 %v3653, 1e-06
    %v3662 = vadd.f32 %v3660, 1e-06
    %v3663 = vrcp.pop %v3661
    %v3664 = vrcp.pop %v3662
    %v3666 = vlaneseq
    %v3667 = vshrl.u32 %v3666, 7
    %v3668 = vsub.s32 0, %v3667
    %v3669 = vrot.slane %v3625, %v3668
    %v3671 = vmul.f32 %v3669, %v3635
    %v3672 = vmul.f32 %v3669, %v3636
    %v3673 = vmul.f32 %v3671, %v3663
    %v3674 = vmul.f32 %v3672, %v3664
    %v3676 = vlaneseq
    %v3677 = vshrl.u32 %v3676, 7
    %v3678 = vsub.s32 0, %v3677
    %v3679 = vrot.slane %v3626, %v3678
    %v3681 = vadd.f32 %v3673, %v3679
    %v3682 = vadd.f32 %v3674, %v3679
    %3683 = vst.msk [vmem:[#allocation5] sm:$0xff] %vm480, %v3681
    %s3684 = scalar_lea.vmem [#allocation5], 8
    %3685 = vst.msk [vmem:[%s3684] sm:$0xff] %vm480, %v3682
    // Predicated region
    $region66: #{bert_forward.1} parent=1 // pred_check
      _
    $region67: #{bert_forward.1} parent=1 // pred_check_branch
      %3687 = sbr.rel (0) target = $region69
    $region68: #{bert_forward.1} parent=1 // pred_region
      %s3689 = ssub.s32 256, 256
      %3690 = vsyncadd [#allocation6], %s3689
      %s3691 = sshll.u32 [#allocation5], 4
      %s3692 = int_to_ptr.vmem [resolvable:$true] %s3691
      %3697 = dma.vmem_to_hbm [thread:$0]  %s3692, 256, %s18, [#allocation6], 128, 128, 8
    $region69: #{bert_forward.1} parent=1 // pred_fallthru
      _
    // Predicated region
    $region70: #{bert_forward.1} parent=1 // pred_check
      _
    $region71: #{bert_forward.1} parent=1 // pred_check_branch
      %3699 = sbr.rel (0) target = $region73
    $region72: #{bert_forward.1} parent=1 // pred_region
      %3700 = dma.done [#allocation6], 256
    $region73: #{bert_forward.1} parent=1 // pred_fallthru
      _
    %3701 = vsyncpa [#allocation6], 1

</llo_original>
